<compile_context>
chip_gen: v7x
topology: tpu7x:2x2x1
jax: 0.10.0
libtpu: 0.0.40
codegen_flags: <defaults>
</compile_context>

<pallas_src>
import functools

import jax
import jax.numpy as jnp
import numpy as np
from jax import lax
from jax.experimental import pallas as pl
from jax.experimental.pallas import tpu as pltpu


def _round_up(x, m):
    return (x + m - 1) // m * m


@functools.lru_cache(maxsize=None)
def _vmem_limit_bytes():
    # Per-generation VMEM budget: ~3/4 of physical, capped at 96 MiB.
    try:
        phys = int(pltpu.get_tpu_info().vmem_capacity_bytes)
    except Exception:
        phys = 64 << 20            # conservative (v7x) fallback
    return int(max(32 << 20, min(phys * 3 // 4, 96 << 20)))


# ----------------------------- Pallas kernel ---------------------------------
def _conv_gemm_kernel(*refs, nk, fuse_bn, use_bias, use_lrelu, emit_stats,
                      neg_slope, m_true, tile_m, mp):
    """Tiled im2col GEMM with optional fused-BN prologue and bias/LeakyReLU
    epilogue.  grid = (cout tile j, row tile i, k tile k) -- k innermost."""
    it = iter(refs)
    a_ref = next(it)
    w_ref = next(it)
    sc_ref = next(it) if fuse_bn else None
    sh_ref = next(it) if fuse_bn else None
    b_ref = next(it) if use_bias else None
    y_ref = next(it)
    sum_ref = next(it) if emit_stats else None
    ssq_ref = next(it) if emit_stats else None
    acc_ref = next(it) if nk > 1 else None

    a = a_ref[...]
    if fuse_bn:
        # Previous layer's BatchNorm (scale/shift tiled kh*kw times along K)
        # plus its LeakyReLU, applied to the raw (pre-BN) im2col operand.
        a = a.astype(jnp.float32) * sc_ref[...] + sh_ref[...]
        a = jnp.where(a >= 0, a, neg_slope * a)
        a = a.astype(w_ref.dtype)
    part = jnp.dot(a, w_ref[...], preferred_element_type=jnp.float32)

    def epilogue(y):
        if use_bias:
            y = y + b_ref[...]                       # (1, tn) broadcast
        if use_lrelu:
            y = jnp.where(y >= 0, y, neg_slope * y)
        if emit_stats and mp != m_true:
            # Mask zero-padded M rows so they do not pollute the BN statistics
            # (only emitted when padding rows actually exist).
            row = (pl.program_id(1) * tile_m
                   + lax.broadcasted_iota(jnp.int32, y.shape, 0))
            y = jnp.where(row < m_true, y, 0.0)
        y_ref[...] = y.astype(y_ref.dtype)
        if emit_stats:
            # Per-M-tile partial statistics (f32, pre-bf16-cast value); the M
            # grid axis therefore stays "parallel" (v7x megacore friendly).
            sum_ref[...] = jnp.sum(y, axis=0, keepdims=True)
            ssq_ref[...] = jnp.sum(y * y, axis=0, keepdims=True)

    if nk == 1:
        # Single K tile: no VMEM accumulator scratch, dot -> epilogue -> store.
        epilogue(part)
    else:
        k = pl.program_id(2)

        @pl.when(k == 0)
        def _():
            acc_ref[...] = part

        @pl.when(k > 0)
        def _():
            acc_ref[...] += part

        @pl.when(k == nk - 1)
        def _():
            epilogue(acc_ref[...])


# ------------------------------ host glue ------------------------------------
def _extract_patches_nhwc(x, kh, kw, stride, pad, pad_value=None):
    """x: (N, H, W, C) -> ((N*Ho*Wo, kh*kw*C), Ho, Wo), column order (kh, kw, c).

    pad_value: optional per-channel (C,) value used for the spatial padding
    (needed when the previous layer's BN is folded into this layer's prologue:
    v = -shift/scale so that the *normalized* padding is exactly zero)."""
    n, h, w, c = x.shape
    if pad_value is None:
        xp = jnp.pad(x, ((0, 0), (pad, pad), (pad, pad), (0, 0)))
    else:
        base = jnp.broadcast_to(pad_value.astype(x.dtype).reshape(1, 1, 1, c),
                                (n, h + 2 * pad, w + 2 * pad, c))
        xp = base.at[:, pad:pad + h, pad:pad + w, :].set(x)
    ho = (h + 2 * pad - kh) // stride + 1
    wo = (w + 2 * pad - kw) // stride + 1
    cols = []
    for i in range(kh):
        for j in range(kw):
            cols.append(xp[:, i:i + stride * ho:stride, j:j + stride * wo:stride, :])
    col = jnp.stack(cols, axis=3)                    # (n, ho, wo, kh*kw, c)
    return col.reshape(n * ho * wo, kh * kw * c), ho, wo


def _pick_tiles(m, kp, cp_out):
    tm = m if m < 512 else 512                       # >=512 rows when possible
    mp = _round_up(m, tm)
    tk = kp
    if tk > 2048:
        tk = 2048
        while kp % tk != 0:
            tk -= 128
    tn = 256 if cp_out % 256 == 0 else 128
    return tm, mp, tk, tn


def _conv_gemm(a, wm, *, bias2=None, scale_k=None, shift_k=None,
               use_lrelu, emit_stats, out_dtype, neg_slope=0.2):
    """One conv layer as an im2col GEMM.

    a: (M, Kp) bf16 im2col matrix (Kp multiple of 128).
    wm: (Kp, cp_out) bf16 prepacked weight.
    bias2: optional (1, cp_out) f32 bias.
    scale_k/shift_k: optional (1, Kp) f32 fused-BN vectors for the prologue.
    Returns (y,) or (y, partial_sums, partial_ssqs)."""
    m, kp = a.shape
    cp_out = wm.shape[1]
    tm, mp, tk, tn = _pick_tiles(m, kp, cp_out)
    if mp > m:
        a = jnp.pad(a, ((0, mp - m), (0, 0)))
    nj, nm, nk = cp_out // tn, mp // tm, kp // tk
    fuse_bn = scale_k is not None
    use_bias = bias2 is not None

    in_specs = [pl.BlockSpec((tm, tk), lambda j, i, k: (i, k)),
                pl.BlockSpec((tk, tn), lambda j, i, k: (k, j))]
    inputs = [a, wm]
    if fuse_bn:
        in_specs += [pl.BlockSpec((1, tk), lambda j, i, k: (0, k))] * 2
        inputs += [scale_k, shift_k]
    if use_bias:
        in_specs.append(pl.BlockSpec((1, tn), lambda j, i, k: (0, j)))
        inputs.append(bias2)

    out_shapes = [jax.ShapeDtypeStruct((mp, cp_out), out_dtype)]
    out_specs = [pl.BlockSpec((tm, tn), lambda j, i, k: (i, j))]
    if emit_stats:
        out_shapes += [jax.ShapeDtypeStruct((nm, cp_out), jnp.float32)] * 2
        out_specs += [pl.BlockSpec((1, tn), lambda j, i, k: (i, j))] * 2

    scratch = [pltpu.VMEM((tm, tn), jnp.float32)] if nk > 1 else []

    kern = functools.partial(
        _conv_gemm_kernel, nk=nk, fuse_bn=fuse_bn, use_bias=use_bias,
        use_lrelu=use_lrelu, emit_stats=emit_stats, neg_slope=neg_slope,
        m_true=m, tile_m=tm, mp=mp)

    return pl.pallas_call(
        kern,
        out_shape=tuple(out_shapes),
        grid_spec=pltpu.PrefetchScalarGridSpec(
            num_scalar_prefetch=0, grid=(nj, nm, nk),
            in_specs=in_specs, out_specs=tuple(out_specs),
            scratch_shapes=scratch),
        compiler_params=pltpu.CompilerParams(
            dimension_semantics=("parallel", "parallel", "arbitrary"),
            vmem_limit_bytes=_vmem_limit_bytes()),
    )(*inputs)


# --------------------------- parameter prepack --------------------------------
_LAYER_DEFS = (
    # name, weight key, bias key, use_bn, use_lrelu, stride, pad
    ("up",  "up_w",  "up_b",  False, False, 1, 1),
    ("c1",  "c1_w",  None,    False, True,  2, 1),
    ("c2",  "c2_w",  None,    True,  True,  2, 1),
    ("c3",  "c3_w",  None,    True,  True,  2, 1),
    ("c4",  "c4_w",  None,    True,  True,  2, 1),
    ("fin", "fin_w", "fin_b", False, False, 1, 1),
)


def prepack_params(params):
    """One-time packing of weights/biases for the Pallas GEMMs.

    Returns (packed_arrays: dict, meta: list of static per-layer dicts)."""
    packed, meta = {}, []
    for name, wk, bk, bn, lrelu, stride, pad in _LAYER_DEFS:
        w = params[wk]
        cout, cin, kh, kw = w.shape
        cp_out = _round_up(cout, 128)
        k_true = kh * kw * cin
        kp = _round_up(k_true, 128)
        wm = jnp.zeros((kp, cp_out), jnp.float32)
        wm = wm.at[:k_true, :cout].set(
            w.astype(jnp.float32).transpose(2, 3, 1, 0).reshape(k_true, cout))
        packed[name + "_wm"] = wm.astype(jnp.bfloat16)
        if bk is not None:
            packed[name + "_b"] = (jnp.zeros((1, cp_out), jnp.float32)
                                   .at[0, :cout].set(params[bk]))
        if bn:
            packed[name + "_g"] = params[name + "_g"].astype(jnp.float32)
            packed[name + "_be"] = params[name + "_b"].astype(jnp.float32)
        meta.append(dict(name=name, kh=kh, kw=kw, cin=cin, cout=cout,
                         cp_out=cp_out, kp=kp, stride=stride, pad=pad,
                         use_bias=bk is not None, use_bn=bn, use_lrelu=lrelu))
    return packed, meta


# ------------------------------ Discriminator --------------------------------
def init_params(key, input_channels, hidden):
    keys = jax.random.split(key, 8)

    def conv_w(k, cout, cin, kh, kw):
        bound = 1.0 / np.sqrt(cin * kh * kw)         # PyTorch default Conv2d init
        return jax.random.uniform(k, (cout, cin, kh, kw), jnp.float32, -bound, bound)

    def conv_b(k, cout, cin, kh, kw):
        bound = 1.0 / np.sqrt(cin * kh * kw)
        return jax.random.uniform(k, (cout,), jnp.float32, -bound, bound)

    p = {}
    p["up_w"] = conv_w(keys[0], hidden, input_channels, 3, 3)
    p["up_b"] = conv_b(keys[1], hidden, input_channels, 3, 3)
    p["c1_w"] = conv_w(keys[2], hidden * 2, hidden, 4, 4)
    p["c2_w"] = conv_w(keys[3], hidden * 4, hidden * 2, 4, 4)
    p["c2_g"] = jnp.ones((hidden * 4,), jnp.float32)
    p["c2_b"] = jnp.zeros((hidden * 4,), jnp.float32)
    p["c3_w"] = conv_w(keys[4], hidden * 8, hidden * 4, 4, 4)
    p["c3_g"] = jnp.ones((hidden * 8,), jnp.float32)
    p["c3_b"] = jnp.zeros((hidden * 8,), jnp.float32)
    p["c4_w"] = conv_w(keys[5], hidden * 16, hidden * 8, 4, 4)
    p["c4_g"] = jnp.ones((hidden * 16,), jnp.float32)
    p["c4_b"] = jnp.zeros((hidden * 16,), jnp.float32)
    p["fin_w"] = conv_w(keys[6], 1, hidden * 16, 4, 4)
    p["fin_b"] = conv_b(keys[7], 1, hidden * 16, 4, 4)
    return p


def discriminator_forward(packed, x, y, *, meta, eps=1e-5):
    h = jnp.concatenate([x, y], axis=1)                         # NCHW concat
    h = jnp.transpose(h, (0, 2, 3, 1)).astype(jnp.bfloat16)     # NHWC bf16
    n = h.shape[0]

    pending = None   # (scale_c, shift_c) of the previous BN layer, not yet applied
    for li, lm in enumerate(meta):
        kh, kw, cin, cout = lm["kh"], lm["kw"], lm["cin"], lm["cout"]
        kp, stride, pad = lm["kp"], lm["stride"], lm["pad"]
        assert h.shape[-1] == cin, (h.shape, cin)

        scale_k = shift_k = pad_value = None
        if pending is not None:
            scale_c, shift_c = pending
            safe = jnp.where(scale_c == 0, 1.0, scale_c)
            pad_value = jnp.where(scale_c == 0, 0.0, -shift_c / safe)
            k_true = kh * kw * cin
            scale_k = (jnp.zeros((1, kp), jnp.float32)
                       .at[0, :k_true].set(jnp.tile(scale_c, kh * kw)))
            shift_k = (jnp.zeros((1, kp), jnp.float32)
                       .at[0, :k_true].set(jnp.tile(shift_c, kh * kw)))

        a, ho, wo = _extract_patches_nhwc(h, kh, kw, stride, pad, pad_value)
        m = a.shape[0]
        if a.shape[1] < kp:
            a = jnp.pad(a, ((0, 0), (0, kp - a.shape[1])))

        is_last = li == len(meta) - 1
        outs = _conv_gemm(
            a, packed[lm["name"] + "_wm"],
            bias2=packed[lm["name"] + "_b"] if lm["use_bias"] else None,
            scale_k=scale_k, shift_k=shift_k,
            use_lrelu=lm["use_lrelu"] and not lm["use_bn"],
            emit_stats=lm["use_bn"],
            out_dtype=jnp.float32 if is_last else jnp.bfloat16)

        if lm["use_bn"]:
            # Raw (pre-BN) output; fold BN+LeakyReLU into the next layer.
            y_out, sums, ssqs = outs
            s = jnp.sum(sums, axis=0)[:cout]
            sq = jnp.sum(ssqs, axis=0)[:cout]
            mean = s / m
            # NOTE: E[y^2]-E[y]^2 in f32; clamped >=0 (fine at 5e-2 tolerance).
            var = jnp.maximum(sq / m - mean * mean, 0.0)
            gamma = packed[lm["name"] + "_g"]
            beta = packed[lm["name"] + "_be"]
            scale_c = gamma * lax.rsqrt(var + eps)
            shift_c = beta - mean * scale_c
            pending = (scale_c, shift_c)
        else:
            (y_out,) = outs
            pending = None

        h = y_out[:m, :cout].reshape(n, ho, wo, cout)

    return jnp.transpose(h, (0, 3, 1, 2))                       # NCHW, true Cout=1


# ---------------------- pure-JAX reference (for checking) --------------------
def _conv_ref(x, w, b, stride, pad):
    out = lax.conv_general_dilated(x, w, (stride, stride),
                                   [(pad, pad), (pad, pad)],
                                   dimension_numbers=("NCHW", "OIHW", "NCHW"))
    if b is not None:
        out = out + b.reshape(1, -1, 1, 1)
    return out


def _bn_ref(x, g, b, eps=1e-5):
    mean = jnp.mean(x, axis=(0, 2, 3), keepdims=True)
    var = jnp.mean((x - mean) ** 2, axis=(0, 2, 3), keepdims=True)
    return (x - mean) * lax.rsqrt(var + eps) * g.reshape(1, -1, 1, 1) + b.reshape(1, -1, 1, 1)


def _lrelu(x):
    return jnp.where(x >= 0, x, 0.2 * x)


def reference_forward(params, x, y):
    h = jnp.concatenate([x, y], axis=1)
    h = _conv_ref(h, params["up_w"], params["up_b"], 1, 1)
    h = _lrelu(_conv_ref(h, params["c1_w"], None, 2, 1))
    h = _lrelu(_bn_ref(_conv_ref(h, params["c2_w"], None, 2, 1), params["c2_g"], params["c2_b"]))
    h = _lrelu(_bn_ref(_conv_ref(h, params["c3_w"], None, 2, 1), params["c3_g"], params["c3_b"]))
    h = _lrelu(_bn_ref(_conv_ref(h, params["c4_w"], None, 2, 1), params["c4_g"], params["c4_b"]))
    h = _conv_ref(h, params["fin_w"], params["fin_b"], 1, 1)
    return h


# --------------------------------- main ---------------------------------------
if __name__ == "__main__":
    key = jax.random.PRNGKey(0)
    kx, ky, kp = jax.random.split(key, 3)

    # x and y each have 2 channels -> concatenated input has 4 channels.
    # Spatial 32 is the smallest size for which the final 4x4 conv is valid.
    x = jax.random.normal(kx, (2, 2, 32, 32), jnp.float32)
    y = jax.random.normal(ky, (2, 2, 32, 32), jnp.float32)
    params = init_params(kp, input_channels=4, hidden=8)

    # One-time prepack (weights transposed/padded/cast off the forward path).
    packed, meta = prepack_params(params)
    fwd = jax.jit(functools.partial(discriminator_forward, meta=meta))

    out = jax.block_until_ready(fwd(packed, x, y))

    assert out.shape == (2, 1, 1, 1), out.shape
    ref = reference_forward(params, x, y)
    np.testing.assert_allclose(np.asarray(out), np.asarray(ref), rtol=5e-2, atol=5e-2)
    assert bool(jnp.all(jnp.isfinite(out)))

    print("KERNEL_OK")
</pallas_src>

<mosaic_0001>
module attributes {stable_mosaic.version = 11 : i64} {
  func.func @_conv_gemm_kernel(%arg0: i32, %arg1: i32, %arg2: i32, %arg3: memref<512x128xbf16, #tpu.memory_space<vmem>>, %arg4: memref<128x128xbf16, #tpu.memory_space<vmem>>, %arg5: memref<1x128xf32, #tpu.memory_space<vmem>>, %arg6: memref<512x128xbf16, #tpu.memory_space<vmem>>) attributes {dimension_semantics = [#tpu.dimension_semantics<parallel>, #tpu.dimension_semantics<parallel>, #tpu.dimension_semantics<arbitrary>], iteration_bounds = array<i64: 1, 4, 1>, scalar_prefetch = 0 : i64, scratch_operands = 0 : i64, tpu.core_type = #tpu.core_type<tc>, window_params = [{transform_indices = @transform_0, window_bounds = array<i64: 512, 128>}, {transform_indices = @transform_1, window_bounds = array<i64: 128, 128>}, {transform_indices = @transform_2, window_bounds = array<i64: 1, 128>}, {transform_indices = @transform_3, window_bounds = array<i64: 512, 128>}]} {
    %c0 = arith.constant 0 : index
    %c0_0 = arith.constant 0 : index
    %0 = vector.load %arg3[%c0, %c0_0] : memref<512x128xbf16, #tpu.memory_space<vmem>>, vector<512x128xbf16>
    %c0_1 = arith.constant 0 : index
    %c0_2 = arith.constant 0 : index
    %1 = vector.load %arg4[%c0_1, %c0_2] : memref<128x128xbf16, #tpu.memory_space<vmem>>, vector<128x128xbf16>
    %cst = arith.constant dense<0.000000e+00> : vector<512x128xf32>
    %2 = tpu.matmul %0, %1, %cst {dimension_numbers = #tpu.dot_dimension_numbers<[1], [0], [0], [1], [0, 0, 1, 1], [], []>} : vector<512x128xbf16>, vector<128x128xbf16>, vector<512x128xf32> -> vector<512x128xf32>
    %c0_3 = arith.constant 0 : index
    %c0_4 = arith.constant 0 : index
    %3 = vector.load %arg5[%c0_3, %c0_4] : memref<1x128xf32, #tpu.memory_space<vmem>>, vector<1x128xf32>
    %4 = vector.broadcast %3 : vector<1x128xf32> to vector<512x128xf32>
    %5 = arith.addf %2, %4 : vector<512x128xf32>
    %6 = arith.truncf %5 : vector<512x128xf32> to vector<512x128xbf16>
    %c0_5 = arith.constant 0 : index
    %c0_6 = arith.constant 0 : index
    %7 = vector.load %arg6[%c0_5, %c0_6] : memref<512x128xbf16, #tpu.memory_space<vmem>>, vector<512x128xbf16>
    tpu.vector_store %arg6[%c0_5, %c0_6], %6 {strides = array<i32>} : memref<512x128xbf16, #tpu.memory_space<vmem>>, vector<512x128xbf16>,
    return
  }
  func.func @transform_0(%arg0: i32, %arg1: i32, %arg2: i32) -> (i32, i32) {
    %c0_i32 = arith.constant 0 : i32
    return %arg1, %arg2 : i32, i32
  }
  func.func @transform_1(%arg0: i32, %arg1: i32, %arg2: i32) -> (i32, i32) {
    %c0_i32 = arith.constant 0 : i32
    return %arg2, %arg0 : i32, i32
  }
  func.func @transform_2(%arg0: i32, %arg1: i32, %arg2: i32) -> (i32, i32) {
    %c0_i32 = arith.constant 0 : i32
    %c0_i32_0 = arith.constant 0 : i32
    return %c0_i32, %arg0 : i32, i32
  }
  func.func @transform_3(%arg0: i32, %arg1: i32, %arg2: i32) -> (i32, i32) {
    %c0_i32 = arith.constant 0 : i32
    return %arg1, %arg0 : i32, i32
  }
}

module attributes {stable_mosaic.version = 11 : i64} {
  func.func @_conv_gemm_kernel(%arg0: i32, %arg1: i32, %arg2: i32, %arg3: memref<512x128xbf16, #tpu.memory_space<vmem>>, %arg4: memref<128x128xbf16, #tpu.memory_space<vmem>>, %arg5: memref<512x128xbf16, #tpu.memory_space<vmem>>) attributes {dimension_semantics = [#tpu.dimension_semantics<parallel>, #tpu.dimension_semantics<parallel>, #tpu.dimension_semantics<arbitrary>], iteration_bounds = array<i64: 1, 1, 1>, scalar_prefetch = 0 : i64, scratch_operands = 0 : i64, tpu.core_type = #tpu.core_type<tc>, window_params = [{transform_indices = @transform_0, window_bounds = array<i64: 512, 128>}, {transform_indices = @transform_1, window_bounds = array<i64: 128, 128>}, {transform_indices = @transform_2, window_bounds = array<i64: 512, 128>}]} {
    %c0 = arith.constant 0 : index
    %c0_0 = arith.constant 0 : index
    %0 = vector.load %arg3[%c0, %c0_0] : memref<512x128xbf16, #tpu.memory_space<vmem>>, vector<512x128xbf16>
    %c0_1 = arith.constant 0 : index
    %c0_2 = arith.constant 0 : index
    %1 = vector.load %arg4[%c0_1, %c0_2] : memref<128x128xbf16, #tpu.memory_space<vmem>>, vector<128x128xbf16>
    %cst = arith.constant dense<0.000000e+00> : vector<512x128xf32>
    %2 = tpu.matmul %0, %1, %cst {dimension_numbers = #tpu.dot_dimension_numbers<[1], [0], [0], [1], [0, 0, 1, 1], [], []>} : vector<512x128xbf16>, vector<128x128xbf16>, vector<512x128xf32> -> vector<512x128xf32>
    %cst_3 = arith.constant 0.000000e+00 : f32
    %3 = vector.broadcast %cst_3 : f32 to vector<512x128xf32>
    %4 = arith.cmpf oge, %2, %3 : vector<512x128xf32>
    %cst_4 = arith.constant 2.000000e-01 : f32
    %5 = vector.broadcast %cst_4 : f32 to vector<512x128xf32>
    %6 = arith.mulf %5, %2 : vector<512x128xf32>
    %7 = arith.select %4, %2, %6 : vector<512x128xi1>, vector<512x128xf32>
    %8 = arith.truncf %7 : vector<512x128xf32> to vector<512x128xbf16>
    %c0_5 = arith.constant 0 : index
    %c0_6 = arith.constant 0 : index
    %9 = vector.load %arg5[%c0_5, %c0_6] : memref<512x128xbf16, #tpu.memory_space<vmem>>, vector<512x128xbf16>
    tpu.vector_store %arg5[%c0_5, %c0_6], %8 {strides = array<i32>} : memref<512x128xbf16, #tpu.memory_space<vmem>>, vector<512x128xbf16>,
    return
  }
  func.func @transform_0(%arg0: i32, %arg1: i32, %arg2: i32) -> (i32, i32) {
    %c0_i32 = arith.constant 0 : i32
    return %arg1, %arg2 : i32, i32
  }
  func.func @transform_1(%arg0: i32, %arg1: i32, %arg2: i32) -> (i32, i32) {
    %c0_i32 = arith.constant 0 : i32
    return %arg2, %arg0 : i32, i32
  }
  func.func @transform_2(%arg0: i32, %arg1: i32, %arg2: i32) -> (i32, i32) {
    %c0_i32 = arith.constant 0 : i32
    return %arg1, %arg0 : i32, i32
  }
}

module attributes {stable_mosaic.version = 11 : i64} {
  func.func @_conv_gemm_kernel(%arg0: i32, %arg1: i32, %arg2: i32, %arg3: memref<128x256xbf16, #tpu.memory_space<vmem>>, %arg4: memref<256x128xbf16, #tpu.memory_space<vmem>>, %arg5: memref<128x128xbf16, #tpu.memory_space<vmem>>, %arg6: memref<1x128xf32, #tpu.memory_space<vmem>>, %arg7: memref<1x128xf32, #tpu.memory_space<vmem>>) attributes {dimension_semantics = [#tpu.dimension_semantics<parallel>, #tpu.dimension_semantics<parallel>, #tpu.dimension_semantics<arbitrary>], iteration_bounds = array<i64: 1, 1, 1>, scalar_prefetch = 0 : i64, scratch_operands = 0 : i64, tpu.core_type = #tpu.core_type<tc>, window_params = [{transform_indices = @transform_0, window_bounds = array<i64: 128, 256>}, {transform_indices = @transform_1, window_bounds = array<i64: 256, 128>}, {transform_indices = @transform_2, window_bounds = array<i64: 128, 128>}, {transform_indices = @transform_3, window_bounds = array<i64: 1, 128>}, {transform_indices = @transform_4, window_bounds = array<i64: 1, 128>}]} {
    %c0 = arith.constant 0 : index
    %c0_0 = arith.constant 0 : index
    %0 = vector.load %arg3[%c0, %c0_0] : memref<128x256xbf16, #tpu.memory_space<vmem>>, vector<128x256xbf16>
    %c0_1 = arith.constant 0 : index
    %c0_2 = arith.constant 0 : index
    %1 = vector.load %arg4[%c0_1, %c0_2] : memref<256x128xbf16, #tpu.memory_space<vmem>>, vector<256x128xbf16>
    %cst = arith.constant dense<0.000000e+00> : vector<128x128xf32>
    %2 = tpu.matmul %0, %1, %cst {dimension_numbers = #tpu.dot_dimension_numbers<[1], [0], [0], [1], [0, 0, 1, 1], [], []>} : vector<128x256xbf16>, vector<256x128xbf16>, vector<128x128xf32> -> vector<128x128xf32>
    %3 = arith.truncf %2 : vector<128x128xf32> to vector<128x128xbf16>
    %c0_3 = arith.constant 0 : index
    %c0_4 = arith.constant 0 : index
    %4 = vector.load %arg5[%c0_3, %c0_4] : memref<128x128xbf16, #tpu.memory_space<vmem>>, vector<128x128xbf16>
    tpu.vector_store %arg5[%c0_3, %c0_4], %3 {strides = array<i32>} : memref<128x128xbf16, #tpu.memory_space<vmem>>, vector<128x128xbf16>,
    %cst_5 = arith.constant dense<0.000000e+00> : vector<128xf32>
    %5 = vector.multi_reduction <add>, %2, %cst_5 [0] : vector<128x128xf32> to vector<128xf32>
    %6 = vector.shape_cast %5 : vector<128xf32> to vector<1x128xf32>
    %c0_6 = arith.constant 0 : index
    %c0_7 = arith.constant 0 : index
    %7 = vector.load %arg6[%c0_6, %c0_7] : memref<1x128xf32, #tpu.memory_space<vmem>>, vector<1x128xf32>
    tpu.vector_store %arg6[%c0_6, %c0_7], %6 {strides = array<i32>} : memref<1x128xf32, #tpu.memory_space<vmem>>, vector<1x128xf32>,
    %8 = arith.mulf %2, %2 : vector<128x128xf32>
    %cst_8 = arith.constant dense<0.000000e+00> : vector<128xf32>
    %9 = vector.multi_reduction <add>, %8, %cst_8 [0] : vector<128x128xf32> to vector<128xf32>
    %10 = vector.shape_cast %9 : vector<128xf32> to vector<1x128xf32>
    %c0_9 = arith.constant 0 : index
    %c0_10 = arith.constant 0 : index
    %11 = vector.load %arg7[%c0_9, %c0_10] : memref<1x128xf32, #tpu.memory_space<vmem>>, vector<1x128xf32>
    tpu.vector_store %arg7[%c0_9, %c0_10], %10 {strides = array<i32>} : memref<1x128xf32, #tpu.memory_space<vmem>>, vector<1x128xf32>,
    return
  }
  func.func @transform_0(%arg0: i32, %arg1: i32, %arg2: i32) -> (i32, i32) {
    %c0_i32 = arith.constant 0 : i32
    return %arg1, %arg2 : i32, i32
  }
  func.func @transform_1(%arg0: i32, %arg1: i32, %arg2: i32) -> (i32, i32) {
    %c0_i32 = arith.constant 0 : i32
    return %arg2, %arg0 : i32, i32
  }
  func.func @transform_2(%arg0: i32, %arg1: i32, %arg2: i32) -> (i32, i32) {
    %c0_i32 = arith.constant 0 : i32
    return %arg1, %arg0 : i32, i32
  }
  func.func @transform_3(%arg0: i32, %arg1: i32, %arg2: i32) -> (i32, i32) {
    %c0_i32 = arith.constant 0 : i32
    return %arg1, %arg0 : i32, i32
  }
  func.func @transform_4(%arg0: i32, %arg1: i32, %arg2: i32) -> (i32, i32) {
    %c0_i32 = arith.constant 0 : i32
    return %arg1, %arg0 : i32, i32
  }
}

module attributes {stable_mosaic.version = 11 : i64} {
  func.func @_conv_gemm_kernel(%arg0: i32, %arg1: i32, %arg2: i32, %arg3: memref<32x512xbf16, #tpu.memory_space<vmem>>, %arg4: memref<512x128xbf16, #tpu.memory_space<vmem>>, %arg5: memref<1x512xf32, #tpu.memory_space<vmem>>, %arg6: memref<1x512xf32, #tpu.memory_space<vmem>>, %arg7: memref<32x128xbf16, #tpu.memory_space<vmem>>, %arg8: memref<1x128xf32, #tpu.memory_space<vmem>>, %arg9: memref<1x128xf32, #tpu.memory_space<vmem>>) attributes {dimension_semantics = [#tpu.dimension_semantics<parallel>, #tpu.dimension_semantics<parallel>, #tpu.dimension_semantics<arbitrary>], iteration_bounds = array<i64: 1, 1, 1>, scalar_prefetch = 0 : i64, scratch_operands = 0 : i64, tpu.core_type = #tpu.core_type<tc>, window_params = [{transform_indices = @transform_0, window_bounds = array<i64: 32, 512>}, {transform_indices = @transform_1, window_bounds = array<i64: 512, 128>}, {transform_indices = @transform_2, window_bounds = array<i64: 1, 512>}, {transform_indices = @transform_3, window_bounds = array<i64: 1, 512>}, {transform_indices = @transform_4, window_bounds = array<i64: 32, 128>}, {transform_indices = @transform_5, window_bounds = array<i64: 1, 128>}, {transform_indices = @transform_6, window_bounds = array<i64: 1, 128>}]} {
    %c0 = arith.constant 0 : index
    %c0_0 = arith.constant 0 : index
    %0 = vector.load %arg3[%c0, %c0_0] : memref<32x512xbf16, #tpu.memory_space<vmem>>, vector<32x512xbf16>
    %1 = arith.extf %0 : vector<32x512xbf16> to vector<32x512xf32>
    %c0_1 = arith.constant 0 : index
    %c0_2 = arith.constant 0 : index
    %2 = vector.load %arg5[%c0_1, %c0_2] : memref<1x512xf32, #tpu.memory_space<vmem>>, vector<1x512xf32>
    %3 = vector.broadcast %2 : vector<1x512xf32> to vector<32x512xf32>
    %4 = arith.mulf %1, %3 : vector<32x512xf32>
    %c0_3 = arith.constant 0 : index
    %c0_4 = arith.constant 0 : index
    %5 = vector.load %arg6[%c0_3, %c0_4] : memref<1x512xf32, #tpu.memory_space<vmem>>, vector<1x512xf32>
    %6 = vector.broadcast %5 : vector<1x512xf32> to vector<32x512xf32>
    %7 = arith.addf %4, %6 : vector<32x512xf32>
    %cst = arith.constant 0.000000e+00 : f32
    %8 = vector.broadcast %cst : f32 to vector<32x512xf32>
    %9 = arith.cmpf oge, %7, %8 : vector<32x512xf32>
    %cst_5 = arith.constant 2.000000e-01 : f32
    %10 = vector.broadcast %cst_5 : f32 to vector<32x512xf32>
    %11 = arith.mulf %10, %7 : vector<32x512xf32>
    %12 = arith.select %9, %7, %11 : vector<32x512xi1>, vector<32x512xf32>
    %13 = arith.truncf %12 : vector<32x512xf32> to vector<32x512xbf16>
    %c0_6 = arith.constant 0 : index
    %c0_7 = arith.constant 0 : index
    %14 = vector.load %arg4[%c0_6, %c0_7] : memref<512x128xbf16, #tpu.memory_space<vmem>>, vector<512x128xbf16>
    %cst_8 = arith.constant dense<0.000000e+00> : vector<32x128xf32>
    %15 = tpu.matmul %13, %14, %cst_8 {dimension_numbers = #tpu.dot_dimension_numbers<[1], [0], [0], [1], [0, 0, 1, 1], [], []>} : vector<32x512xbf16>, vector<512x128xbf16>, vector<32x128xf32> -> vector<32x128xf32>
    %16 = arith.truncf %15 : vector<32x128xf32> to vector<32x128xbf16>
    %c0_9 = arith.constant 0 : index
    %c0_10 = arith.constant 0 : index
    %17 = vector.load %arg7[%c0_9, %c0_10] : memref<32x128xbf16, #tpu.memory_space<vmem>>, vector<32x128xbf16>
    tpu.vector_store %arg7[%c0_9, %c0_10], %16 {strides = array<i32>} : memref<32x128xbf16, #tpu.memory_space<vmem>>, vector<32x128xbf16>,
    %cst_11 = arith.constant dense<0.000000e+00> : vector<128xf32>
    %18 = vector.multi_reduction <add>, %15, %cst_11 [0] : vector<32x128xf32> to vector<128xf32>
    %19 = vector.shape_cast %18 : vector<128xf32> to vector<1x128xf32>
    %c0_12 = arith.constant 0 : index
    %c0_13 = arith.constant 0 : index
    %20 = vector.load %arg8[%c0_12, %c0_13] : memref<1x128xf32, #tpu.memory_space<vmem>>, vector<1x128xf32>
    tpu.vector_store %arg8[%c0_12, %c0_13], %19 {strides = array<i32>} : memref<1x128xf32, #tpu.memory_space<vmem>>, vector<1x128xf32>,
    %21 = arith.mulf %15, %15 : vector<32x128xf32>
    %cst_14 = arith.constant dense<0.000000e+00> : vector<128xf32>
    %22 = vector.multi_reduction <add>, %21, %cst_14 [0] : vector<32x128xf32> to vector<128xf32>
    %23 = vector.shape_cast %22 : vector<128xf32> to vector<1x128xf32>
    %c0_15 = arith.constant 0 : index
    %c0_16 = arith.constant 0 : index
    %24 = vector.load %arg9[%c0_15, %c0_16] : memref<1x128xf32, #tpu.memory_space<vmem>>, vector<1x128xf32>
    tpu.vector_store %arg9[%c0_15, %c0_16], %23 {strides = array<i32>} : memref<1x128xf32, #tpu.memory_space<vmem>>, vector<1x128xf32>,
    return
  }
  func.func @transform_0(%arg0: i32, %arg1: i32, %arg2: i32) -> (i32, i32) {
    %c0_i32 = arith.constant 0 : i32
    return %arg1, %arg2 : i32, i32
  }
  func.func @transform_1(%arg0: i32, %arg1: i32, %arg2: i32) -> (i32, i32) {
    %c0_i32 = arith.constant 0 : i32
    return %arg2, %arg0 : i32, i32
  }
  func.func @transform_2(%arg0: i32, %arg1: i32, %arg2: i32) -> (i32, i32) {
    %c0_i32 = arith.constant 0 : i32
    %c0_i32_0 = arith.constant 0 : i32
    return %c0_i32, %arg2 : i32, i32
  }
  func.func @transform_3(%arg0: i32, %arg1: i32, %arg2: i32) -> (i32, i32) {
    %c0_i32 = arith.constant 0 : i32
    %c0_i32_0 = arith.constant 0 : i32
    return %c0_i32, %arg2 : i32, i32
  }
  func.func @transform_4(%arg0: i32, %arg1: i32, %arg2: i32) -> (i32, i32) {
    %c0_i32 = arith.constant 0 : i32
    return %arg1, %arg0 : i32, i32
  }
  func.func @transform_5(%arg0: i32, %arg1: i32, %arg2: i32) -> (i32, i32) {
    %c0_i32 = arith.constant 0 : i32
    return %arg1, %arg0 : i32, i32
  }
  func.func @transform_6(%arg0: i32, %arg1: i32, %arg2: i32) -> (i32, i32) {
    %c0_i32 = arith.constant 0 : i32
    return %arg1, %arg0 : i32, i32
  }
}

module attributes {stable_mosaic.version = 11 : i64} {
  func.func @_conv_gemm_kernel(%arg0: i32, %arg1: i32, %arg2: i32, %arg3: memref<8x1024xbf16, #tpu.memory_space<vmem>>, %arg4: memref<1024x128xbf16, #tpu.memory_space<vmem>>, %arg5: memref<1x1024xf32, #tpu.memory_space<vmem>>, %arg6: memref<1x1024xf32, #tpu.memory_space<vmem>>, %arg7: memref<8x128xbf16, #tpu.memory_space<vmem>>, %arg8: memref<1x128xf32, #tpu.memory_space<vmem>>, %arg9: memref<1x128xf32, #tpu.memory_space<vmem>>) attributes {dimension_semantics = [#tpu.dimension_semantics<parallel>, #tpu.dimension_semantics<parallel>, #tpu.dimension_semantics<arbitrary>], iteration_bounds = array<i64: 1, 1, 1>, scalar_prefetch = 0 : i64, scratch_operands = 0 : i64, tpu.core_type = #tpu.core_type<tc>, window_params = [{transform_indices = @transform_0, window_bounds = array<i64: 8, 1024>}, {transform_indices = @transform_1, window_bounds = array<i64: 1024, 128>}, {transform_indices = @transform_2, window_bounds = array<i64: 1, 1024>}, {transform_indices = @transform_3, window_bounds = array<i64: 1, 1024>}, {transform_indices = @transform_4, window_bounds = array<i64: 8, 128>}, {transform_indices = @transform_5, window_bounds = array<i64: 1, 128>}, {transform_indices = @transform_6, window_bounds = array<i64: 1, 128>}]} {
    %c0 = arith.constant 0 : index
    %c0_0 = arith.constant 0 : index
    %0 = vector.load %arg3[%c0, %c0_0] : memref<8x1024xbf16, #tpu.memory_space<vmem>>, vector<8x1024xbf16>
    %1 = arith.extf %0 : vector<8x1024xbf16> to vector<8x1024xf32>
    %c0_1 = arith.constant 0 : index
    %c0_2 = arith.constant 0 : index
    %2 = vector.load %arg5[%c0_1, %c0_2] : memref<1x1024xf32, #tpu.memory_space<vmem>>, vector<1x1024xf32>
    %3 = vector.broadcast %2 : vector<1x1024xf32> to vector<8x1024xf32>
    %4 = arith.mulf %1, %3 : vector<8x1024xf32>
    %c0_3 = arith.constant 0 : index
    %c0_4 = arith.constant 0 : index
    %5 = vector.load %arg6[%c0_3, %c0_4] : memref<1x1024xf32, #tpu.memory_space<vmem>>, vector<1x1024xf32>
    %6 = vector.broadcast %5 : vector<1x1024xf32> to vector<8x1024xf32>
    %7 = arith.addf %4, %6 : vector<8x1024xf32>
    %cst = arith.constant 0.000000e+00 : f32
    %8 = vector.broadcast %cst : f32 to vector<8x1024xf32>
    %9 = arith.cmpf oge, %7, %8 : vector<8x1024xf32>
    %cst_5 = arith.constant 2.000000e-01 : f32
    %10 = vector.broadcast %cst_5 : f32 to vector<8x1024xf32>
    %11 = arith.mulf %10, %7 : vector<8x1024xf32>
    %12 = arith.select %9, %7, %11 : vector<8x1024xi1>, vector<8x1024xf32>
    %13 = arith.truncf %12 : vector<8x1024xf32> to vector<8x1024xbf16>
    %c0_6 = arith.constant 0 : index
    %c0_7 = arith.constant 0 : index
    %14 = vector.load %arg4[%c0_6, %c0_7] : memref<1024x128xbf16, #tpu.memory_space<vmem>>, vector<1024x128xbf16>
    %cst_8 = arith.constant dense<0.000000e+00> : vector<8x128xf32>
    %15 = tpu.matmul %13, %14, %cst_8 {dimension_numbers = #tpu.dot_dimension_numbers<[1], [0], [0], [1], [0, 0, 1, 1], [], []>} : vector<8x1024xbf16>, vector<1024x128xbf16>, vector<8x128xf32> -> vector<8x128xf32>
    %16 = arith.truncf %15 : vector<8x128xf32> to vector<8x128xbf16>
    %c0_9 = arith.constant 0 : index
    %c0_10 = arith.constant 0 : index
    %17 = vector.load %arg7[%c0_9, %c0_10] : memref<8x128xbf16, #tpu.memory_space<vmem>>, vector<8x128xbf16>
    tpu.vector_store %arg7[%c0_9, %c0_10], %16 {strides = array<i32>} : memref<8x128xbf16, #tpu.memory_space<vmem>>, vector<8x128xbf16>,
    %cst_11 = arith.constant dense<0.000000e+00> : vector<128xf32>
    %18 = vector.multi_reduction <add>, %15, %cst_11 [0] : vector<8x128xf32> to vector<128xf32>
    %19 = vector.shape_cast %18 : vector<128xf32> to vector<1x128xf32>
    %c0_12 = arith.constant 0 : index
    %c0_13 = arith.constant 0 : index
    %20 = vector.load %arg8[%c0_12, %c0_13] : memref<1x128xf32, #tpu.memory_space<vmem>>, vector<1x128xf32>
    tpu.vector_store %arg8[%c0_12, %c0_13], %19 {strides = array<i32>} : memref<1x128xf32, #tpu.memory_space<vmem>>, vector<1x128xf32>,
    %21 = arith.mulf %15, %15 : vector<8x128xf32>
    %cst_14 = arith.constant dense<0.000000e+00> : vector<128xf32>
    %22 = vector.multi_reduction <add>, %21, %cst_14 [0] : vector<8x128xf32> to vector<128xf32>
    %23 = vector.shape_cast %22 : vector<128xf32> to vector<1x128xf32>
    %c0_15 = arith.constant 0 : index
    %c0_16 = arith.constant 0 : index
    %24 = vector.load %arg9[%c0_15, %c0_16] : memref<1x128xf32, #tpu.memory_space<vmem>>, vector<1x128xf32>
    tpu.vector_store %arg9[%c0_15, %c0_16], %23 {strides = array<i32>} : memref<1x128xf32, #tpu.memory_space<vmem>>, vector<1x128xf32>,
    return
  }
  func.func @transform_0(%arg0: i32, %arg1: i32, %arg2: i32) -> (i32, i32) {
    %c0_i32 = arith.constant 0 : i32
    return %arg1, %arg2 : i32, i32
  }
  func.func @transform_1(%arg0: i32, %arg1: i32, %arg2: i32) -> (i32, i32) {
    %c0_i32 = arith.constant 0 : i32
    return %arg2, %arg0 : i32, i32
  }
  func.func @transform_2(%arg0: i32, %arg1: i32, %arg2: i32) -> (i32, i32) {
    %c0_i32 = arith.constant 0 : i32
    %c0_i32_0 = arith.constant 0 : i32
    return %c0_i32, %arg2 : i32, i32
  }
  func.func @transform_3(%arg0: i32, %arg1: i32, %arg2: i32) -> (i32, i32) {
    %c0_i32 = arith.constant 0 : i32
    %c0_i32_0 = arith.constant 0 : i32
    return %c0_i32, %arg2 : i32, i32
  }
  func.func @transform_4(%arg0: i32, %arg1: i32, %arg2: i32) -> (i32, i32) {
    %c0_i32 = arith.constant 0 : i32
    return %arg1, %arg0 : i32, i32
  }
  func.func @transform_5(%arg0: i32, %arg1: i32, %arg2: i32) -> (i32, i32) {
    %c0_i32 = arith.constant 0 : i32
    return %arg1, %arg0 : i32, i32
  }
  func.func @transform_6(%arg0: i32, %arg1: i32, %arg2: i32) -> (i32, i32) {
    %c0_i32 = arith.constant 0 : i32
    return %arg1, %arg0 : i32, i32
  }
}

module attributes {stable_mosaic.version = 11 : i64} {
  func.func @_conv_gemm_kernel(%arg0: i32, %arg1: i32, %arg2: i32, %arg3: memref<2x2048xbf16, #tpu.memory_space<vmem>>, %arg4: memref<2048x128xbf16, #tpu.memory_space<vmem>>, %arg5: memref<1x2048xf32, #tpu.memory_space<vmem>>, %arg6: memref<1x2048xf32, #tpu.memory_space<vmem>>, %arg7: memref<1x128xf32, #tpu.memory_space<vmem>>, %arg8: memref<2x128xf32, #tpu.memory_space<vmem>>) attributes {dimension_semantics = [#tpu.dimension_semantics<parallel>, #tpu.dimension_semantics<parallel>, #tpu.dimension_semantics<arbitrary>], iteration_bounds = array<i64: 1, 1, 1>, scalar_prefetch = 0 : i64, scratch_operands = 0 : i64, tpu.core_type = #tpu.core_type<tc>, window_params = [{transform_indices = @transform_0, window_bounds = array<i64: 2, 2048>}, {transform_indices = @transform_1, window_bounds = array<i64: 2048, 128>}, {transform_indices = @transform_2, window_bounds = array<i64: 1, 2048>}, {transform_indices = @transform_3, window_bounds = array<i64: 1, 2048>}, {transform_indices = @transform_4, window_bounds = array<i64: 1, 128>}, {transform_indices = @transform_5, window_bounds = array<i64: 2, 128>}]} {
    %c0 = arith.constant 0 : index
    %c0_0 = arith.constant 0 : index
    %0 = vector.load %arg3[%c0, %c0_0] : memref<2x2048xbf16, #tpu.memory_space<vmem>>, vector<2x2048xbf16>
    %1 = arith.extf %0 : vector<2x2048xbf16> to vector<2x2048xf32>
    %c0_1 = arith.constant 0 : index
    %c0_2 = arith.constant 0 : index
    %2 = vector.load %arg5[%c0_1, %c0_2] : memref<1x2048xf32, #tpu.memory_space<vmem>>, vector<1x2048xf32>
    %3 = vector.broadcast %2 : vector<1x2048xf32> to vector<2x2048xf32>
    %4 = arith.mulf %1, %3 : vector<2x2048xf32>
    %c0_3 = arith.constant 0 : index
    %c0_4 = arith.constant 0 : index
    %5 = vector.load %arg6[%c0_3, %c0_4] : memref<1x2048xf32, #tpu.memory_space<vmem>>, vector<1x2048xf32>
    %6 = vector.broadcast %5 : vector<1x2048xf32> to vector<2x2048xf32>
    %7 = arith.addf %4, %6 : vector<2x2048xf32>
    %cst = arith.constant 0.000000e+00 : f32
    %8 = vector.broadcast %cst : f32 to vector<2x2048xf32>
    %9 = arith.cmpf oge, %7, %8 : vector<2x2048xf32>
    %cst_5 = arith.constant 2.000000e-01 : f32
    %10 = vector.broadcast %cst_5 : f32 to vector<2x2048xf32>
    %11 = arith.mulf %10, %7 : vector<2x2048xf32>
    %12 = arith.select %9, %7, %11 : vector<2x2048xi1>, vector<2x2048xf32>
    %13 = arith.truncf %12 : vector<2x2048xf32> to vector<2x2048xbf16>
    %c0_6 = arith.constant 0 : index
    %c0_7 = arith.constant 0 : index
    %14 = vector.load %arg4[%c0_6, %c0_7] : memref<2048x128xbf16, #tpu.memory_space<vmem>>, vector<2048x128xbf16>
    %cst_8 = arith.constant dense<0.000000e+00> : vector<2x128xf32>
    %15 = tpu.matmul %13, %14, %cst_8 {dimension_numbers = #tpu.dot_dimension_numbers<[1], [0], [0], [1], [0, 0, 1, 1], [], []>} : vector<2x2048xbf16>, vector<2048x128xbf16>, vector<2x128xf32> -> vector<2x128xf32>
    %c0_9 = arith.constant 0 : index
    %c0_10 = arith.constant 0 : index
    %16 = vector.load %arg7[%c0_9, %c0_10] : memref<1x128xf32, #tpu.memory_space<vmem>>, vector<1x128xf32>
    %17 = vector.broadcast %16 : vector<1x128xf32> to vector<2x128xf32>
    %18 = arith.addf %15, %17 : vector<2x128xf32>
    %c0_11 = arith.constant 0 : index
    %c0_12 = arith.constant 0 : index
    %19 = vector.load %arg8[%c0_11, %c0_12] : memref<2x128xf32, #tpu.memory_space<vmem>>, vector<2x128xf32>
    tpu.vector_store %arg8[%c0_11, %c0_12], %18 {strides = array<i32>} : memref<2x128xf32, #tpu.memory_space<vmem>>, vector<2x128xf32>,
    return
  }
  func.func @transform_0(%arg0: i32, %arg1: i32, %arg2: i32) -> (i32, i32) {
    %c0_i32 = arith.constant 0 : i32
    return %arg1, %arg2 : i32, i32
  }
  func.func @transform_1(%arg0: i32, %arg1: i32, %arg2: i32) -> (i32, i32) {
    %c0_i32 = arith.constant 0 : i32
    return %arg2, %arg0 : i32, i32
  }
  func.func @transform_2(%arg0: i32, %arg1: i32, %arg2: i32) -> (i32, i32) {
    %c0_i32 = arith.constant 0 : i32
    %c0_i32_0 = arith.constant 0 : i32
    return %c0_i32, %arg2 : i32, i32
  }
  func.func @transform_3(%arg0: i32, %arg1: i32, %arg2: i32) -> (i32, i32) {
    %c0_i32 = arith.constant 0 : i32
    %c0_i32_0 = arith.constant 0 : i32
    return %c0_i32, %arg2 : i32, i32
  }
  func.func @transform_4(%arg0: i32, %arg1: i32, %arg2: i32) -> (i32, i32) {
    %c0_i32 = arith.constant 0 : i32
    %c0_i32_0 = arith.constant 0 : i32
    return %c0_i32, %arg0 : i32, i32
  }
  func.func @transform_5(%arg0: i32, %arg1: i32, %arg2: i32) -> (i32, i32) {
    %c0_i32 = arith.constant 0 : i32
    return %arg1, %arg0 : i32, i32
  }
}

</mosaic_0001>

<llo_original>
// kernel: discriminator_forward.6
$region0: #{discriminator_forward.6}
  #allocation0 [shape = 'u32[]', space=smem, size = 0x4, offset = 0x4, fixed_abs, tag = 'smem constant byte address 0x4 - core index']
  #allocation1 [shape = 'u32[144,128]{1,0:T(1,128)}', space=vmem, size = 0x12000, scoped, tag = 'internal scratch']
  %s0 = inlined_call_operand.vmem [shape: bf16[2048,128], index: 0, kind: input, shape index: {}]
  %s1 = inlined_call_operand.vmem [shape: bf16[128,128], index: 1, kind: input, shape index: {}]
  %s2 = inlined_call_operand.vmem [shape: f32[1,128], index: 2, kind: input, shape index: {}]
  %s3 = inlined_call_operand.vmem [shape: bf16[2048,128], index: 3, kind: output, shape index: {}]
  %s4 = sld [smem:[#allocation0]]
  $region45: #{discriminator_forward.6} parent=0
    _
  %s6 = ssub.s32 1, %s4
  %s7 = scalar_select 0, %s6, %s4
  loop: start=0, step=1, limit=6
  $region2: #{discriminator_forward.6} parent=0 // loop_pre_header
    _
  $region3: #{discriminator_forward.6} parent=0 // loop_header
    %s9 = sphi 0, %s13
    %p10 = scmp.ge.s32.totalorder %s9, 6
    %s16 = sphi 0, %s35
    %s17 = sphi 0, %s31
    %s18 = sphi 0, %s27
    %s19 = sphi 0, %s16
    %s20 = sphi 0, %s17
    %s21 = sphi 0, %s18
    %s22 = sphi 0, %s19
    %s23 = sphi 0, %s20
    %s24 = sphi 0, %s21
    %s40 = sphi 0, %s42
    %s43 = sphi 0, %s40
    %s44 = sphi 0, %s43
    %s60 = sphi 0, %s44
    %s68 = sphi 0, %s70
    %s71 = sphi 0, %s68
    %s72 = sphi 0, %s71
    %s88 = sphi 0, %s72
    %s94 = sphi 0, %s96
    %s97 = sphi 0, %s94
    %s98 = sphi 0, %s97
    %s114 = sphi 0, %s98
    %s122 = sphi 0, %s124
    %s125 = sphi 0, %s122
    %s126 = sphi 0, %s125
    %s142 = sphi 0, %s126
  $region4: #{discriminator_forward.6} parent=0 // loop_header_branch
    %12 = sbr.rel (%p10) target = $region8
  $region5: #{discriminator_forward.6} parent=0 // loop_body
    %s14 = ssub.s32 %s9, 1
    %s15 = ssub.s32 %s9, 2
    %s25 = sadd.s32 1, %s18
    %p26 = scmp.ge.s32.totalorder %s25, 1
    %s27 = scalar_select %p26, 0, %s25
    %s28 = sadd.s32 1, %s17
    %s29 = scalar_select %p26, %s28, %s17
    %p30 = scmp.ge.s32.totalorder %s29, 4
    %s31 = scalar_select %p30, 0, %s29
    %s32 = sadd.s32 1, %s16
    %s33 = scalar_select %p30, %s32, %s16
    %p34 = scmp.ge.s32.totalorder %s33, 1
    %s35 = scalar_select %p34, 0, %s33
    %s36 = ssub.s32 %s17, %s31
    %s37 = ssub.s32 %s18, %s27
    %s38 = sor.u32 %s36, %s37
    %p39 = scmp.eq.s32.totalorder %s38, 0
    %s41 = sadd.s32 %s40, 1
    %s42 = scalar_select %p39, %s40, %s41
    %p45 = pneg %p39
    %p46 = scmp.eq.s32.totalorder %s9, 3
    %p47 = por %p45, %p46
    %p48 = scmp.ne.s32.totalorder %s40, %s43
    %p49 = scmp.eq.s32.totalorder %s9, 0
    %p50 = por %p48, %p49
    %p51 = scmp.ne.s32.totalorder %s40, %s43
    %p52 = scmp.eq.s32.totalorder %s14, 3
    %p53 = por %p51, %p52
    %p54 = scmp.ne.s32.totalorder %s43, %s44
    %p55 = scmp.eq.s32.totalorder %s14, 0
    %p56 = por %p54, %p55
    %p57 = scmp.ne.s32.totalorder %s43, %s44
    %p58 = scmp.eq.s32.totalorder %s15, 3
    %p59 = por %p57, %p58
    %p61 = scmp.ne.s32.totalorder %s44, %s60
    %p62 = scmp.eq.s32.totalorder %s15, 0
    %p63 = por %p61, %p62
    %s64 = ssub.s32 %s18, %s27
    %s65 = ssub.s32 %s16, %s35
    %s66 = sor.u32 %s64, %s65
    %p67 = scmp.eq.s32.totalorder %s66, 0
    %s69 = sadd.s32 %s68, 1
    %s70 = scalar_select %p67, %s68, %s69
    %p73 = pneg %p67
    %p74 = scmp.eq.s32.totalorder %s9, 3
    %p75 = por %p73, %p74
    %p76 = scmp.ne.s32.totalorder %s68, %s71
    %p77 = scmp.eq.s32.totalorder %s9, 0
    %p78 = por %p76, %p77
    %p79 = scmp.ne.s32.totalorder %s68, %s71
    %p80 = scmp.eq.s32.totalorder %s14, 3
    %p81 = por %p79, %p80
    %p82 = scmp.ne.s32.totalorder %s71, %s72
    %p83 = scmp.eq.s32.totalorder %s14, 0
    %p84 = por %p82, %p83
    %p85 = scmp.ne.s32.totalorder %s71, %s72
    %p86 = scmp.eq.s32.totalorder %s15, 3
    %p87 = por %p85, %p86
    %p89 = scmp.ne.s32.totalorder %s72, %s88
    %p90 = scmp.eq.s32.totalorder %s15, 0
    %p91 = por %p89, %p90
    %s92 = ssub.s32 %s16, %s35
    %p93 = scmp.eq.s32.totalorder %s92, 0
    %s95 = sadd.s32 %s94, 1
    %s96 = scalar_select %p93, %s94, %s95
    %p99 = pneg %p93
    %p100 = scmp.eq.s32.totalorder %s9, 3
    %p101 = por %p99, %p100
    %p102 = scmp.ne.s32.totalorder %s94, %s97
    %p103 = scmp.eq.s32.totalorder %s9, 0
    %p104 = por %p102, %p103
    %p105 = scmp.ne.s32.totalorder %s94, %s97
    %p106 = scmp.eq.s32.totalorder %s14, 3
    %p107 = por %p105, %p106
    %p108 = scmp.ne.s32.totalorder %s97, %s98
    %p109 = scmp.eq.s32.totalorder %s14, 0
    %p110 = por %p108, %p109
    %p111 = scmp.ne.s32.totalorder %s97, %s98
    %p112 = scmp.eq.s32.totalorder %s15, 3
    %p113 = por %p111, %p112
    %p115 = scmp.ne.s32.totalorder %s98, %s114
    %p116 = scmp.eq.s32.totalorder %s15, 0
    %p117 = por %p115, %p116
    %s118 = ssub.s32 %s17, %s31
    %s119 = ssub.s32 %s16, %s35
    %s120 = sor.u32 %s118, %s119
    %p121 = scmp.eq.s32.totalorder %s120, 0
    %s123 = sadd.s32 %s122, 1
    %s124 = scalar_select %p121, %s122, %s123
    %p127 = pneg %p121
    %p128 = scmp.eq.s32.totalorder %s9, 3
    %p129 = por %p127, %p128
    %p130 = scmp.ne.s32.totalorder %s122, %s125
    %p131 = scmp.eq.s32.totalorder %s9, 0
    %p132 = por %p130, %p131
    %p133 = scmp.ne.s32.totalorder %s122, %s125
    %p134 = scmp.eq.s32.totalorder %s14, 3
    %p135 = por %p133, %p134
    %p136 = scmp.ne.s32.totalorder %s125, %s126
    %p137 = scmp.eq.s32.totalorder %s14, 0
    %p138 = por %p136, %p137
    %p139 = scmp.ne.s32.totalorder %s125, %s126
    %p140 = scmp.eq.s32.totalorder %s15, 3
    %p141 = por %p139, %p140
    %p143 = scmp.ne.s32.totalorder %s126, %s142
    %p144 = scmp.eq.s32.totalorder %s15, 0
    %p145 = por %p143, %p144
    %p146 = scmp.le.s32.totalorder 1, %s9
    %p147 = scmp.lt.s32.totalorder %s9, 5
    %p148 = pnand %p146, %p147
    %p149 = pneg %p148
    // Predicated region
    $region9: #{discriminator_forward.6} parent=5 // pred_check
      _
    $region10: #{discriminator_forward.6} parent=5 // pred_check_branch
      %151 = sbr.rel (%p148) target = $region12
    $region11: #{discriminator_forward.6} parent=5 // pred_region
      %s152 = ssub.s32 %s9, 1
      // Predicated region
      $region13: #{discriminator_forward.6} parent=11 // pred_check
        %p153 = pneg %p84
      $region14: #{discriminator_forward.6} parent=11 // pred_check_branch
        %155 = sbr.rel (%p153) target = $region16
      $region15: #{discriminator_forward.6} parent=11 // pred_region
        %s156 = smul.u32 16, %s21
        %p157 = scmp.lt.s32.totalorder %s156, 15
        %s158 = scalar_select %p157, %s156, 15
        %p159 = scmp.lt.s32.totalorder %s19, 0
        %s160 = scalar_select %p159, %s19, 0
        %s161 = sadd.s32 %s160, %s158
        %s162 = smul.addr %s161, 4
        %s163 = scalar_lea.vmem %s1, %s162
        %s164 = smul.u32 16, %s21
      $region16: #{discriminator_forward.6} parent=11 // pred_fallthru
        _
      // Predicated region
      $region17: #{discriminator_forward.6} parent=11 // pred_check
        %p165 = pneg %p110
      $region18: #{discriminator_forward.6} parent=11 // pred_check_branch
        %167 = sbr.rel (%p165) target = $region20
      $region19: #{discriminator_forward.6} parent=11 // pred_region
        %p168 = scmp.lt.s32.totalorder %s19, 0
        %s169 = scalar_select %p168, %s19, 0
        %s170 = scalar_lea.vmem %s2, %s169
      $region20: #{discriminator_forward.6} parent=11 // pred_fallthru
        _
    $region12: #{discriminator_forward.6} parent=5 // pred_fallthru
      _
    %p171 = scmp.lt.s32.totalorder %s9, 4
    // Predicated region
    $region21: #{discriminator_forward.6} parent=5 // pred_check
      %p172 = pneg %p171
    $region22: #{discriminator_forward.6} parent=5 // pred_check_branch
      %174 = sbr.rel (%p172) target = $region24
    $region23: #{discriminator_forward.6} parent=5 // pred_region
      // Predicated region
      $region25: #{discriminator_forward.6} parent=23 // pred_check
        %p175 = pneg %p50
      $region26: #{discriminator_forward.6} parent=23 // pred_check_branch
        %177 = sbr.rel (%p175) target = $region28
      $region27: #{discriminator_forward.6} parent=23 // pred_region
        %s178 = smul.u32 64, %s17
        %p179 = scmp.lt.s32.totalorder %s178, 255
        %s180 = scalar_select %p179, %s178, 255
        %p181 = scmp.lt.s32.totalorder %s18, 0
        %s182 = scalar_select %p181, %s18, 0
        %s183 = sadd.s32 %s182, %s180
        %s184 = smul.addr %s183, 4
        %s185 = scalar_lea.vmem %s0, %s184
        %s186 = smul.u32 64, %s17
      $region28: #{discriminator_forward.6} parent=23 // pred_fallthru
        _
    $region24: #{discriminator_forward.6} parent=5 // pred_fallthru
      _
    %p187 = scmp.le.s32.totalorder 1, %s9
    %p188 = scmp.lt.s32.totalorder %s9, 5
    %p189 = pnand %p187, %p188
    %p190 = pneg %p189
    // Predicated region
    $region29: #{discriminator_forward.6} parent=5 // pred_check
      _
    $region30: #{discriminator_forward.6} parent=5 // pred_check_branch
      %192 = sbr.rel (%p189) target = $region32
    $region31: #{discriminator_forward.6} parent=5 // pred_region
      %s193 = ssub.s32 %s9, 1
      %s194 = smul.u32 64, %s20
      %p195 = scmp.lt.s32.totalorder %s194, 255
      %s196 = scalar_select %p195, %s194, 255
      %p197 = scmp.lt.s32.totalorder %s21, 0
      %s198 = scalar_select %p197, %s21, 0
      %s199 = sadd.s32 %s198, %s196
      %s200 = smul.addr %s199, 4
      %s201 = scalar_lea.vmem %s0, %s200
      %p202 = pneg %p56
      %p203 = pneg %p53
      %s204 = smul.u32 16, %s21
      %p205 = scmp.lt.s32.totalorder %s204, 15
      %s206 = scalar_select %p205, %s204, 15
      %p207 = scmp.lt.s32.totalorder %s19, 0
      %s208 = scalar_select %p207, %s19, 0
      %s209 = sadd.s32 %s208, %s206
      %s210 = smul.addr %s209, 4
      %s211 = scalar_lea.vmem %s1, %s210
      %p212 = pneg %p84
      %p213 = pneg %p81
      %p214 = scmp.lt.s32.totalorder %s19, 0
      %s215 = scalar_select %p214, %s19, 0
      %s216 = scalar_lea.vmem %s2, %s215
      %p217 = pneg %p110
      %p218 = pneg %p107
      %p219 = pneg %p138
      %p220 = pneg %p135
      %s221 = smul.u32 64, %s20
      %p222 = scmp.lt.s32.totalorder %s221, 255
      %s223 = scalar_select %p222, %s221, 255
      %p224 = scmp.lt.s32.totalorder %s19, 0
      %s225 = scalar_select %p224, %s19, 0
      %s226 = sadd.s32 %s225, %s223
      %s227 = smul.addr %s226, 4
      %s228 = scalar_lea.vmem %s3, %s227
      %s229 = smul.u32 64, %s20
      %p230 = scmp.lt.s32.totalorder %s229, 255
      %s231 = scalar_select %p230, %s229, 255
      %p232 = scmp.lt.s32.totalorder %s21, 0
      %s233 = scalar_select %p232, %s21, 0
      %s234 = sadd.s32 %s233, %s231
      %s235 = smul.addr %s234, 4
      %s236 = scalar_lea.vmem %s0, %s235
      %s237 = smul.u32 64, %s20
      %s238 = smul.u32 16, %s21
      %p239 = scmp.lt.s32.totalorder %s238, 15
      %s240 = scalar_select %p239, %s238, 15
      %p241 = scmp.lt.s32.totalorder %s19, 0
      %s242 = scalar_select %p241, %s19, 0
      %s243 = sadd.s32 %s242, %s240
      %s244 = smul.addr %s243, 4
      %s245 = scalar_lea.vmem %s1, %s244
      %s246 = smul.u32 16, %s21
      %p247 = scmp.lt.s32.totalorder %s19, 0
      %s248 = scalar_select %p247, %s19, 0
      %s249 = scalar_lea.vmem %s2, %s248
      %s250 = smul.u32 64, %s20
      %p251 = scmp.lt.s32.totalorder %s250, 255
      %s252 = scalar_select %p251, %s250, 255
      %p253 = scmp.lt.s32.totalorder %s19, 0
      %s254 = scalar_select %p253, %s19, 0
      %s255 = sadd.s32 %s254, %s252
      %s256 = smul.addr %s255, 4
      %s257 = scalar_lea.vmem %s3, %s256
      %s258 = smul.u32 64, %s20
      %v260 = vld [vmem:[%s236] sm:$0xf]
      %v261 = vld [vmem:[%s236 + $0x4] sm:$0xf]
      %v262 = vld [vmem:[%s236 + $0x8] sm:$0xf]
      %v263 = vld [vmem:[%s236 + $0xc] sm:$0xf]
      %v264 = vld [vmem:[%s236 + $0x10] sm:$0xf]
      %v265 = vld [vmem:[%s236 + $0x14] sm:$0xf]
      %v266 = vld [vmem:[%s236 + $0x18] sm:$0xf]
      %v267 = vld [vmem:[%s236 + $0x1c] sm:$0xf]
      %v268 = vld [vmem:[%s236 + $0x20] sm:$0xf]
      %v269 = vld [vmem:[%s236 + $0x24] sm:$0xf]
      %v270 = vld [vmem:[%s236 + $0x28] sm:$0xf]
      %v271 = vld [vmem:[%s236 + $0x2c] sm:$0xf]
      %v272 = vld [vmem:[%s236 + $0x30] sm:$0xf]
      %v273 = vld [vmem:[%s236 + $0x34] sm:$0xf]
      %v274 = vld [vmem:[%s236 + $0x38] sm:$0xf]
      %v275 = vld [vmem:[%s236 + $0x3c] sm:$0xf]
      %v276 = vld [vmem:[%s236 + $0x40] sm:$0xf]
      %v277 = vld [vmem:[%s236 + $0x44] sm:$0xf]
      %v278 = vld [vmem:[%s236 + $0x48] sm:$0xf]
      %v279 = vld [vmem:[%s236 + $0x4c] sm:$0xf]
      %v280 = vld [vmem:[%s236 + $0x50] sm:$0xf]
      %v281 = vld [vmem:[%s236 + $0x54] sm:$0xf]
      %v282 = vld [vmem:[%s236 + $0x58] sm:$0xf]
      %v283 = vld [vmem:[%s236 + $0x5c] sm:$0xf]
      %v284 = vld [vmem:[%s236 + $0x60] sm:$0xf]
      %v285 = vld [vmem:[%s236 + $0x64] sm:$0xf]
      %v286 = vld [vmem:[%s236 + $0x68] sm:$0xf]
      %v287 = vld [vmem:[%s236 + $0x6c] sm:$0xf]
      %v288 = vld [vmem:[%s236 + $0x70] sm:$0xf]
      %v289 = vld [vmem:[%s236 + $0x74] sm:$0xf]
      %v290 = vld [vmem:[%s236 + $0x78] sm:$0xf]
      %v291 = vld [vmem:[%s236 + $0x7c] sm:$0xf]
      %v292 = vld [vmem:[%s236 + $0x80] sm:$0xf]
      %v293 = vld [vmem:[%s236 + $0x84] sm:$0xf]
      %v294 = vld [vmem:[%s236 + $0x88] sm:$0xf]
      %v295 = vld [vmem:[%s236 + $0x8c] sm:$0xf]
      %v296 = vld [vmem:[%s236 + $0x90] sm:$0xf]
      %v297 = vld [vmem:[%s236 + $0x94] sm:$0xf]
      %v298 = vld [vmem:[%s236 + $0x98] sm:$0xf]
      %v299 = vld [vmem:[%s236 + $0x9c] sm:$0xf]
      %v300 = vld [vmem:[%s236 + $0xa0] sm:$0xf]
      %v301 = vld [vmem:[%s236 + $0xa4] sm:$0xf]
      %v302 = vld [vmem:[%s236 + $0xa8] sm:$0xf]
      %v303 = vld [vmem:[%s236 + $0xac] sm:$0xf]
      %v304 = vld [vmem:[%s236 + $0xb0] sm:$0xf]
      %v305 = vld [vmem:[%s236 + $0xb4] sm:$0xf]
      %v306 = vld [vmem:[%s236 + $0xb8] sm:$0xf]
      %v307 = vld [vmem:[%s236 + $0xbc] sm:$0xf]
      %v308 = vld [vmem:[%s236 + $0xc0] sm:$0xf]
      %v309 = vld [vmem:[%s236 + $0xc4] sm:$0xf]
      %v310 = vld [vmem:[%s236 + $0xc8] sm:$0xf]
      %v311 = vld [vmem:[%s236 + $0xcc] sm:$0xf]
      %v312 = vld [vmem:[%s236 + $0xd0] sm:$0xf]
      %v313 = vld [vmem:[%s236 + $0xd4] sm:$0xf]
      %v314 = vld [vmem:[%s236 + $0xd8] sm:$0xf]
      %v315 = vld [vmem:[%s236 + $0xdc] sm:$0xf]
      %v316 = vld [vmem:[%s236 + $0xe0] sm:$0xf]
      %v317 = vld [vmem:[%s236 + $0xe4] sm:$0xf]
      %v318 = vld [vmem:[%s236 + $0xe8] sm:$0xf]
      %v319 = vld [vmem:[%s236 + $0xec] sm:$0xf]
      %v320 = vld [vmem:[%s236 + $0xf0] sm:$0xf]
      %v321 = vld [vmem:[%s236 + $0xf4] sm:$0xf]
      %v322 = vld [vmem:[%s236 + $0xf8] sm:$0xf]
      %v323 = vld [vmem:[%s236 + $0xfc] sm:$0xf]
      %v324 = vld [vmem:[%s245] sm:$0xf]
      %v325 = vld [vmem:[%s245 + $0x4] sm:$0xf]
      %v326 = vld [vmem:[%s245 + $0x8] sm:$0xf]
      %v327 = vld [vmem:[%s245 + $0xc] sm:$0xf]
      %v328 = vld [vmem:[%s245 + $0x10] sm:$0xf]
      %v329 = vld [vmem:[%s245 + $0x14] sm:$0xf]
      %v330 = vld [vmem:[%s245 + $0x18] sm:$0xf]
      %v331 = vld [vmem:[%s245 + $0x1c] sm:$0xf]
      %v332 = vld [vmem:[%s245 + $0x20] sm:$0xf]
      %v333 = vld [vmem:[%s245 + $0x24] sm:$0xf]
      %v334 = vld [vmem:[%s245 + $0x28] sm:$0xf]
      %v335 = vld [vmem:[%s245 + $0x2c] sm:$0xf]
      %v336 = vld [vmem:[%s245 + $0x30] sm:$0xf]
      %v337 = vld [vmem:[%s245 + $0x34] sm:$0xf]
      %v338 = vld [vmem:[%s245 + $0x38] sm:$0xf]
      %v339 = vld [vmem:[%s245 + $0x3c] sm:$0xf]
      %v340 = vld [vmem:[%s249] sm:$0x1]
      %v342 = vlaneseq
      %v343 = vshrl.u32 %v342, 7
      %v344 = vsub.s32 0, %v343
      %v345 = vrot.slane %v340, %v344
      %v411 = vunpack.c.l.b16 %v260
      %v412 = vunpack.c.l.b16 %v261
      %v413 = vunpack.c.l.b16 %v262
      %v414 = vunpack.c.l.b16 %v263
      %v415 = vunpack.c.l.b16 %v264
      %v416 = vunpack.c.l.b16 %v265
      %v417 = vunpack.c.l.b16 %v266
      %v418 = vunpack.c.l.b16 %v267
      %v419 = vunpack.c.l.b16 %v268
      %v420 = vunpack.c.l.b16 %v269
      %v421 = vunpack.c.l.b16 %v270
      %v422 = vunpack.c.l.b16 %v271
      %v423 = vunpack.c.l.b16 %v272
      %v424 = vunpack.c.l.b16 %v273
      %v425 = vunpack.c.l.b16 %v274
      %v426 = vunpack.c.l.b16 %v275
      %v427 = vunpack.c.l.b16 %v276
      %v428 = vunpack.c.l.b16 %v277
      %v429 = vunpack.c.l.b16 %v278
      %v430 = vunpack.c.l.b16 %v279
      %v431 = vunpack.c.l.b16 %v280
      %v432 = vunpack.c.l.b16 %v281
      %v433 = vunpack.c.l.b16 %v282
      %v434 = vunpack.c.l.b16 %v283
      %v435 = vunpack.c.l.b16 %v284
      %v436 = vunpack.c.l.b16 %v285
      %v437 = vunpack.c.l.b16 %v286
      %v438 = vunpack.c.l.b16 %v287
      %v439 = vunpack.c.l.b16 %v288
      %v440 = vunpack.c.l.b16 %v289
      %v441 = vunpack.c.l.b16 %v290
      %v442 = vunpack.c.l.b16 %v291
      %v443 = vunpack.c.l.b16 %v292
      %v444 = vunpack.c.l.b16 %v293
      %v445 = vunpack.c.l.b16 %v294
      %v446 = vunpack.c.l.b16 %v295
      %v447 = vunpack.c.l.b16 %v296
      %v448 = vunpack.c.l.b16 %v297
      %v449 = vunpack.c.l.b16 %v298
      %v450 = vunpack.c.l.b16 %v299
      %v451 = vunpack.c.l.b16 %v300
      %v452 = vunpack.c.l.b16 %v301
      %v453 = vunpack.c.l.b16 %v302
      %v454 = vunpack.c.l.b16 %v303
      %v455 = vunpack.c.l.b16 %v304
      %v456 = vunpack.c.l.b16 %v305
      %v457 = vunpack.c.l.b16 %v306
      %v458 = vunpack.c.l.b16 %v307
      %v459 = vunpack.c.l.b16 %v308
      %v460 = vunpack.c.l.b16 %v309
      %v461 = vunpack.c.l.b16 %v310
      %v462 = vunpack.c.l.b16 %v311
      %v463 = vunpack.c.l.b16 %v312
      %v464 = vunpack.c.l.b16 %v313
      %v465 = vunpack.c.l.b16 %v314
      %v466 = vunpack.c.l.b16 %v315
      %v467 = vunpack.c.l.b16 %v316
      %v468 = vunpack.c.l.b16 %v317
      %v469 = vunpack.c.l.b16 %v318
      %v470 = vunpack.c.l.b16 %v319
      %v471 = vunpack.c.l.b16 %v320
      %v472 = vunpack.c.l.b16 %v321
      %v473 = vunpack.c.l.b16 %v322
      %v474 = vunpack.c.l.b16 %v323
      %v475 = vpack.c.b16 %v412, %v411
      %v476 = vpack.c.b16 %v414, %v413
      %v477 = vpack.c.b16 %v416, %v415
      %v478 = vpack.c.b16 %v418, %v417
      %v479 = vpack.c.b16 %v420, %v419
      %v480 = vpack.c.b16 %v422, %v421
      %v481 = vpack.c.b16 %v424, %v423
      %v482 = vpack.c.b16 %v426, %v425
      %v483 = vpack.c.b16 %v428, %v427
      %v484 = vpack.c.b16 %v430, %v429
      %v485 = vpack.c.b16 %v432, %v431
      %v486 = vpack.c.b16 %v434, %v433
      %v487 = vpack.c.b16 %v436, %v435
      %v488 = vpack.c.b16 %v438, %v437
      %v489 = vpack.c.b16 %v440, %v439
      %v490 = vpack.c.b16 %v442, %v441
      %v491 = vpack.c.b16 %v444, %v443
      %v492 = vpack.c.b16 %v446, %v445
      %v493 = vpack.c.b16 %v448, %v447
      %v494 = vpack.c.b16 %v450, %v449
      %v495 = vpack.c.b16 %v452, %v451
      %v496 = vpack.c.b16 %v454, %v453
      %v497 = vpack.c.b16 %v456, %v455
      %v498 = vpack.c.b16 %v458, %v457
      %v499 = vpack.c.b16 %v460, %v459
      %v500 = vpack.c.b16 %v462, %v461
      %v501 = vpack.c.b16 %v464, %v463
      %v502 = vpack.c.b16 %v466, %v465
      %v503 = vpack.c.b16 %v468, %v467
      %v504 = vpack.c.b16 %v470, %v469
      %v505 = vpack.c.b16 %v472, %v471
      %v506 = vpack.c.b16 %v474, %v473
      %v555 = vunpack.c.l.b16 %v324
      %v556 = vunpack.c.l.b16 %v325
      %v557 = vunpack.c.l.b16 %v326
      %v558 = vunpack.c.l.b16 %v327
      %v559 = vunpack.c.l.b16 %v328
      %v560 = vunpack.c.l.b16 %v329
      %v561 = vunpack.c.l.b16 %v330
      %v562 = vunpack.c.l.b16 %v331
      %v563 = vunpack.c.l.b16 %v332
      %v564 = vunpack.c.l.b16 %v333
      %v565 = vunpack.c.l.b16 %v334
      %v566 = vunpack.c.l.b16 %v335
      %v567 = vunpack.c.l.b16 %v336
      %v568 = vunpack.c.l.b16 %v337
      %v569 = vunpack.c.l.b16 %v338
      %v570 = vunpack.c.l.b16 %v339
      %v571 = vpack.c.b16 %v556, %v555
      %v572 = vpack.c.b16 %v558, %v557
      %v573 = vpack.c.b16 %v560, %v559
      %v574 = vpack.c.b16 %v562, %v561
      %v575 = vpack.c.b16 %v564, %v563
      %v576 = vpack.c.b16 %v566, %v565
      %v577 = vpack.c.b16 %v568, %v567
      %v578 = vpack.c.b16 %v570, %v569
      %587 = vmatprep.subr.bf16.mxu0 0
      %588 = vmatpush1.bf16.msra.mxu0 %v571
      %589 = vmatprep.subr.bf16.mxu0 0
      %590 = vmatpush1.bf16.msra.mxu0 %v572
      %591 = vmatprep.subr.bf16.mxu0 0
      %592 = vmatpush1.bf16.msra.mxu0 %v573
      %593 = vmatprep.subr.bf16.mxu0 0
      %594 = vmatpush1.bf16.msra.mxu0 %v574
      %595 = vmatprep.subr.bf16.mxu0 0
      %596 = vmatpush1.bf16.msra.mxu0 %v575
      %597 = vmatprep.subr.bf16.mxu0 0
      %598 = vmatpush1.bf16.msra.mxu0 %v576
      %599 = vmatprep.subr.bf16.mxu0 0
      %600 = vmatpush1.bf16.msra.mxu0 %v577
      %601 = vmatprep.subr.bf16.mxu0 0
      %602 = vmatpush1.bf16.msra.mxu0 %v578
      %603 = vmatprep.subr.bf16.mxu0 0
      %604 = vmatpush1.bf16.msra.mxu0 0
      %605 = vmatprep.subr.bf16.mxu0 0
      %606 = vmatpush1.bf16.msra.mxu0 0
      %607 = vmatprep.subr.bf16.mxu0 0
      %608 = vmatpush1.bf16.msra.mxu0 0
      %609 = vmatprep.subr.bf16.mxu0 0
      %610 = vmatpush1.bf16.msra.mxu0 0
      %611 = vmatprep.subr.bf16.mxu0 0
      %612 = vmatpush1.bf16.msra.mxu0 0
      %613 = vmatprep.subr.bf16.mxu0 0
      %614 = vmatpush1.bf16.msra.mxu0 0
      %615 = vmatprep.subr.bf16.mxu0 0
      %616 = vmatpush1.bf16.msra.mxu0 0
      %617 = vmatprep.subr.bf16.mxu0 0
      %618 = vmatpush1.bf16.msra.mxu0 0
      %619 = vmatprep.mubr.bf16.mxu0 0
      %620 = vmatmul.mubr.bf16.gmra.mrb[0].mxu0 %v475
      %v621 = vpop.f32.mrb[0].mxu0
      %v622 = vadd.f32 %v345, %v621
      %v623 = vpop.f32.mrb[0].mxu0
      %v624 = vpop.f32.mrb[0].mxu0
      %v625 = vadd.f32 %v345, %v624
      %v626 = vpop.f32.mrb[0].mxu0
      %627 = vmatprep.mubr.bf16.mxu0 0
      %628 = vmatmul.mubr.bf16.gmra.mrb[0].mxu0 %v476
      %v629 = vpop.f32.mrb[0].mxu0
      %v630 = vadd.f32 %v345, %v629
      %v631 = vpop.f32.mrb[0].mxu0
      %v632 = vpop.f32.mrb[0].mxu0
      %v633 = vadd.f32 %v345, %v632
      %v634 = vpop.f32.mrb[0].mxu0
      %635 = vmatprep.mubr.bf16.mxu0 0
      %636 = vmatmul.mubr.bf16.gmra.mrb[0].mxu0 %v477
      %v637 = vpop.f32.mrb[0].mxu0
      %v638 = vadd.f32 %v345, %v637
      %v639 = vpop.f32.mrb[0].mxu0
      %v640 = vpop.f32.mrb[0].mxu0
      %v641 = vadd.f32 %v345, %v640
      %v642 = vpop.f32.mrb[0].mxu0
      %643 = vmatprep.mubr.bf16.mxu0 0
      %644 = vmatmul.mubr.bf16.gmra.mrb[0].mxu0 %v478
      %v645 = vpop.f32.mrb[0].mxu0
      %v646 = vadd.f32 %v345, %v645
      %v647 = vpop.f32.mrb[0].mxu0
      %v648 = vpop.f32.mrb[0].mxu0
      %v649 = vadd.f32 %v345, %v648
      %v650 = vpop.f32.mrb[0].mxu0
      %651 = vmatprep.mubr.bf16.mxu0 0
      %652 = vmatmul.mubr.bf16.gmra.mrb[0].mxu0 %v479
      %v653 = vpop.f32.mrb[0].mxu0
      %v654 = vadd.f32 %v345, %v653
      %v655 = vpop.f32.mrb[0].mxu0
      %v656 = vpop.f32.mrb[0].mxu0
      %v657 = vadd.f32 %v345, %v656
      %v658 = vpop.f32.mrb[0].mxu0
      %659 = vmatprep.mubr.bf16.mxu0 0
      %660 = vmatmul.mubr.bf16.gmra.mrb[0].mxu0 %v480
      %v661 = vpop.f32.mrb[0].mxu0
      %v662 = vadd.f32 %v345, %v661
      %v663 = vpop.f32.mrb[0].mxu0
      %v664 = vpop.f32.mrb[0].mxu0
      %v665 = vadd.f32 %v345, %v664
      %v666 = vpop.f32.mrb[0].mxu0
      %667 = vmatprep.mubr.bf16.mxu0 0
      %668 = vmatmul.mubr.bf16.gmra.mrb[0].mxu0 %v481
      %v669 = vpop.f32.mrb[0].mxu0
      %v670 = vadd.f32 %v345, %v669
      %v671 = vpop.f32.mrb[0].mxu0
      %v672 = vpop.f32.mrb[0].mxu0
      %v673 = vadd.f32 %v345, %v672
      %v674 = vpop.f32.mrb[0].mxu0
      %675 = vmatprep.mubr.bf16.mxu0 0
      %676 = vmatmul.mubr.bf16.gmra.mrb[0].mxu0 %v482
      %v677 = vpop.f32.mrb[0].mxu0
      %v678 = vadd.f32 %v345, %v677
      %v679 = vpop.f32.mrb[0].mxu0
      %v680 = vpop.f32.mrb[0].mxu0
      %v681 = vadd.f32 %v345, %v680
      %v682 = vpop.f32.mrb[0].mxu0
      %683 = vmatprep.mubr.bf16.mxu0 0
      %684 = vmatmul.mubr.bf16.gmra.mrb[0].mxu0 %v483
      %v685 = vpop.f32.mrb[0].mxu0
      %v686 = vadd.f32 %v345, %v685
      %v687 = vpop.f32.mrb[0].mxu0
      %v688 = vpop.f32.mrb[0].mxu0
      %v689 = vadd.f32 %v345, %v688
      %v690 = vpop.f32.mrb[0].mxu0
      %691 = vmatprep.mubr.bf16.mxu0 0
      %692 = vmatmul.mubr.bf16.gmra.mrb[0].mxu0 %v484
      %v693 = vpop.f32.mrb[0].mxu0
      %v694 = vadd.f32 %v345, %v693
      %v695 = vpop.f32.mrb[0].mxu0
      %v696 = vpop.f32.mrb[0].mxu0
      %v697 = vadd.f32 %v345, %v696
      %v698 = vpop.f32.mrb[0].mxu0
      %699 = vmatprep.mubr.bf16.mxu0 0
      %700 = vmatmul.mubr.bf16.gmra.mrb[0].mxu0 %v485
      %v701 = vpop.f32.mrb[0].mxu0
      %v702 = vadd.f32 %v345, %v701
      %v703 = vpop.f32.mrb[0].mxu0
      %v704 = vpop.f32.mrb[0].mxu0
      %v705 = vadd.f32 %v345, %v704
      %v706 = vpop.f32.mrb[0].mxu0
      %707 = vmatprep.mubr.bf16.mxu0 0
      %708 = vmatmul.mubr.bf16.gmra.mrb[0].mxu0 %v486
      %v709 = vpop.f32.mrb[0].mxu0
      %v710 = vadd.f32 %v345, %v709
      %v711 = vpop.f32.mrb[0].mxu0
      %v712 = vpop.f32.mrb[0].mxu0
      %v713 = vadd.f32 %v345, %v712
      %v714 = vpop.f32.mrb[0].mxu0
      %715 = vmatprep.mubr.bf16.mxu0 0
      %716 = vmatmul.mubr.bf16.gmra.mrb[0].mxu0 %v487
      %v717 = vpop.f32.mrb[0].mxu0
      %v718 = vadd.f32 %v345, %v717
      %v719 = vpop.f32.mrb[0].mxu0
      %v720 = vpop.f32.mrb[0].mxu0
      %v721 = vadd.f32 %v345, %v720
      %v722 = vpop.f32.mrb[0].mxu0
      %723 = vmatprep.mubr.bf16.mxu0 0
      %724 = vmatmul.mubr.bf16.gmra.mrb[0].mxu0 %v488
      %v725 = vpop.f32.mrb[0].mxu0
      %v726 = vadd.f32 %v345, %v725
      %v727 = vpop.f32.mrb[0].mxu0
      %v728 = vpop.f32.mrb[0].mxu0
      %v729 = vadd.f32 %v345, %v728
      %v730 = vpop.f32.mrb[0].mxu0
      %731 = vmatprep.mubr.bf16.mxu0 0
      %732 = vmatmul.mubr.bf16.gmra.mrb[0].mxu0 %v489
      %v733 = vpop.f32.mrb[0].mxu0
      %v734 = vadd.f32 %v345, %v733
      %v735 = vpop.f32.mrb[0].mxu0
      %v736 = vpop.f32.mrb[0].mxu0
      %v737 = vadd.f32 %v345, %v736
      %v738 = vpop.f32.mrb[0].mxu0
      %739 = vmatprep.mubr.bf16.mxu0 0
      %740 = vmatmul.mubr.bf16.gmra.mrb[0].mxu0 %v490
      %v741 = vpop.f32.mrb[0].mxu0
      %v742 = vadd.f32 %v345, %v741
      %v743 = vpop.f32.mrb[0].mxu0
      %v744 = vpop.f32.mrb[0].mxu0
      %v745 = vadd.f32 %v345, %v744
      %v746 = vpop.f32.mrb[0].mxu0
      %747 = vmatprep.mubr.bf16.mxu0 0
      %748 = vmatmul.mubr.bf16.gmra.mrb[0].mxu0 %v491
      %v749 = vpop.f32.mrb[0].mxu0
      %v750 = vadd.f32 %v345, %v749
      %v751 = vpop.f32.mrb[0].mxu0
      %v752 = vpop.f32.mrb[0].mxu0
      %v753 = vadd.f32 %v345, %v752
      %v754 = vpop.f32.mrb[0].mxu0
      %755 = vmatprep.mubr.bf16.mxu0 0
      %756 = vmatmul.mubr.bf16.gmra.mrb[0].mxu0 %v492
      %v757 = vpop.f32.mrb[0].mxu0
      %v758 = vadd.f32 %v345, %v757
      %v759 = vpop.f32.mrb[0].mxu0
      %v760 = vpop.f32.mrb[0].mxu0
      %v761 = vadd.f32 %v345, %v760
      %v762 = vpop.f32.mrb[0].mxu0
      %763 = vmatprep.mubr.bf16.mxu0 0
      %764 = vmatmul.mubr.bf16.gmra.mrb[0].mxu0 %v493
      %v765 = vpop.f32.mrb[0].mxu0
      %v766 = vadd.f32 %v345, %v765
      %v767 = vpop.f32.mrb[0].mxu0
      %v768 = vpop.f32.mrb[0].mxu0
      %v769 = vadd.f32 %v345, %v768
      %v770 = vpop.f32.mrb[0].mxu0
      %771 = vmatprep.mubr.bf16.mxu0 0
      %772 = vmatmul.mubr.bf16.gmra.mrb[0].mxu0 %v494
      %v773 = vpop.f32.mrb[0].mxu0
      %v774 = vadd.f32 %v345, %v773
      %v775 = vpop.f32.mrb[0].mxu0
      %v776 = vpop.f32.mrb[0].mxu0
      %v777 = vadd.f32 %v345, %v776
      %v778 = vpop.f32.mrb[0].mxu0
      %779 = vmatprep.mubr.bf16.mxu0 0
      %780 = vmatmul.mubr.bf16.gmra.mrb[0].mxu0 %v495
      %v781 = vpop.f32.mrb[0].mxu0
      %v782 = vadd.f32 %v345, %v781
      %v783 = vpop.f32.mrb[0].mxu0
      %v784 = vpop.f32.mrb[0].mxu0
      %v785 = vadd.f32 %v345, %v784
      %v786 = vpop.f32.mrb[0].mxu0
      %787 = vmatprep.mubr.bf16.mxu0 0
      %788 = vmatmul.mubr.bf16.gmra.mrb[0].mxu0 %v496
      %v789 = vpop.f32.mrb[0].mxu0
      %v790 = vadd.f32 %v345, %v789
      %v791 = vpop.f32.mrb[0].mxu0
      %v792 = vpop.f32.mrb[0].mxu0
      %v793 = vadd.f32 %v345, %v792
      %v794 = vpop.f32.mrb[0].mxu0
      %795 = vmatprep.mubr.bf16.mxu0 0
      %796 = vmatmul.mubr.bf16.gmra.mrb[0].mxu0 %v497
      %v797 = vpop.f32.mrb[0].mxu0
      %v798 = vadd.f32 %v345, %v797
      %v799 = vpop.f32.mrb[0].mxu0
      %v800 = vpop.f32.mrb[0].mxu0
      %v801 = vadd.f32 %v345, %v800
      %v802 = vpop.f32.mrb[0].mxu0
      %803 = vmatprep.mubr.bf16.mxu0 0
      %804 = vmatmul.mubr.bf16.gmra.mrb[0].mxu0 %v498
      %v805 = vpop.f32.mrb[0].mxu0
      %v806 = vadd.f32 %v345, %v805
      %v807 = vpop.f32.mrb[0].mxu0
      %v808 = vpop.f32.mrb[0].mxu0
      %v809 = vadd.f32 %v345, %v808
      %v810 = vpop.f32.mrb[0].mxu0
      %811 = vmatprep.mubr.bf16.mxu0 0
      %812 = vmatmul.mubr.bf16.gmra.mrb[0].mxu0 %v499
      %v813 = vpop.f32.mrb[0].mxu0
      %v814 = vadd.f32 %v345, %v813
      %v815 = vpop.f32.mrb[0].mxu0
      %v816 = vpop.f32.mrb[0].mxu0
      %v817 = vadd.f32 %v345, %v816
      %v818 = vpop.f32.mrb[0].mxu0
      %819 = vmatprep.mubr.bf16.mxu0 0
      %820 = vmatmul.mubr.bf16.gmra.mrb[0].mxu0 %v500
      %v821 = vpop.f32.mrb[0].mxu0
      %v822 = vadd.f32 %v345, %v821
      %v823 = vpop.f32.mrb[0].mxu0
      %v824 = vpop.f32.mrb[0].mxu0
      %v825 = vadd.f32 %v345, %v824
      %v826 = vpop.f32.mrb[0].mxu0
      %827 = vmatprep.mubr.bf16.mxu0 0
      %828 = vmatmul.mubr.bf16.gmra.mrb[0].mxu0 %v501
      %v829 = vpop.f32.mrb[0].mxu0
      %v830 = vadd.f32 %v345, %v829
      %v831 = vpop.f32.mrb[0].mxu0
      %v832 = vpop.f32.mrb[0].mxu0
      %v833 = vadd.f32 %v345, %v832
      %v834 = vpop.f32.mrb[0].mxu0
      %835 = vmatprep.mubr.bf16.mxu0 0
      %836 = vmatmul.mubr.bf16.gmra.mrb[0].mxu0 %v502
      %v837 = vpop.f32.mrb[0].mxu0
      %v838 = vadd.f32 %v345, %v837
      %v839 = vpop.f32.mrb[0].mxu0
      %v840 = vpop.f32.mrb[0].mxu0
      %v841 = vadd.f32 %v345, %v840
      %v842 = vpop.f32.mrb[0].mxu0
      %843 = vmatprep.mubr.bf16.mxu0 0
      %844 = vmatmul.mubr.bf16.gmra.mrb[0].mxu0 %v503
      %v845 = vpop.f32.mrb[0].mxu0
      %v846 = vadd.f32 %v345, %v845
      %v847 = vpop.f32.mrb[0].mxu0
      %v848 = vpop.f32.mrb[0].mxu0
      %v849 = vadd.f32 %v345, %v848
      %v850 = vpop.f32.mrb[0].mxu0
      %851 = vmatprep.mubr.bf16.mxu0 0
      %852 = vmatmul.mubr.bf16.gmra.mrb[0].mxu0 %v504
      %v853 = vpop.f32.mrb[0].mxu0
      %v854 = vadd.f32 %v345, %v853
      %v855 = vpop.f32.mrb[0].mxu0
      %v856 = vpop.f32.mrb[0].mxu0
      %v857 = vadd.f32 %v345, %v856
      %v858 = vpop.f32.mrb[0].mxu0
      %859 = vmatprep.mubr.bf16.mxu0 0
      %860 = vmatmul.mubr.bf16.gmra.mrb[0].mxu0 %v505
      %v861 = vpop.f32.mrb[0].mxu0
      %v862 = vadd.f32 %v345, %v861
      %v863 = vpop.f32.mrb[0].mxu0
      %v864 = vpop.f32.mrb[0].mxu0
      %v865 = vadd.f32 %v345, %v864
      %v866 = vpop.f32.mrb[0].mxu0
      %867 = vmatprep.mubr.bf16.mxu0 0
      %868 = vmatmul.mubr.bf16.gmra.mrb[0].mxu0 %v506
      %v869 = vpop.f32.mrb[0].mxu0
      %v870 = vadd.f32 %v345, %v869
      %v871 = vpop.f32.mrb[0].mxu0
      %v872 = vpop.f32.mrb[0].mxu0
      %v873 = vadd.f32 %v345, %v872
      %v874 = vpop.f32.mrb[0].mxu0
      %875 = vdwg.mxu0
      %v876 = vpack.c.bf16 %v625, %v622
      %v877 = vpack.c.bf16 %v633, %v630
      %v878 = vpack.c.bf16 %v641, %v638
      %v879 = vpack.c.bf16 %v649, %v646
      %v880 = vpack.c.bf16 %v657, %v654
      %v881 = vpack.c.bf16 %v665, %v662
      %v882 = vpack.c.bf16 %v673, %v670
      %v883 = vpack.c.bf16 %v681, %v678
      %v884 = vpack.c.bf16 %v689, %v686
      %v885 = vpack.c.bf16 %v697, %v694
      %v886 = vpack.c.bf16 %v705, %v702
      %v887 = vpack.c.bf16 %v713, %v710
      %v888 = vpack.c.bf16 %v721, %v718
      %v889 = vpack.c.bf16 %v729, %v726
      %v890 = vpack.c.bf16 %v737, %v734
      %v891 = vpack.c.bf16 %v745, %v742
      %v892 = vpack.c.bf16 %v753, %v750
      %v893 = vpack.c.bf16 %v761, %v758
      %v894 = vpack.c.bf16 %v769, %v766
      %v895 = vpack.c.bf16 %v777, %v774
      %v896 = vpack.c.bf16 %v785, %v782
      %v897 = vpack.c.bf16 %v793, %v790
      %v898 = vpack.c.bf16 %v801, %v798
      %v899 = vpack.c.bf16 %v809, %v806
      %v900 = vpack.c.bf16 %v817, %v814
      %v901 = vpack.c.bf16 %v825, %v822
      %v902 = vpack.c.bf16 %v833, %v830
      %v903 = vpack.c.bf16 %v841, %v838
      %v904 = vpack.c.bf16 %v849, %v846
      %v905 = vpack.c.bf16 %v857, %v854
      %v906 = vpack.c.bf16 %v865, %v862
      %v907 = vpack.c.bf16 %v873, %v870
      %v940 = vunpack.c.l.b16 %v876
      %v941 = vunpack.c.h.b16 %v876
      %v942 = vunpack.c.l.b16 %v877
      %v943 = vunpack.c.h.b16 %v877
      %v944 = vunpack.c.l.b16 %v878
      %v945 = vunpack.c.h.b16 %v878
      %v946 = vunpack.c.l.b16 %v879
      %v947 = vunpack.c.h.b16 %v879
      %v948 = vunpack.c.l.b16 %v880
      %v949 = vunpack.c.h.b16 %v880
      %v950 = vunpack.c.l.b16 %v881
      %v951 = vunpack.c.h.b16 %v881
      %v952 = vunpack.c.l.b16 %v882
      %v953 = vunpack.c.h.b16 %v882
      %v954 = vunpack.c.l.b16 %v883
      %v955 = vunpack.c.h.b16 %v883
      %v956 = vunpack.c.l.b16 %v884
      %v957 = vunpack.c.h.b16 %v884
      %v958 = vunpack.c.l.b16 %v885
      %v959 = vunpack.c.h.b16 %v885
      %v960 = vunpack.c.l.b16 %v886
      %v961 = vunpack.c.h.b16 %v886
      %v962 = vunpack.c.l.b16 %v887
      %v963 = vunpack.c.h.b16 %v887
      %v964 = vunpack.c.l.b16 %v888
      %v965 = vunpack.c.h.b16 %v888
      %v966 = vunpack.c.l.b16 %v889
      %v967 = vunpack.c.h.b16 %v889
      %v968 = vunpack.c.l.b16 %v890
      %v969 = vunpack.c.h.b16 %v890
      %v970 = vunpack.c.l.b16 %v891
      %v971 = vunpack.c.h.b16 %v891
      %v972 = vunpack.c.l.b16 %v892
      %v973 = vunpack.c.h.b16 %v892
      %v974 = vunpack.c.l.b16 %v893
      %v975 = vunpack.c.h.b16 %v893
      %v976 = vunpack.c.l.b16 %v894
      %v977 = vunpack.c.h.b16 %v894
      %v978 = vunpack.c.l.b16 %v895
      %v979 = vunpack.c.h.b16 %v895
      %v980 = vunpack.c.l.b16 %v896
      %v981 = vunpack.c.h.b16 %v896
      %v982 = vunpack.c.l.b16 %v897
      %v983 = vunpack.c.h.b16 %v897
      %v984 = vunpack.c.l.b16 %v898
      %v985 = vunpack.c.h.b16 %v898
      %v986 = vunpack.c.l.b16 %v899
      %v987 = vunpack.c.h.b16 %v899
      %v988 = vunpack.c.l.b16 %v900
      %v989 = vunpack.c.h.b16 %v900
      %v990 = vunpack.c.l.b16 %v901
      %v991 = vunpack.c.h.b16 %v901
      %v992 = vunpack.c.l.b16 %v902
      %v993 = vunpack.c.h.b16 %v902
      %v994 = vunpack.c.l.b16 %v903
      %v995 = vunpack.c.h.b16 %v903
      %v996 = vunpack.c.l.b16 %v904
      %v997 = vunpack.c.h.b16 %v904
      %v998 = vunpack.c.l.b16 %v905
      %v999 = vunpack.c.h.b16 %v905
      %v1000 = vunpack.c.l.b16 %v906
      %v1001 = vunpack.c.h.b16 %v906
      %v1002 = vunpack.c.l.b16 %v907
      %v1003 = vunpack.c.h.b16 %v907
      %v1004 = vpack.c.b16 %v940, %v940
      %v1005 = vpack.c.b16 %v941, %v941
      %v1006 = vpack.c.b16 %v942, %v942
      %v1007 = vpack.c.b16 %v943, %v943
      %v1008 = vpack.c.b16 %v944, %v944
      %v1009 = vpack.c.b16 %v945, %v945
      %v1010 = vpack.c.b16 %v946, %v946
      %v1011 = vpack.c.b16 %v947, %v947
      %v1012 = vpack.c.b16 %v948, %v948
      %v1013 = vpack.c.b16 %v949, %v949
      %v1014 = vpack.c.b16 %v950, %v950
      %v1015 = vpack.c.b16 %v951, %v951
      %v1016 = vpack.c.b16 %v952, %v952
      %v1017 = vpack.c.b16 %v953, %v953
      %v1018 = vpack.c.b16 %v954, %v954
      %v1019 = vpack.c.b16 %v955, %v955
      %v1020 = vpack.c.b16 %v956, %v956
      %v1021 = vpack.c.b16 %v957, %v957
      %v1022 = vpack.c.b16 %v958, %v958
      %v1023 = vpack.c.b16 %v959, %v959
      %v1024 = vpack.c.b16 %v960, %v960
      %v1025 = vpack.c.b16 %v961, %v961
      %v1026 = vpack.c.b16 %v962, %v962
      %v1027 = vpack.c.b16 %v963, %v963
      %v1028 = vpack.c.b16 %v964, %v964
      %v1029 = vpack.c.b16 %v965, %v965
      %v1030 = vpack.c.b16 %v966, %v966
      %v1031 = vpack.c.b16 %v967, %v967
      %v1032 = vpack.c.b16 %v968, %v968
      %v1033 = vpack.c.b16 %v969, %v969
      %v1034 = vpack.c.b16 %v970, %v970
      %v1035 = vpack.c.b16 %v971, %v971
      %v1036 = vpack.c.b16 %v972, %v972
      %v1037 = vpack.c.b16 %v973, %v973
      %v1038 = vpack.c.b16 %v974, %v974
      %v1039 = vpack.c.b16 %v975, %v975
      %v1040 = vpack.c.b16 %v976, %v976
      %v1041 = vpack.c.b16 %v977, %v977
      %v1042 = vpack.c.b16 %v978, %v978
      %v1043 = vpack.c.b16 %v979, %v979
      %v1044 = vpack.c.b16 %v980, %v980
      %v1045 = vpack.c.b16 %v981, %v981
      %v1046 = vpack.c.b16 %v982, %v982
      %v1047 = vpack.c.b16 %v983, %v983
      %v1048 = vpack.c.b16 %v984, %v984
      %v1049 = vpack.c.b16 %v985, %v985
      %v1050 = vpack.c.b16 %v986, %v986
      %v1051 = vpack.c.b16 %v987, %v987
      %v1052 = vpack.c.b16 %v988, %v988
      %v1053 = vpack.c.b16 %v989, %v989
      %v1054 = vpack.c.b16 %v990, %v990
      %v1055 = vpack.c.b16 %v991, %v991
      %v1056 = vpack.c.b16 %v992, %v992
      %v1057 = vpack.c.b16 %v993, %v993
      %v1058 = vpack.c.b16 %v994, %v994
      %v1059 = vpack.c.b16 %v995, %v995
      %v1060 = vpack.c.b16 %v996, %v996
      %v1061 = vpack.c.b16 %v997, %v997
      %v1062 = vpack.c.b16 %v998, %v998
      %v1063 = vpack.c.b16 %v999, %v999
      %v1064 = vpack.c.b16 %v1000, %v1000
      %v1065 = vpack.c.b16 %v1001, %v1001
      %v1066 = vpack.c.b16 %v1002, %v1002
      %v1067 = vpack.c.b16 %v1003, %v1003
      %1132 = vst [vmem:[%s257] sm:$0xf] %v1004
      %1133 = vst [vmem:[%s257 + $0x4] sm:$0xf] %v1005
      %1134 = vst [vmem:[%s257 + $0x8] sm:$0xf] %v1006
      %1135 = vst [vmem:[%s257 + $0xc] sm:$0xf] %v1007
      %1136 = vst [vmem:[%s257 + $0x10] sm:$0xf] %v1008
      %1137 = vst [vmem:[%s257 + $0x14] sm:$0xf] %v1009
      %1138 = vst [vmem:[%s257 + $0x18] sm:$0xf] %v1010
      %1139 = vst [vmem:[%s257 + $0x1c] sm:$0xf] %v1011
      %1140 = vst [vmem:[%s257 + $0x20] sm:$0xf] %v1012
      %1141 = vst [vmem:[%s257 + $0x24] sm:$0xf] %v1013
      %1142 = vst [vmem:[%s257 + $0x28] sm:$0xf] %v1014
      %1143 = vst [vmem:[%s257 + $0x2c] sm:$0xf] %v1015
      %1144 = vst [vmem:[%s257 + $0x30] sm:$0xf] %v1016
      %1145 = vst [vmem:[%s257 + $0x34] sm:$0xf] %v1017
      %1146 = vst [vmem:[%s257 + $0x38] sm:$0xf] %v1018
      %1147 = vst [vmem:[%s257 + $0x3c] sm:$0xf] %v1019
      %1148 = vst [vmem:[%s257 + $0x40] sm:$0xf] %v1020
      %1149 = vst [vmem:[%s257 + $0x44] sm:$0xf] %v1021
      %1150 = vst [vmem:[%s257 + $0x48] sm:$0xf] %v1022
      %1151 = vst [vmem:[%s257 + $0x4c] sm:$0xf] %v1023
      %1152 = vst [vmem:[%s257 + $0x50] sm:$0xf] %v1024
      %1153 = vst [vmem:[%s257 + $0x54] sm:$0xf] %v1025
      %1154 = vst [vmem:[%s257 + $0x58] sm:$0xf] %v1026
      %1155 = vst [vmem:[%s257 + $0x5c] sm:$0xf] %v1027
      %1156 = vst [vmem:[%s257 + $0x60] sm:$0xf] %v1028
      %1157 = vst [vmem:[%s257 + $0x64] sm:$0xf] %v1029
      %1158 = vst [vmem:[%s257 + $0x68] sm:$0xf] %v1030
      %1159 = vst [vmem:[%s257 + $0x6c] sm:$0xf] %v1031
      %1160 = vst [vmem:[%s257 + $0x70] sm:$0xf] %v1032
      %1161 = vst [vmem:[%s257 + $0x74] sm:$0xf] %v1033
      %1162 = vst [vmem:[%s257 + $0x78] sm:$0xf] %v1034
      %1163 = vst [vmem:[%s257 + $0x7c] sm:$0xf] %v1035
      %1164 = vst [vmem:[%s257 + $0x80] sm:$0xf] %v1036
      %1165 = vst [vmem:[%s257 + $0x84] sm:$0xf] %v1037
      %1166 = vst [vmem:[%s257 + $0x88] sm:$0xf] %v1038
      %1167 = vst [vmem:[%s257 + $0x8c] sm:$0xf] %v1039
      %1168 = vst [vmem:[%s257 + $0x90] sm:$0xf] %v1040
      %1169 = vst [vmem:[%s257 + $0x94] sm:$0xf] %v1041
      %1170 = vst [vmem:[%s257 + $0x98] sm:$0xf] %v1042
      %1171 = vst [vmem:[%s257 + $0x9c] sm:$0xf] %v1043
      %1172 = vst [vmem:[%s257 + $0xa0] sm:$0xf] %v1044
      %1173 = vst [vmem:[%s257 + $0xa4] sm:$0xf] %v1045
      %1174 = vst [vmem:[%s257 + $0xa8] sm:$0xf] %v1046
      %1175 = vst [vmem:[%s257 + $0xac] sm:$0xf] %v1047
      %1176 = vst [vmem:[%s257 + $0xb0] sm:$0xf] %v1048
      %1177 = vst [vmem:[%s257 + $0xb4] sm:$0xf] %v1049
      %1178 = vst [vmem:[%s257 + $0xb8] sm:$0xf] %v1050
      %1179 = vst [vmem:[%s257 + $0xbc] sm:$0xf] %v1051
      %1180 = vst [vmem:[%s257 + $0xc0] sm:$0xf] %v1052
      %1181 = vst [vmem:[%s257 + $0xc4] sm:$0xf] %v1053
      %1182 = vst [vmem:[%s257 + $0xc8] sm:$0xf] %v1054
      %1183 = vst [vmem:[%s257 + $0xcc] sm:$0xf] %v1055
      %1184 = vst [vmem:[%s257 + $0xd0] sm:$0xf] %v1056
      %1185 = vst [vmem:[%s257 + $0xd4] sm:$0xf] %v1057
      %1186 = vst [vmem:[%s257 + $0xd8] sm:$0xf] %v1058
      %1187 = vst [vmem:[%s257 + $0xdc] sm:$0xf] %v1059
      %1188 = vst [vmem:[%s257 + $0xe0] sm:$0xf] %v1060
      %1189 = vst [vmem:[%s257 + $0xe4] sm:$0xf] %v1061
      %1190 = vst [vmem:[%s257 + $0xe8] sm:$0xf] %v1062
      %1191 = vst [vmem:[%s257 + $0xec] sm:$0xf] %v1063
      %1192 = vst [vmem:[%s257 + $0xf0] sm:$0xf] %v1064
      %1193 = vst [vmem:[%s257 + $0xf4] sm:$0xf] %v1065
      %1194 = vst [vmem:[%s257 + $0xf8] sm:$0xf] %v1066
      %1195 = vst [vmem:[%s257 + $0xfc] sm:$0xf] %v1067
      %s1196 = smul.u32 64, %s20
      %p1197 = scmp.lt.s32.totalorder %s1196, 255
      %s1198 = scalar_select %p1197, %s1196, 255
      %p1199 = scmp.lt.s32.totalorder %s19, 0
      %s1200 = scalar_select %p1199, %s19, 0
      %s1201 = sadd.s32 %s1200, %s1198
      %s1202 = smul.addr %s1201, 4
      %s1203 = scalar_lea.vmem %s3, %s1202
      // Predicated region
      $region33: #{discriminator_forward.6} parent=31 // pred_check
        %p1204 = pneg %p135
      $region34: #{discriminator_forward.6} parent=31 // pred_check_branch
        %1206 = sbr.rel (%p1204) target = $region36
      $region35: #{discriminator_forward.6} parent=31 // pred_region
        %s1207 = smul.u32 64, %s20
      $region36: #{discriminator_forward.6} parent=31 // pred_fallthru
        _
    $region32: #{discriminator_forward.6} parent=5 // pred_fallthru
      _
    %p1208 = scmp.le.s32.totalorder 2, %s9
    // Predicated region
    $region37: #{discriminator_forward.6} parent=5 // pred_check
      %p1209 = pneg %p1208
    $region38: #{discriminator_forward.6} parent=5 // pred_check_branch
      %1211 = sbr.rel (%p1209) target = $region40
    $region39: #{discriminator_forward.6} parent=5 // pred_region
      %s1212 = ssub.s32 %s9, 2
      // Predicated region
      $region41: #{discriminator_forward.6} parent=39 // pred_check
        %p1213 = pneg %p141
      $region42: #{discriminator_forward.6} parent=39 // pred_check_branch
        %1215 = sbr.rel (%p1213) target = $region44
      $region43: #{discriminator_forward.6} parent=39 // pred_region
        %s1216 = smul.u32 64, %s23
        %p1217 = scmp.lt.s32.totalorder %s1216, 255
        %s1218 = scalar_select %p1217, %s1216, 255
        %p1219 = scmp.lt.s32.totalorder %s22, 0
        %s1220 = scalar_select %p1219, %s22, 0
        %s1221 = sadd.s32 %s1220, %s1218
        %s1222 = smul.addr %s1221, 4
        %s1223 = scalar_lea.vmem %s3, %s1222
      $region44: #{discriminator_forward.6} parent=39 // pred_fallthru
        _
    $region40: #{discriminator_forward.6} parent=5 // pred_fallthru
      _
  $region6: #{discriminator_forward.6} parent=0 // loop_footer
    %s13 = sadd.s32 1, %s9
  $region7: #{discriminator_forward.6} parent=0 // loop_footer_branch
    %8 = sbr.rel target = $region3
  $region8: #{discriminator_forward.6} parent=0 // loop_exit
    _

// kernel: discriminator_forward.7
$region0: #{discriminator_forward.7}
  #allocation0 [shape = 'u32[]', space=smem, size = 0x4, offset = 0x4, fixed_abs, tag = 'smem constant byte address 0x4 - core index']
  #allocation1 [shape = 'u32[144,128]{1,0:T(1,128)}', space=vmem, size = 0x12000, scoped, tag = 'internal scratch']
  %s0 = inlined_call_operand.vmem [shape: bf16[512,128], index: 0, kind: input, shape index: {}]
  %s1 = inlined_call_operand.vmem [shape: bf16[128,128], index: 1, kind: input, shape index: {}]
  %s2 = inlined_call_operand.vmem [shape: bf16[512,128], index: 2, kind: output, shape index: {}]
  %s3 = sld [smem:[#allocation0]]
  $region18: #{discriminator_forward.7} parent=0
    _
  %s5 = ssub.s32 1, %s3
  %s6 = scalar_select 0, %s5, %s3
  // Predicated region
  $region2: #{discriminator_forward.7} parent=0 // pred_check
    _
  $region3: #{discriminator_forward.7} parent=0 // pred_check_branch
    %8 = sbr.rel (0) target = $region5
  $region4: #{discriminator_forward.7} parent=0 // pred_region
    _
  $region5: #{discriminator_forward.7} parent=0 // pred_fallthru
    _
  // Predicated region
  $region6: #{discriminator_forward.7} parent=0 // pred_check
    _
  $region7: #{discriminator_forward.7} parent=0 // pred_check_branch
    %10 = sbr.rel (0) target = $region9
  $region8: #{discriminator_forward.7} parent=0 // pred_region
    _
  $region9: #{discriminator_forward.7} parent=0 // pred_fallthru
    _
  %v12 = vld [vmem:[%s0] sm:$0xf]
  %v13 = vld [vmem:[%s0 + $0x4] sm:$0xf]
  %v14 = vld [vmem:[%s0 + $0x8] sm:$0xf]
  %v15 = vld [vmem:[%s0 + $0xc] sm:$0xf]
  %v16 = vld [vmem:[%s0 + $0x10] sm:$0xf]
  %v17 = vld [vmem:[%s0 + $0x14] sm:$0xf]
  %v18 = vld [vmem:[%s0 + $0x18] sm:$0xf]
  %v19 = vld [vmem:[%s0 + $0x1c] sm:$0xf]
  %v20 = vld [vmem:[%s0 + $0x20] sm:$0xf]
  %v21 = vld [vmem:[%s0 + $0x24] sm:$0xf]
  %v22 = vld [vmem:[%s0 + $0x28] sm:$0xf]
  %v23 = vld [vmem:[%s0 + $0x2c] sm:$0xf]
  %v24 = vld [vmem:[%s0 + $0x30] sm:$0xf]
  %v25 = vld [vmem:[%s0 + $0x34] sm:$0xf]
  %v26 = vld [vmem:[%s0 + $0x38] sm:$0xf]
  %v27 = vld [vmem:[%s0 + $0x3c] sm:$0xf]
  %v28 = vld [vmem:[%s0 + $0x40] sm:$0xf]
  %v29 = vld [vmem:[%s0 + $0x44] sm:$0xf]
  %v30 = vld [vmem:[%s0 + $0x48] sm:$0xf]
  %v31 = vld [vmem:[%s0 + $0x4c] sm:$0xf]
  %v32 = vld [vmem:[%s0 + $0x50] sm:$0xf]
  %v33 = vld [vmem:[%s0 + $0x54] sm:$0xf]
  %v34 = vld [vmem:[%s0 + $0x58] sm:$0xf]
  %v35 = vld [vmem:[%s0 + $0x5c] sm:$0xf]
  %v36 = vld [vmem:[%s0 + $0x60] sm:$0xf]
  %v37 = vld [vmem:[%s0 + $0x64] sm:$0xf]
  %v38 = vld [vmem:[%s0 + $0x68] sm:$0xf]
  %v39 = vld [vmem:[%s0 + $0x6c] sm:$0xf]
  %v40 = vld [vmem:[%s0 + $0x70] sm:$0xf]
  %v41 = vld [vmem:[%s0 + $0x74] sm:$0xf]
  %v42 = vld [vmem:[%s0 + $0x78] sm:$0xf]
  %v43 = vld [vmem:[%s0 + $0x7c] sm:$0xf]
  %v44 = vld [vmem:[%s0 + $0x80] sm:$0xf]
  %v45 = vld [vmem:[%s0 + $0x84] sm:$0xf]
  %v46 = vld [vmem:[%s0 + $0x88] sm:$0xf]
  %v47 = vld [vmem:[%s0 + $0x8c] sm:$0xf]
  %v48 = vld [vmem:[%s0 + $0x90] sm:$0xf]
  %v49 = vld [vmem:[%s0 + $0x94] sm:$0xf]
  %v50 = vld [vmem:[%s0 + $0x98] sm:$0xf]
  %v51 = vld [vmem:[%s0 + $0x9c] sm:$0xf]
  %v52 = vld [vmem:[%s0 + $0xa0] sm:$0xf]
  %v53 = vld [vmem:[%s0 + $0xa4] sm:$0xf]
  %v54 = vld [vmem:[%s0 + $0xa8] sm:$0xf]
  %v55 = vld [vmem:[%s0 + $0xac] sm:$0xf]
  %v56 = vld [vmem:[%s0 + $0xb0] sm:$0xf]
  %v57 = vld [vmem:[%s0 + $0xb4] sm:$0xf]
  %v58 = vld [vmem:[%s0 + $0xb8] sm:$0xf]
  %v59 = vld [vmem:[%s0 + $0xbc] sm:$0xf]
  %v60 = vld [vmem:[%s0 + $0xc0] sm:$0xf]
  %v61 = vld [vmem:[%s0 + $0xc4] sm:$0xf]
  %v62 = vld [vmem:[%s0 + $0xc8] sm:$0xf]
  %v63 = vld [vmem:[%s0 + $0xcc] sm:$0xf]
  %v64 = vld [vmem:[%s0 + $0xd0] sm:$0xf]
  %v65 = vld [vmem:[%s0 + $0xd4] sm:$0xf]
  %v66 = vld [vmem:[%s0 + $0xd8] sm:$0xf]
  %v67 = vld [vmem:[%s0 + $0xdc] sm:$0xf]
  %v68 = vld [vmem:[%s0 + $0xe0] sm:$0xf]
  %v69 = vld [vmem:[%s0 + $0xe4] sm:$0xf]
  %v70 = vld [vmem:[%s0 + $0xe8] sm:$0xf]
  %v71 = vld [vmem:[%s0 + $0xec] sm:$0xf]
  %v72 = vld [vmem:[%s0 + $0xf0] sm:$0xf]
  %v73 = vld [vmem:[%s0 + $0xf4] sm:$0xf]
  %v74 = vld [vmem:[%s0 + $0xf8] sm:$0xf]
  %v75 = vld [vmem:[%s0 + $0xfc] sm:$0xf]
  %v76 = vld [vmem:[%s1] sm:$0xf]
  %v77 = vld [vmem:[%s1 + $0x4] sm:$0xf]
  %v78 = vld [vmem:[%s1 + $0x8] sm:$0xf]
  %v79 = vld [vmem:[%s1 + $0xc] sm:$0xf]
  %v80 = vld [vmem:[%s1 + $0x10] sm:$0xf]
  %v81 = vld [vmem:[%s1 + $0x14] sm:$0xf]
  %v82 = vld [vmem:[%s1 + $0x18] sm:$0xf]
  %v83 = vld [vmem:[%s1 + $0x1c] sm:$0xf]
  %v84 = vld [vmem:[%s1 + $0x20] sm:$0xf]
  %v85 = vld [vmem:[%s1 + $0x24] sm:$0xf]
  %v86 = vld [vmem:[%s1 + $0x28] sm:$0xf]
  %v87 = vld [vmem:[%s1 + $0x2c] sm:$0xf]
  %v88 = vld [vmem:[%s1 + $0x30] sm:$0xf]
  %v89 = vld [vmem:[%s1 + $0x34] sm:$0xf]
  %v90 = vld [vmem:[%s1 + $0x38] sm:$0xf]
  %v91 = vld [vmem:[%s1 + $0x3c] sm:$0xf]
  %v156 = vunpack.c.l.b16 %v12
  %v157 = vunpack.c.l.b16 %v13
  %v158 = vunpack.c.l.b16 %v14
  %v159 = vunpack.c.l.b16 %v15
  %v160 = vunpack.c.l.b16 %v16
  %v161 = vunpack.c.l.b16 %v17
  %v162 = vunpack.c.l.b16 %v18
  %v163 = vunpack.c.l.b16 %v19
  %v164 = vunpack.c.l.b16 %v20
  %v165 = vunpack.c.l.b16 %v21
  %v166 = vunpack.c.l.b16 %v22
  %v167 = vunpack.c.l.b16 %v23
  %v168 = vunpack.c.l.b16 %v24
  %v169 = vunpack.c.l.b16 %v25
  %v170 = vunpack.c.l.b16 %v26
  %v171 = vunpack.c.l.b16 %v27
  %v172 = vunpack.c.l.b16 %v28
  %v173 = vunpack.c.l.b16 %v29
  %v174 = vunpack.c.l.b16 %v30
  %v175 = vunpack.c.l.b16 %v31
  %v176 = vunpack.c.l.b16 %v32
  %v177 = vunpack.c.l.b16 %v33
  %v178 = vunpack.c.l.b16 %v34
  %v179 = vunpack.c.l.b16 %v35
  %v180 = vunpack.c.l.b16 %v36
  %v181 = vunpack.c.l.b16 %v37
  %v182 = vunpack.c.l.b16 %v38
  %v183 = vunpack.c.l.b16 %v39
  %v184 = vunpack.c.l.b16 %v40
  %v185 = vunpack.c.l.b16 %v41
  %v186 = vunpack.c.l.b16 %v42
  %v187 = vunpack.c.l.b16 %v43
  %v188 = vunpack.c.l.b16 %v44
  %v189 = vunpack.c.l.b16 %v45
  %v190 = vunpack.c.l.b16 %v46
  %v191 = vunpack.c.l.b16 %v47
  %v192 = vunpack.c.l.b16 %v48
  %v193 = vunpack.c.l.b16 %v49
  %v194 = vunpack.c.l.b16 %v50
  %v195 = vunpack.c.l.b16 %v51
  %v196 = vunpack.c.l.b16 %v52
  %v197 = vunpack.c.l.b16 %v53
  %v198 = vunpack.c.l.b16 %v54
  %v199 = vunpack.c.l.b16 %v55
  %v200 = vunpack.c.l.b16 %v56
  %v201 = vunpack.c.l.b16 %v57
  %v202 = vunpack.c.l.b16 %v58
  %v203 = vunpack.c.l.b16 %v59
  %v204 = vunpack.c.l.b16 %v60
  %v205 = vunpack.c.l.b16 %v61
  %v206 = vunpack.c.l.b16 %v62
  %v207 = vunpack.c.l.b16 %v63
  %v208 = vunpack.c.l.b16 %v64
  %v209 = vunpack.c.l.b16 %v65
  %v210 = vunpack.c.l.b16 %v66
  %v211 = vunpack.c.l.b16 %v67
  %v212 = vunpack.c.l.b16 %v68
  %v213 = vunpack.c.l.b16 %v69
  %v214 = vunpack.c.l.b16 %v70
  %v215 = vunpack.c.l.b16 %v71
  %v216 = vunpack.c.l.b16 %v72
  %v217 = vunpack.c.l.b16 %v73
  %v218 = vunpack.c.l.b16 %v74
  %v219 = vunpack.c.l.b16 %v75
  %v220 = vpack.c.b16 %v157, %v156
  %v221 = vpack.c.b16 %v159, %v158
  %v222 = vpack.c.b16 %v161, %v160
  %v223 = vpack.c.b16 %v163, %v162
  %v224 = vpack.c.b16 %v165, %v164
  %v225 = vpack.c.b16 %v167, %v166
  %v226 = vpack.c.b16 %v169, %v168
  %v227 = vpack.c.b16 %v171, %v170
  %v228 = vpack.c.b16 %v173, %v172
  %v229 = vpack.c.b16 %v175, %v174
  %v230 = vpack.c.b16 %v177, %v176
  %v231 = vpack.c.b16 %v179, %v178
  %v232 = vpack.c.b16 %v181, %v180
  %v233 = vpack.c.b16 %v183, %v182
  %v234 = vpack.c.b16 %v185, %v184
  %v235 = vpack.c.b16 %v187, %v186
  %v236 = vpack.c.b16 %v189, %v188
  %v237 = vpack.c.b16 %v191, %v190
  %v238 = vpack.c.b16 %v193, %v192
  %v239 = vpack.c.b16 %v195, %v194
  %v240 = vpack.c.b16 %v197, %v196
  %v241 = vpack.c.b16 %v199, %v198
  %v242 = vpack.c.b16 %v201, %v200
  %v243 = vpack.c.b16 %v203, %v202
  %v244 = vpack.c.b16 %v205, %v204
  %v245 = vpack.c.b16 %v207, %v206
  %v246 = vpack.c.b16 %v209, %v208
  %v247 = vpack.c.b16 %v211, %v210
  %v248 = vpack.c.b16 %v213, %v212
  %v249 = vpack.c.b16 %v215, %v214
  %v250 = vpack.c.b16 %v217, %v216
  %v251 = vpack.c.b16 %v219, %v218
  %v300 = vunpack.c.l.b16 %v76
  %v301 = vunpack.c.l.b16 %v77
  %v302 = vunpack.c.l.b16 %v78
  %v303 = vunpack.c.l.b16 %v79
  %v304 = vunpack.c.l.b16 %v80
  %v305 = vunpack.c.l.b16 %v81
  %v306 = vunpack.c.l.b16 %v82
  %v307 = vunpack.c.l.b16 %v83
  %v308 = vunpack.c.l.b16 %v84
  %v309 = vunpack.c.l.b16 %v85
  %v310 = vunpack.c.l.b16 %v86
  %v311 = vunpack.c.l.b16 %v87
  %v312 = vunpack.c.l.b16 %v88
  %v313 = vunpack.c.l.b16 %v89
  %v314 = vunpack.c.l.b16 %v90
  %v315 = vunpack.c.l.b16 %v91
  %v316 = vpack.c.b16 %v301, %v300
  %v317 = vpack.c.b16 %v303, %v302
  %v318 = vpack.c.b16 %v305, %v304
  %v319 = vpack.c.b16 %v307, %v306
  %v320 = vpack.c.b16 %v309, %v308
  %v321 = vpack.c.b16 %v311, %v310
  %v322 = vpack.c.b16 %v313, %v312
  %v323 = vpack.c.b16 %v315, %v314
  %332 = vmatprep.subr.bf16.mxu0 0
  %333 = vmatpush1.bf16.msra.mxu0 %v316
  %334 = vmatprep.subr.bf16.mxu0 0
  %335 = vmatpush1.bf16.msra.mxu0 %v317
  %336 = vmatprep.subr.bf16.mxu0 0
  %337 = vmatpush1.bf16.msra.mxu0 %v318
  %338 = vmatprep.subr.bf16.mxu0 0
  %339 = vmatpush1.bf16.msra.mxu0 %v319
  %340 = vmatprep.subr.bf16.mxu0 0
  %341 = vmatpush1.bf16.msra.mxu0 %v320
  %342 = vmatprep.subr.bf16.mxu0 0
  %343 = vmatpush1.bf16.msra.mxu0 %v321
  %344 = vmatprep.subr.bf16.mxu0 0
  %345 = vmatpush1.bf16.msra.mxu0 %v322
  %346 = vmatprep.subr.bf16.mxu0 0
  %347 = vmatpush1.bf16.msra.mxu0 %v323
  %348 = vmatprep.subr.bf16.mxu0 0
  %349 = vmatpush1.bf16.msra.mxu0 0
  %350 = vmatprep.subr.bf16.mxu0 0
  %351 = vmatpush1.bf16.msra.mxu0 0
  %352 = vmatprep.subr.bf16.mxu0 0
  %353 = vmatpush1.bf16.msra.mxu0 0
  %354 = vmatprep.subr.bf16.mxu0 0
  %355 = vmatpush1.bf16.msra.mxu0 0
  %356 = vmatprep.subr.bf16.mxu0 0
  %357 = vmatpush1.bf16.msra.mxu0 0
  %358 = vmatprep.subr.bf16.mxu0 0
  %359 = vmatpush1.bf16.msra.mxu0 0
  %360 = vmatprep.subr.bf16.mxu0 0
  %361 = vmatpush1.bf16.msra.mxu0 0
  %362 = vmatprep.subr.bf16.mxu0 0
  %363 = vmatpush1.bf16.msra.mxu0 0
  %364 = vmatprep.mubr.bf16.mxu0 0
  %365 = vmatmul.mubr.bf16.gmra.mrb[0].mxu0 %v220
  %v366 = vpop.f32.mrb[0].mxu0
  %v367 = vadd.f32 0.0, %v366
  %v368 = vpop.f32.mrb[0].mxu0
  %v369 = vpop.f32.mrb[0].mxu0
  %v370 = vadd.f32 0.0, %v369
  %v371 = vpop.f32.mrb[0].mxu0
  %372 = vmatprep.mubr.bf16.mxu0 0
  %373 = vmatmul.mubr.bf16.gmra.mrb[0].mxu0 %v221
  %v374 = vpop.f32.mrb[0].mxu0
  %v375 = vadd.f32 0.0, %v374
  %v376 = vpop.f32.mrb[0].mxu0
  %v377 = vpop.f32.mrb[0].mxu0
  %v378 = vadd.f32 0.0, %v377
  %v379 = vpop.f32.mrb[0].mxu0
  %380 = vmatprep.mubr.bf16.mxu0 0
  %381 = vmatmul.mubr.bf16.gmra.mrb[0].mxu0 %v222
  %v382 = vpop.f32.mrb[0].mxu0
  %v383 = vadd.f32 0.0, %v382
  %v384 = vpop.f32.mrb[0].mxu0
  %v385 = vpop.f32.mrb[0].mxu0
  %v386 = vadd.f32 0.0, %v385
  %v387 = vpop.f32.mrb[0].mxu0
  %388 = vmatprep.mubr.bf16.mxu0 0
  %389 = vmatmul.mubr.bf16.gmra.mrb[0].mxu0 %v223
  %v390 = vpop.f32.mrb[0].mxu0
  %v391 = vadd.f32 0.0, %v390
  %v392 = vpop.f32.mrb[0].mxu0
  %v393 = vpop.f32.mrb[0].mxu0
  %v394 = vadd.f32 0.0, %v393
  %v395 = vpop.f32.mrb[0].mxu0
  %396 = vmatprep.mubr.bf16.mxu0 0
  %397 = vmatmul.mubr.bf16.gmra.mrb[0].mxu0 %v224
  %v398 = vpop.f32.mrb[0].mxu0
  %v399 = vadd.f32 0.0, %v398
  %v400 = vpop.f32.mrb[0].mxu0
  %v401 = vpop.f32.mrb[0].mxu0
  %v402 = vadd.f32 0.0, %v401
  %v403 = vpop.f32.mrb[0].mxu0
  %404 = vmatprep.mubr.bf16.mxu0 0
  %405 = vmatmul.mubr.bf16.gmra.mrb[0].mxu0 %v225
  %v406 = vpop.f32.mrb[0].mxu0
  %v407 = vadd.f32 0.0, %v406
  %v408 = vpop.f32.mrb[0].mxu0
  %v409 = vpop.f32.mrb[0].mxu0
  %v410 = vadd.f32 0.0, %v409
  %v411 = vpop.f32.mrb[0].mxu0
  %412 = vmatprep.mubr.bf16.mxu0 0
  %413 = vmatmul.mubr.bf16.gmra.mrb[0].mxu0 %v226
  %v414 = vpop.f32.mrb[0].mxu0
  %v415 = vadd.f32 0.0, %v414
  %v416 = vpop.f32.mrb[0].mxu0
  %v417 = vpop.f32.mrb[0].mxu0
  %v418 = vadd.f32 0.0, %v417
  %v419 = vpop.f32.mrb[0].mxu0
  %420 = vmatprep.mubr.bf16.mxu0 0
  %421 = vmatmul.mubr.bf16.gmra.mrb[0].mxu0 %v227
  %v422 = vpop.f32.mrb[0].mxu0
  %v423 = vadd.f32 0.0, %v422
  %v424 = vpop.f32.mrb[0].mxu0
  %v425 = vpop.f32.mrb[0].mxu0
  %v426 = vadd.f32 0.0, %v425
  %v427 = vpop.f32.mrb[0].mxu0
  %428 = vmatprep.mubr.bf16.mxu0 0
  %429 = vmatmul.mubr.bf16.gmra.mrb[0].mxu0 %v228
  %v430 = vpop.f32.mrb[0].mxu0
  %v431 = vadd.f32 0.0, %v430
  %v432 = vpop.f32.mrb[0].mxu0
  %v433 = vpop.f32.mrb[0].mxu0
  %v434 = vadd.f32 0.0, %v433
  %v435 = vpop.f32.mrb[0].mxu0
  %436 = vmatprep.mubr.bf16.mxu0 0
  %437 = vmatmul.mubr.bf16.gmra.mrb[0].mxu0 %v229
  %v438 = vpop.f32.mrb[0].mxu0
  %v439 = vadd.f32 0.0, %v438
  %v440 = vpop.f32.mrb[0].mxu0
  %v441 = vpop.f32.mrb[0].mxu0
  %v442 = vadd.f32 0.0, %v441
  %v443 = vpop.f32.mrb[0].mxu0
  %444 = vmatprep.mubr.bf16.mxu0 0
  %445 = vmatmul.mubr.bf16.gmra.mrb[0].mxu0 %v230
  %v446 = vpop.f32.mrb[0].mxu0
  %v447 = vadd.f32 0.0, %v446
  %v448 = vpop.f32.mrb[0].mxu0
  %v449 = vpop.f32.mrb[0].mxu0
  %v450 = vadd.f32 0.0, %v449
  %v451 = vpop.f32.mrb[0].mxu0
  %452 = vmatprep.mubr.bf16.mxu0 0
  %453 = vmatmul.mubr.bf16.gmra.mrb[0].mxu0 %v231
  %v454 = vpop.f32.mrb[0].mxu0
  %v455 = vadd.f32 0.0, %v454
  %v456 = vpop.f32.mrb[0].mxu0
  %v457 = vpop.f32.mrb[0].mxu0
  %v458 = vadd.f32 0.0, %v457
  %v459 = vpop.f32.mrb[0].mxu0
  %460 = vmatprep.mubr.bf16.mxu0 0
  %461 = vmatmul.mubr.bf16.gmra.mrb[0].mxu0 %v232
  %v462 = vpop.f32.mrb[0].mxu0
  %v463 = vadd.f32 0.0, %v462
  %v464 = vpop.f32.mrb[0].mxu0
  %v465 = vpop.f32.mrb[0].mxu0
  %v466 = vadd.f32 0.0, %v465
  %v467 = vpop.f32.mrb[0].mxu0
  %468 = vmatprep.mubr.bf16.mxu0 0
  %469 = vmatmul.mubr.bf16.gmra.mrb[0].mxu0 %v233
  %v470 = vpop.f32.mrb[0].mxu0
  %v471 = vadd.f32 0.0, %v470
  %v472 = vpop.f32.mrb[0].mxu0
  %v473 = vpop.f32.mrb[0].mxu0
  %v474 = vadd.f32 0.0, %v473
  %v475 = vpop.f32.mrb[0].mxu0
  %476 = vmatprep.mubr.bf16.mxu0 0
  %477 = vmatmul.mubr.bf16.gmra.mrb[0].mxu0 %v234
  %v478 = vpop.f32.mrb[0].mxu0
  %v479 = vadd.f32 0.0, %v478
  %v480 = vpop.f32.mrb[0].mxu0
  %v481 = vpop.f32.mrb[0].mxu0
  %v482 = vadd.f32 0.0, %v481
  %v483 = vpop.f32.mrb[0].mxu0
  %484 = vmatprep.mubr.bf16.mxu0 0
  %485 = vmatmul.mubr.bf16.gmra.mrb[0].mxu0 %v235
  %v486 = vpop.f32.mrb[0].mxu0
  %v487 = vadd.f32 0.0, %v486
  %v488 = vpop.f32.mrb[0].mxu0
  %v489 = vpop.f32.mrb[0].mxu0
  %v490 = vadd.f32 0.0, %v489
  %v491 = vpop.f32.mrb[0].mxu0
  %492 = vmatprep.mubr.bf16.mxu0 0
  %493 = vmatmul.mubr.bf16.gmra.mrb[0].mxu0 %v236
  %v494 = vpop.f32.mrb[0].mxu0
  %v495 = vadd.f32 0.0, %v494
  %v496 = vpop.f32.mrb[0].mxu0
  %v497 = vpop.f32.mrb[0].mxu0
  %v498 = vadd.f32 0.0, %v497
  %v499 = vpop.f32.mrb[0].mxu0
  %500 = vmatprep.mubr.bf16.mxu0 0
  %501 = vmatmul.mubr.bf16.gmra.mrb[0].mxu0 %v237
  %v502 = vpop.f32.mrb[0].mxu0
  %v503 = vadd.f32 0.0, %v502
  %v504 = vpop.f32.mrb[0].mxu0
  %v505 = vpop.f32.mrb[0].mxu0
  %v506 = vadd.f32 0.0, %v505
  %v507 = vpop.f32.mrb[0].mxu0
  %508 = vmatprep.mubr.bf16.mxu0 0
  %509 = vmatmul.mubr.bf16.gmra.mrb[0].mxu0 %v238
  %v510 = vpop.f32.mrb[0].mxu0
  %v511 = vadd.f32 0.0, %v510
  %v512 = vpop.f32.mrb[0].mxu0
  %v513 = vpop.f32.mrb[0].mxu0
  %v514 = vadd.f32 0.0, %v513
  %v515 = vpop.f32.mrb[0].mxu0
  %516 = vmatprep.mubr.bf16.mxu0 0
  %517 = vmatmul.mubr.bf16.gmra.mrb[0].mxu0 %v239
  %v518 = vpop.f32.mrb[0].mxu0
  %v519 = vadd.f32 0.0, %v518
  %v520 = vpop.f32.mrb[0].mxu0
  %v521 = vpop.f32.mrb[0].mxu0
  %v522 = vadd.f32 0.0, %v521
  %v523 = vpop.f32.mrb[0].mxu0
  %524 = vmatprep.mubr.bf16.mxu0 0
  %525 = vmatmul.mubr.bf16.gmra.mrb[0].mxu0 %v240
  %v526 = vpop.f32.mrb[0].mxu0
  %v527 = vadd.f32 0.0, %v526
  %v528 = vpop.f32.mrb[0].mxu0
  %v529 = vpop.f32.mrb[0].mxu0
  %v530 = vadd.f32 0.0, %v529
  %v531 = vpop.f32.mrb[0].mxu0
  %532 = vmatprep.mubr.bf16.mxu0 0
  %533 = vmatmul.mubr.bf16.gmra.mrb[0].mxu0 %v241
  %v534 = vpop.f32.mrb[0].mxu0
  %v535 = vadd.f32 0.0, %v534
  %v536 = vpop.f32.mrb[0].mxu0
  %v537 = vpop.f32.mrb[0].mxu0
  %v538 = vadd.f32 0.0, %v537
  %v539 = vpop.f32.mrb[0].mxu0
  %540 = vmatprep.mubr.bf16.mxu0 0
  %541 = vmatmul.mubr.bf16.gmra.mrb[0].mxu0 %v242
  %v542 = vpop.f32.mrb[0].mxu0
  %v543 = vadd.f32 0.0, %v542
  %v544 = vpop.f32.mrb[0].mxu0
  %v545 = vpop.f32.mrb[0].mxu0
  %v546 = vadd.f32 0.0, %v545
  %v547 = vpop.f32.mrb[0].mxu0
  %548 = vmatprep.mubr.bf16.mxu0 0
  %549 = vmatmul.mubr.bf16.gmra.mrb[0].mxu0 %v243
  %v550 = vpop.f32.mrb[0].mxu0
  %v551 = vadd.f32 0.0, %v550
  %v552 = vpop.f32.mrb[0].mxu0
  %v553 = vpop.f32.mrb[0].mxu0
  %v554 = vadd.f32 0.0, %v553
  %v555 = vpop.f32.mrb[0].mxu0
  %556 = vmatprep.mubr.bf16.mxu0 0
  %557 = vmatmul.mubr.bf16.gmra.mrb[0].mxu0 %v244
  %v558 = vpop.f32.mrb[0].mxu0
  %v559 = vadd.f32 0.0, %v558
  %v560 = vpop.f32.mrb[0].mxu0
  %v561 = vpop.f32.mrb[0].mxu0
  %v562 = vadd.f32 0.0, %v561
  %v563 = vpop.f32.mrb[0].mxu0
  %564 = vmatprep.mubr.bf16.mxu0 0
  %565 = vmatmul.mubr.bf16.gmra.mrb[0].mxu0 %v245
  %v566 = vpop.f32.mrb[0].mxu0
  %v567 = vadd.f32 0.0, %v566
  %v568 = vpop.f32.mrb[0].mxu0
  %v569 = vpop.f32.mrb[0].mxu0
  %v570 = vadd.f32 0.0, %v569
  %v571 = vpop.f32.mrb[0].mxu0
  %572 = vmatprep.mubr.bf16.mxu0 0
  %573 = vmatmul.mubr.bf16.gmra.mrb[0].mxu0 %v246
  %v574 = vpop.f32.mrb[0].mxu0
  %v575 = vadd.f32 0.0, %v574
  %v576 = vpop.f32.mrb[0].mxu0
  %v577 = vpop.f32.mrb[0].mxu0
  %v578 = vadd.f32 0.0, %v577
  %v579 = vpop.f32.mrb[0].mxu0
  %580 = vmatprep.mubr.bf16.mxu0 0
  %581 = vmatmul.mubr.bf16.gmra.mrb[0].mxu0 %v247
  %v582 = vpop.f32.mrb[0].mxu0
  %v583 = vadd.f32 0.0, %v582
  %v584 = vpop.f32.mrb[0].mxu0
  %v585 = vpop.f32.mrb[0].mxu0
  %v586 = vadd.f32 0.0, %v585
  %v587 = vpop.f32.mrb[0].mxu0
  %588 = vmatprep.mubr.bf16.mxu0 0
  %589 = vmatmul.mubr.bf16.gmra.mrb[0].mxu0 %v248
  %v590 = vpop.f32.mrb[0].mxu0
  %v591 = vadd.f32 0.0, %v590
  %v592 = vpop.f32.mrb[0].mxu0
  %v593 = vpop.f32.mrb[0].mxu0
  %v594 = vadd.f32 0.0, %v593
  %v595 = vpop.f32.mrb[0].mxu0
  %596 = vmatprep.mubr.bf16.mxu0 0
  %597 = vmatmul.mubr.bf16.gmra.mrb[0].mxu0 %v249
  %v598 = vpop.f32.mrb[0].mxu0
  %v599 = vadd.f32 0.0, %v598
  %v600 = vpop.f32.mrb[0].mxu0
  %v601 = vpop.f32.mrb[0].mxu0
  %v602 = vadd.f32 0.0, %v601
  %v603 = vpop.f32.mrb[0].mxu0
  %604 = vmatprep.mubr.bf16.mxu0 0
  %605 = vmatmul.mubr.bf16.gmra.mrb[0].mxu0 %v250
  %v606 = vpop.f32.mrb[0].mxu0
  %v607 = vadd.f32 0.0, %v606
  %v608 = vpop.f32.mrb[0].mxu0
  %v609 = vpop.f32.mrb[0].mxu0
  %v610 = vadd.f32 0.0, %v609
  %v611 = vpop.f32.mrb[0].mxu0
  %612 = vmatprep.mubr.bf16.mxu0 0
  %613 = vmatmul.mubr.bf16.gmra.mrb[0].mxu0 %v251
  %v614 = vpop.f32.mrb[0].mxu0
  %v615 = vadd.f32 0.0, %v614
  %v616 = vpop.f32.mrb[0].mxu0
  %v617 = vpop.f32.mrb[0].mxu0
  %v618 = vadd.f32 0.0, %v617
  %v619 = vpop.f32.mrb[0].mxu0
  %620 = vdwg.mxu0
  %vm621 = vcmp.ge.f32.partialorder %v367, 0.0
  %vm622 = vcmp.ge.f32.partialorder %v370, 0.0
  %vm623 = vcmp.ge.f32.partialorder %v375, 0.0
  %vm624 = vcmp.ge.f32.partialorder %v378, 0.0
  %vm625 = vcmp.ge.f32.partialorder %v383, 0.0
  %vm626 = vcmp.ge.f32.partialorder %v386, 0.0
  %vm627 = vcmp.ge.f32.partialorder %v391, 0.0
  %vm628 = vcmp.ge.f32.partialorder %v394, 0.0
  %vm629 = vcmp.ge.f32.partialorder %v399, 0.0
  %vm630 = vcmp.ge.f32.partialorder %v402, 0.0
  %vm631 = vcmp.ge.f32.partialorder %v407, 0.0
  %vm632 = vcmp.ge.f32.partialorder %v410, 0.0
  %vm633 = vcmp.ge.f32.partialorder %v415, 0.0
  %vm634 = vcmp.ge.f32.partialorder %v418, 0.0
  %vm635 = vcmp.ge.f32.partialorder %v423, 0.0
  %vm636 = vcmp.ge.f32.partialorder %v426, 0.0
  %vm637 = vcmp.ge.f32.partialorder %v431, 0.0
  %vm638 = vcmp.ge.f32.partialorder %v434, 0.0
  %vm639 = vcmp.ge.f32.partialorder %v439, 0.0
  %vm640 = vcmp.ge.f32.partialorder %v442, 0.0
  %vm641 = vcmp.ge.f32.partialorder %v447, 0.0
  %vm642 = vcmp.ge.f32.partialorder %v450, 0.0
  %vm643 = vcmp.ge.f32.partialorder %v455, 0.0
  %vm644 = vcmp.ge.f32.partialorder %v458, 0.0
  %vm645 = vcmp.ge.f32.partialorder %v463, 0.0
  %vm646 = vcmp.ge.f32.partialorder %v466, 0.0
  %vm647 = vcmp.ge.f32.partialorder %v471, 0.0
  %vm648 = vcmp.ge.f32.partialorder %v474, 0.0
  %vm649 = vcmp.ge.f32.partialorder %v479, 0.0
  %vm650 = vcmp.ge.f32.partialorder %v482, 0.0
  %vm651 = vcmp.ge.f32.partialorder %v487, 0.0
  %vm652 = vcmp.ge.f32.partialorder %v490, 0.0
  %vm653 = vcmp.ge.f32.partialorder %v495, 0.0
  %vm654 = vcmp.ge.f32.partialorder %v498, 0.0
  %vm655 = vcmp.ge.f32.partialorder %v503, 0.0
  %vm656 = vcmp.ge.f32.partialorder %v506, 0.0
  %vm657 = vcmp.ge.f32.partialorder %v511, 0.0
  %vm658 = vcmp.ge.f32.partialorder %v514, 0.0
  %vm659 = vcmp.ge.f32.partialorder %v519, 0.0
  %vm660 = vcmp.ge.f32.partialorder %v522, 0.0
  %vm661 = vcmp.ge.f32.partialorder %v527, 0.0
  %vm662 = vcmp.ge.f32.partialorder %v530, 0.0
  %vm663 = vcmp.ge.f32.partialorder %v535, 0.0
  %vm664 = vcmp.ge.f32.partialorder %v538, 0.0
  %vm665 = vcmp.ge.f32.partialorder %v543, 0.0
  %vm666 = vcmp.ge.f32.partialorder %v546, 0.0
  %vm667 = vcmp.ge.f32.partialorder %v551, 0.0
  %vm668 = vcmp.ge.f32.partialorder %v554, 0.0
  %vm669 = vcmp.ge.f32.partialorder %v559, 0.0
  %vm670 = vcmp.ge.f32.partialorder %v562, 0.0
  %vm671 = vcmp.ge.f32.partialorder %v567, 0.0
  %vm672 = vcmp.ge.f32.partialorder %v570, 0.0
  %vm673 = vcmp.ge.f32.partialorder %v575, 0.0
  %vm674 = vcmp.ge.f32.partialorder %v578, 0.0
  %vm675 = vcmp.ge.f32.partialorder %v583, 0.0
  %vm676 = vcmp.ge.f32.partialorder %v586, 0.0
  %vm677 = vcmp.ge.f32.partialorder %v591, 0.0
  %vm678 = vcmp.ge.f32.partialorder %v594, 0.0
  %vm679 = vcmp.ge.f32.partialorder %v599, 0.0
  %vm680 = vcmp.ge.f32.partialorder %v602, 0.0
  %vm681 = vcmp.ge.f32.partialorder %v607, 0.0
  %vm682 = vcmp.ge.f32.partialorder %v610, 0.0
  %vm683 = vcmp.ge.f32.partialorder %v615, 0.0
  %vm684 = vcmp.ge.f32.partialorder %v618, 0.0
  %v685 = vmul.f32 %v367, 0.2
  %v686 = vmul.f32 %v370, 0.2
  %v687 = vmul.f32 %v375, 0.2
  %v688 = vmul.f32 %v378, 0.2
  %v689 = vmul.f32 %v383, 0.2
  %v690 = vmul.f32 %v386, 0.2
  %v691 = vmul.f32 %v391, 0.2
  %v692 = vmul.f32 %v394, 0.2
  %v693 = vmul.f32 %v399, 0.2
  %v694 = vmul.f32 %v402, 0.2
  %v695 = vmul.f32 %v407, 0.2
  %v696 = vmul.f32 %v410, 0.2
  %v697 = vmul.f32 %v415, 0.2
  %v698 = vmul.f32 %v418, 0.2
  %v699 = vmul.f32 %v423, 0.2
  %v700 = vmul.f32 %v426, 0.2
  %v701 = vmul.f32 %v431, 0.2
  %v702 = vmul.f32 %v434, 0.2
  %v703 = vmul.f32 %v439, 0.2
  %v704 = vmul.f32 %v442, 0.2
  %v705 = vmul.f32 %v447, 0.2
  %v706 = vmul.f32 %v450, 0.2
  %v707 = vmul.f32 %v455, 0.2
  %v708 = vmul.f32 %v458, 0.2
  %v709 = vmul.f32 %v463, 0.2
  %v710 = vmul.f32 %v466, 0.2
  %v711 = vmul.f32 %v471, 0.2
  %v712 = vmul.f32 %v474, 0.2
  %v713 = vmul.f32 %v479, 0.2
  %v714 = vmul.f32 %v482, 0.2
  %v715 = vmul.f32 %v487, 0.2
  %v716 = vmul.f32 %v490, 0.2
  %v717 = vmul.f32 %v495, 0.2
  %v718 = vmul.f32 %v498, 0.2
  %v719 = vmul.f32 %v503, 0.2
  %v720 = vmul.f32 %v506, 0.2
  %v721 = vmul.f32 %v511, 0.2
  %v722 = vmul.f32 %v514, 0.2
  %v723 = vmul.f32 %v519, 0.2
  %v724 = vmul.f32 %v522, 0.2
  %v725 = vmul.f32 %v527, 0.2
  %v726 = vmul.f32 %v530, 0.2
  %v727 = vmul.f32 %v535, 0.2
  %v728 = vmul.f32 %v538, 0.2
  %v729 = vmul.f32 %v543, 0.2
  %v730 = vmul.f32 %v546, 0.2
  %v731 = vmul.f32 %v551, 0.2
  %v732 = vmul.f32 %v554, 0.2
  %v733 = vmul.f32 %v559, 0.2
  %v734 = vmul.f32 %v562, 0.2
  %v735 = vmul.f32 %v567, 0.2
  %v736 = vmul.f32 %v570, 0.2
  %v737 = vmul.f32 %v575, 0.2
  %v738 = vmul.f32 %v578, 0.2
  %v739 = vmul.f32 %v583, 0.2
  %v740 = vmul.f32 %v586, 0.2
  %v741 = vmul.f32 %v591, 0.2
  %v742 = vmul.f32 %v594, 0.2
  %v743 = vmul.f32 %v599, 0.2
  %v744 = vmul.f32 %v602, 0.2
  %v745 = vmul.f32 %v607, 0.2
  %v746 = vmul.f32 %v610, 0.2
  %v747 = vmul.f32 %v615, 0.2
  %v748 = vmul.f32 %v618, 0.2
  %v749 = vsel %vm621, %v367, %v685
  %v750 = vsel %vm622, %v370, %v686
  %v751 = vsel %vm623, %v375, %v687
  %v752 = vsel %vm624, %v378, %v688
  %v753 = vsel %vm625, %v383, %v689
  %v754 = vsel %vm626, %v386, %v690
  %v755 = vsel %vm627, %v391, %v691
  %v756 = vsel %vm628, %v394, %v692
  %v757 = vsel %vm629, %v399, %v693
  %v758 = vsel %vm630, %v402, %v694
  %v759 = vsel %vm631, %v407, %v695
  %v760 = vsel %vm632, %v410, %v696
  %v761 = vsel %vm633, %v415, %v697
  %v762 = vsel %vm634, %v418, %v698
  %v763 = vsel %vm635, %v423, %v699
  %v764 = vsel %vm636, %v426, %v700
  %v765 = vsel %vm637, %v431, %v701
  %v766 = vsel %vm638, %v434, %v702
  %v767 = vsel %vm639, %v439, %v703
  %v768 = vsel %vm640, %v442, %v704
  %v769 = vsel %vm641, %v447, %v705
  %v770 = vsel %vm642, %v450, %v706
  %v771 = vsel %vm643, %v455, %v707
  %v772 = vsel %vm644, %v458, %v708
  %v773 = vsel %vm645, %v463, %v709
  %v774 = vsel %vm646, %v466, %v710
  %v775 = vsel %vm647, %v471, %v711
  %v776 = vsel %vm648, %v474, %v712
  %v777 = vsel %vm649, %v479, %v713
  %v778 = vsel %vm650, %v482, %v714
  %v779 = vsel %vm651, %v487, %v715
  %v780 = vsel %vm652, %v490, %v716
  %v781 = vsel %vm653, %v495, %v717
  %v782 = vsel %vm654, %v498, %v718
  %v783 = vsel %vm655, %v503, %v719
  %v784 = vsel %vm656, %v506, %v720
  %v785 = vsel %vm657, %v511, %v721
  %v786 = vsel %vm658, %v514, %v722
  %v787 = vsel %vm659, %v519, %v723
  %v788 = vsel %vm660, %v522, %v724
  %v789 = vsel %vm661, %v527, %v725
  %v790 = vsel %vm662, %v530, %v726
  %v791 = vsel %vm663, %v535, %v727
  %v792 = vsel %vm664, %v538, %v728
  %v793 = vsel %vm665, %v543, %v729
  %v794 = vsel %vm666, %v546, %v730
  %v795 = vsel %vm667, %v551, %v731
  %v796 = vsel %vm668, %v554, %v732
  %v797 = vsel %vm669, %v559, %v733
  %v798 = vsel %vm670, %v562, %v734
  %v799 = vsel %vm671, %v567, %v735
  %v800 = vsel %vm672, %v570, %v736
  %v801 = vsel %vm673, %v575, %v737
  %v802 = vsel %vm674, %v578, %v738
  %v803 = vsel %vm675, %v583, %v739
  %v804 = vsel %vm676, %v586, %v740
  %v805 = vsel %vm677, %v591, %v741
  %v806 = vsel %vm678, %v594, %v742
  %v807 = vsel %vm679, %v599, %v743
  %v808 = vsel %vm680, %v602, %v744
  %v809 = vsel %vm681, %v607, %v745
  %v810 = vsel %vm682, %v610, %v746
  %v811 = vsel %vm683, %v615, %v747
  %v812 = vsel %vm684, %v618, %v748
  %v813 = vpack.c.bf16 %v750, %v749
  %v814 = vpack.c.bf16 %v752, %v751
  %v815 = vpack.c.bf16 %v754, %v753
  %v816 = vpack.c.bf16 %v756, %v755
  %v817 = vpack.c.bf16 %v758, %v757
  %v818 = vpack.c.bf16 %v760, %v759
  %v819 = vpack.c.bf16 %v762, %v761
  %v820 = vpack.c.bf16 %v764, %v763
  %v821 = vpack.c.bf16 %v766, %v765
  %v822 = vpack.c.bf16 %v768, %v767
  %v823 = vpack.c.bf16 %v770, %v769
  %v824 = vpack.c.bf16 %v772, %v771
  %v825 = vpack.c.bf16 %v774, %v773
  %v826 = vpack.c.bf16 %v776, %v775
  %v827 = vpack.c.bf16 %v778, %v777
  %v828 = vpack.c.bf16 %v780, %v779
  %v829 = vpack.c.bf16 %v782, %v781
  %v830 = vpack.c.bf16 %v784, %v783
  %v831 = vpack.c.bf16 %v786, %v785
  %v832 = vpack.c.bf16 %v788, %v787
  %v833 = vpack.c.bf16 %v790, %v789
  %v834 = vpack.c.bf16 %v792, %v791
  %v835 = vpack.c.bf16 %v794, %v793
  %v836 = vpack.c.bf16 %v796, %v795
  %v837 = vpack.c.bf16 %v798, %v797
  %v838 = vpack.c.bf16 %v800, %v799
  %v839 = vpack.c.bf16 %v802, %v801
  %v840 = vpack.c.bf16 %v804, %v803
  %v841 = vpack.c.bf16 %v806, %v805
  %v842 = vpack.c.bf16 %v808, %v807
  %v843 = vpack.c.bf16 %v810, %v809
  %v844 = vpack.c.bf16 %v812, %v811
  %v877 = vunpack.c.l.b16 %v813
  %v878 = vunpack.c.h.b16 %v813
  %v879 = vunpack.c.l.b16 %v814
  %v880 = vunpack.c.h.b16 %v814
  %v881 = vunpack.c.l.b16 %v815
  %v882 = vunpack.c.h.b16 %v815
  %v883 = vunpack.c.l.b16 %v816
  %v884 = vunpack.c.h.b16 %v816
  %v885 = vunpack.c.l.b16 %v817
  %v886 = vunpack.c.h.b16 %v817
  %v887 = vunpack.c.l.b16 %v818
  %v888 = vunpack.c.h.b16 %v818
  %v889 = vunpack.c.l.b16 %v819
  %v890 = vunpack.c.h.b16 %v819
  %v891 = vunpack.c.l.b16 %v820
  %v892 = vunpack.c.h.b16 %v820
  %v893 = vunpack.c.l.b16 %v821
  %v894 = vunpack.c.h.b16 %v821
  %v895 = vunpack.c.l.b16 %v822
  %v896 = vunpack.c.h.b16 %v822
  %v897 = vunpack.c.l.b16 %v823
  %v898 = vunpack.c.h.b16 %v823
  %v899 = vunpack.c.l.b16 %v824
  %v900 = vunpack.c.h.b16 %v824
  %v901 = vunpack.c.l.b16 %v825
  %v902 = vunpack.c.h.b16 %v825
  %v903 = vunpack.c.l.b16 %v826
  %v904 = vunpack.c.h.b16 %v826
  %v905 = vunpack.c.l.b16 %v827
  %v906 = vunpack.c.h.b16 %v827
  %v907 = vunpack.c.l.b16 %v828
  %v908 = vunpack.c.h.b16 %v828
  %v909 = vunpack.c.l.b16 %v829
  %v910 = vunpack.c.h.b16 %v829
  %v911 = vunpack.c.l.b16 %v830
  %v912 = vunpack.c.h.b16 %v830
  %v913 = vunpack.c.l.b16 %v831
  %v914 = vunpack.c.h.b16 %v831
  %v915 = vunpack.c.l.b16 %v832
  %v916 = vunpack.c.h.b16 %v832
  %v917 = vunpack.c.l.b16 %v833
  %v918 = vunpack.c.h.b16 %v833
  %v919 = vunpack.c.l.b16 %v834
  %v920 = vunpack.c.h.b16 %v834
  %v921 = vunpack.c.l.b16 %v835
  %v922 = vunpack.c.h.b16 %v835
  %v923 = vunpack.c.l.b16 %v836
  %v924 = vunpack.c.h.b16 %v836
  %v925 = vunpack.c.l.b16 %v837
  %v926 = vunpack.c.h.b16 %v837
  %v927 = vunpack.c.l.b16 %v838
  %v928 = vunpack.c.h.b16 %v838
  %v929 = vunpack.c.l.b16 %v839
  %v930 = vunpack.c.h.b16 %v839
  %v931 = vunpack.c.l.b16 %v840
  %v932 = vunpack.c.h.b16 %v840
  %v933 = vunpack.c.l.b16 %v841
  %v934 = vunpack.c.h.b16 %v841
  %v935 = vunpack.c.l.b16 %v842
  %v936 = vunpack.c.h.b16 %v842
  %v937 = vunpack.c.l.b16 %v843
  %v938 = vunpack.c.h.b16 %v843
  %v939 = vunpack.c.l.b16 %v844
  %v940 = vunpack.c.h.b16 %v844
  %v941 = vpack.c.b16 %v877, %v877
  %v942 = vpack.c.b16 %v878, %v878
  %v943 = vpack.c.b16 %v879, %v879
  %v944 = vpack.c.b16 %v880, %v880
  %v945 = vpack.c.b16 %v881, %v881
  %v946 = vpack.c.b16 %v882, %v882
  %v947 = vpack.c.b16 %v883, %v883
  %v948 = vpack.c.b16 %v884, %v884
  %v949 = vpack.c.b16 %v885, %v885
  %v950 = vpack.c.b16 %v886, %v886
  %v951 = vpack.c.b16 %v887, %v887
  %v952 = vpack.c.b16 %v888, %v888
  %v953 = vpack.c.b16 %v889, %v889
  %v954 = vpack.c.b16 %v890, %v890
  %v955 = vpack.c.b16 %v891, %v891
  %v956 = vpack.c.b16 %v892, %v892
  %v957 = vpack.c.b16 %v893, %v893
  %v958 = vpack.c.b16 %v894, %v894
  %v959 = vpack.c.b16 %v895, %v895
  %v960 = vpack.c.b16 %v896, %v896
  %v961 = vpack.c.b16 %v897, %v897
  %v962 = vpack.c.b16 %v898, %v898
  %v963 = vpack.c.b16 %v899, %v899
  %v964 = vpack.c.b16 %v900, %v900
  %v965 = vpack.c.b16 %v901, %v901
  %v966 = vpack.c.b16 %v902, %v902
  %v967 = vpack.c.b16 %v903, %v903
  %v968 = vpack.c.b16 %v904, %v904
  %v969 = vpack.c.b16 %v905, %v905
  %v970 = vpack.c.b16 %v906, %v906
  %v971 = vpack.c.b16 %v907, %v907
  %v972 = vpack.c.b16 %v908, %v908
  %v973 = vpack.c.b16 %v909, %v909
  %v974 = vpack.c.b16 %v910, %v910
  %v975 = vpack.c.b16 %v911, %v911
  %v976 = vpack.c.b16 %v912, %v912
  %v977 = vpack.c.b16 %v913, %v913
  %v978 = vpack.c.b16 %v914, %v914
  %v979 = vpack.c.b16 %v915, %v915
  %v980 = vpack.c.b16 %v916, %v916
  %v981 = vpack.c.b16 %v917, %v917
  %v982 = vpack.c.b16 %v918, %v918
  %v983 = vpack.c.b16 %v919, %v919
  %v984 = vpack.c.b16 %v920, %v920
  %v985 = vpack.c.b16 %v921, %v921
  %v986 = vpack.c.b16 %v922, %v922
  %v987 = vpack.c.b16 %v923, %v923
  %v988 = vpack.c.b16 %v924, %v924
  %v989 = vpack.c.b16 %v925, %v925
  %v990 = vpack.c.b16 %v926, %v926
  %v991 = vpack.c.b16 %v927, %v927
  %v992 = vpack.c.b16 %v928, %v928
  %v993 = vpack.c.b16 %v929, %v929
  %v994 = vpack.c.b16 %v930, %v930
  %v995 = vpack.c.b16 %v931, %v931
  %v996 = vpack.c.b16 %v932, %v932
  %v997 = vpack.c.b16 %v933, %v933
  %v998 = vpack.c.b16 %v934, %v934
  %v999 = vpack.c.b16 %v935, %v935
  %v1000 = vpack.c.b16 %v936, %v936
  %v1001 = vpack.c.b16 %v937, %v937
  %v1002 = vpack.c.b16 %v938, %v938
  %v1003 = vpack.c.b16 %v939, %v939
  %v1004 = vpack.c.b16 %v940, %v940
  %1069 = vst [vmem:[%s2] sm:$0xf] %v941
  %1070 = vst [vmem:[%s2 + $0x4] sm:$0xf] %v942
  %1071 = vst [vmem:[%s2 + $0x8] sm:$0xf] %v943
  %1072 = vst [vmem:[%s2 + $0xc] sm:$0xf] %v944
  %1073 = vst [vmem:[%s2 + $0x10] sm:$0xf] %v945
  %1074 = vst [vmem:[%s2 + $0x14] sm:$0xf] %v946
  %1075 = vst [vmem:[%s2 + $0x18] sm:$0xf] %v947
  %1076 = vst [vmem:[%s2 + $0x1c] sm:$0xf] %v948
  %1077 = vst [vmem:[%s2 + $0x20] sm:$0xf] %v949
  %1078 = vst [vmem:[%s2 + $0x24] sm:$0xf] %v950
  %1079 = vst [vmem:[%s2 + $0x28] sm:$0xf] %v951
  %1080 = vst [vmem:[%s2 + $0x2c] sm:$0xf] %v952
  %1081 = vst [vmem:[%s2 + $0x30] sm:$0xf] %v953
  %1082 = vst [vmem:[%s2 + $0x34] sm:$0xf] %v954
  %1083 = vst [vmem:[%s2 + $0x38] sm:$0xf] %v955
  %1084 = vst [vmem:[%s2 + $0x3c] sm:$0xf] %v956
  %1085 = vst [vmem:[%s2 + $0x40] sm:$0xf] %v957
  %1086 = vst [vmem:[%s2 + $0x44] sm:$0xf] %v958
  %1087 = vst [vmem:[%s2 + $0x48] sm:$0xf] %v959
  %1088 = vst [vmem:[%s2 + $0x4c] sm:$0xf] %v960
  %1089 = vst [vmem:[%s2 + $0x50] sm:$0xf] %v961
  %1090 = vst [vmem:[%s2 + $0x54] sm:$0xf] %v962
  %1091 = vst [vmem:[%s2 + $0x58] sm:$0xf] %v963
  %1092 = vst [vmem:[%s2 + $0x5c] sm:$0xf] %v964
  %1093 = vst [vmem:[%s2 + $0x60] sm:$0xf] %v965
  %1094 = vst [vmem:[%s2 + $0x64] sm:$0xf] %v966
  %1095 = vst [vmem:[%s2 + $0x68] sm:$0xf] %v967
  %1096 = vst [vmem:[%s2 + $0x6c] sm:$0xf] %v968
  %1097 = vst [vmem:[%s2 + $0x70] sm:$0xf] %v969
  %1098 = vst [vmem:[%s2 + $0x74] sm:$0xf] %v970
  %1099 = vst [vmem:[%s2 + $0x78] sm:$0xf] %v971
  %1100 = vst [vmem:[%s2 + $0x7c] sm:$0xf] %v972
  %1101 = vst [vmem:[%s2 + $0x80] sm:$0xf] %v973
  %1102 = vst [vmem:[%s2 + $0x84] sm:$0xf] %v974
  %1103 = vst [vmem:[%s2 + $0x88] sm:$0xf] %v975
  %1104 = vst [vmem:[%s2 + $0x8c] sm:$0xf] %v976
  %1105 = vst [vmem:[%s2 + $0x90] sm:$0xf] %v977
  %1106 = vst [vmem:[%s2 + $0x94] sm:$0xf] %v978
  %1107 = vst [vmem:[%s2 + $0x98] sm:$0xf] %v979
  %1108 = vst [vmem:[%s2 + $0x9c] sm:$0xf] %v980
  %1109 = vst [vmem:[%s2 + $0xa0] sm:$0xf] %v981
  %1110 = vst [vmem:[%s2 + $0xa4] sm:$0xf] %v982
  %1111 = vst [vmem:[%s2 + $0xa8] sm:$0xf] %v983
  %1112 = vst [vmem:[%s2 + $0xac] sm:$0xf] %v984
  %1113 = vst [vmem:[%s2 + $0xb0] sm:$0xf] %v985
  %1114 = vst [vmem:[%s2 + $0xb4] sm:$0xf] %v986
  %1115 = vst [vmem:[%s2 + $0xb8] sm:$0xf] %v987
  %1116 = vst [vmem:[%s2 + $0xbc] sm:$0xf] %v988
  %1117 = vst [vmem:[%s2 + $0xc0] sm:$0xf] %v989
  %1118 = vst [vmem:[%s2 + $0xc4] sm:$0xf] %v990
  %1119 = vst [vmem:[%s2 + $0xc8] sm:$0xf] %v991
  %1120 = vst [vmem:[%s2 + $0xcc] sm:$0xf] %v992
  %1121 = vst [vmem:[%s2 + $0xd0] sm:$0xf] %v993
  %1122 = vst [vmem:[%s2 + $0xd4] sm:$0xf] %v994
  %1123 = vst [vmem:[%s2 + $0xd8] sm:$0xf] %v995
  %1124 = vst [vmem:[%s2 + $0xdc] sm:$0xf] %v996
  %1125 = vst [vmem:[%s2 + $0xe0] sm:$0xf] %v997
  %1126 = vst [vmem:[%s2 + $0xe4] sm:$0xf] %v998
  %1127 = vst [vmem:[%s2 + $0xe8] sm:$0xf] %v999
  %1128 = vst [vmem:[%s2 + $0xec] sm:$0xf] %v1000
  %1129 = vst [vmem:[%s2 + $0xf0] sm:$0xf] %v1001
  %1130 = vst [vmem:[%s2 + $0xf4] sm:$0xf] %v1002
  %1131 = vst [vmem:[%s2 + $0xf8] sm:$0xf] %v1003
  %1132 = vst [vmem:[%s2 + $0xfc] sm:$0xf] %v1004
  // Predicated region
  $region10: #{discriminator_forward.7} parent=0 // pred_check
    _
  $region11: #{discriminator_forward.7} parent=0 // pred_check_branch
    %1134 = sbr.rel (0) target = $region13
  $region12: #{discriminator_forward.7} parent=0 // pred_region
    _
  $region13: #{discriminator_forward.7} parent=0 // pred_fallthru
    _
  // Predicated region
  $region14: #{discriminator_forward.7} parent=0 // pred_check
    _
  $region15: #{discriminator_forward.7} parent=0 // pred_check_branch
    %1136 = sbr.rel (0) target = $region17
  $region16: #{discriminator_forward.7} parent=0 // pred_region
    _
  $region17: #{discriminator_forward.7} parent=0 // pred_fallthru
    _

// kernel: discriminator_forward.8
$region0: #{discriminator_forward.8}
  #allocation0 [shape = 'u32[]', space=smem, size = 0x4, offset = 0x4, fixed_abs, tag = 'smem constant byte address 0x4 - core index']
  #allocation1 [shape = 'u32[144,128]{1,0:T(1,128)}', space=vmem, size = 0x12000, scoped, tag = 'internal scratch']
  %s0 = inlined_call_operand.vmem [shape: bf16[128,256], index: 0, kind: input, shape index: {}]
  %s1 = inlined_call_operand.vmem [shape: bf16[256,128], index: 1, kind: input, shape index: {}]
  %s2 = inlined_call_operand.vmem [shape: bf16[128,128], index: 2, kind: output, shape index: {0}]
  %s3 = inlined_call_operand.vmem [shape: f32[1,128], index: 3, kind: output, shape index: {1}]
  %s4 = inlined_call_operand.vmem [shape: f32[1,128], index: 4, kind: output, shape index: {2}]
  %5 = xla_tuple %s2, %s3, %s4
  %s6 = sld [smem:[#allocation0]]
  $region34: #{discriminator_forward.8} parent=0
    _
  %s8 = ssub.s32 1, %s6
  %s9 = scalar_select 0, %s8, %s6
  // Predicated region
  $region2: #{discriminator_forward.8} parent=0 // pred_check
    _
  $region3: #{discriminator_forward.8} parent=0 // pred_check_branch
    %11 = sbr.rel (0) target = $region5
  $region4: #{discriminator_forward.8} parent=0 // pred_region
    _
  $region5: #{discriminator_forward.8} parent=0 // pred_fallthru
    _
  // Predicated region
  $region6: #{discriminator_forward.8} parent=0 // pred_check
    _
  $region7: #{discriminator_forward.8} parent=0 // pred_check_branch
    %13 = sbr.rel (0) target = $region9
  $region8: #{discriminator_forward.8} parent=0 // pred_region
    _
  $region9: #{discriminator_forward.8} parent=0 // pred_fallthru
    _
  %v15 = vld [vmem:[%s0] sm:$0xff]
  %v16 = vld [vmem:[%s0 + $0x8] sm:$0xff]
  %v17 = vld [vmem:[%s0 + $0x10] sm:$0xff]
  %v18 = vld [vmem:[%s0 + $0x18] sm:$0xff]
  %v19 = vld [vmem:[%s0 + $0x20] sm:$0xff]
  %v20 = vld [vmem:[%s0 + $0x28] sm:$0xff]
  %v21 = vld [vmem:[%s0 + $0x30] sm:$0xff]
  %v22 = vld [vmem:[%s0 + $0x38] sm:$0xff]
  %v23 = vld [vmem:[%s0 + $0x40] sm:$0xff]
  %v24 = vld [vmem:[%s0 + $0x48] sm:$0xff]
  %v25 = vld [vmem:[%s0 + $0x50] sm:$0xff]
  %v26 = vld [vmem:[%s0 + $0x58] sm:$0xff]
  %v27 = vld [vmem:[%s0 + $0x60] sm:$0xff]
  %v28 = vld [vmem:[%s0 + $0x68] sm:$0xff]
  %v29 = vld [vmem:[%s0 + $0x70] sm:$0xff]
  %v30 = vld [vmem:[%s0 + $0x78] sm:$0xff]
  %v31 = vld [vmem:[%s1] sm:$0xf]
  %v32 = vld [vmem:[%s1 + $0x4] sm:$0xf]
  %v33 = vld [vmem:[%s1 + $0x8] sm:$0xf]
  %v34 = vld [vmem:[%s1 + $0xc] sm:$0xf]
  %v35 = vld [vmem:[%s1 + $0x10] sm:$0xf]
  %v36 = vld [vmem:[%s1 + $0x14] sm:$0xf]
  %v37 = vld [vmem:[%s1 + $0x18] sm:$0xf]
  %v38 = vld [vmem:[%s1 + $0x1c] sm:$0xf]
  %v39 = vld [vmem:[%s1 + $0x20] sm:$0xf]
  %v40 = vld [vmem:[%s1 + $0x24] sm:$0xf]
  %v41 = vld [vmem:[%s1 + $0x28] sm:$0xf]
  %v42 = vld [vmem:[%s1 + $0x2c] sm:$0xf]
  %v43 = vld [vmem:[%s1 + $0x30] sm:$0xf]
  %v44 = vld [vmem:[%s1 + $0x34] sm:$0xf]
  %v45 = vld [vmem:[%s1 + $0x38] sm:$0xf]
  %v46 = vld [vmem:[%s1 + $0x3c] sm:$0xf]
  %v47 = vld [vmem:[%s1 + $0x40] sm:$0xf]
  %v48 = vld [vmem:[%s1 + $0x44] sm:$0xf]
  %v49 = vld [vmem:[%s1 + $0x48] sm:$0xf]
  %v50 = vld [vmem:[%s1 + $0x4c] sm:$0xf]
  %v51 = vld [vmem:[%s1 + $0x50] sm:$0xf]
  %v52 = vld [vmem:[%s1 + $0x54] sm:$0xf]
  %v53 = vld [vmem:[%s1 + $0x58] sm:$0xf]
  %v54 = vld [vmem:[%s1 + $0x5c] sm:$0xf]
  %v55 = vld [vmem:[%s1 + $0x60] sm:$0xf]
  %v56 = vld [vmem:[%s1 + $0x64] sm:$0xf]
  %v57 = vld [vmem:[%s1 + $0x68] sm:$0xf]
  %v58 = vld [vmem:[%s1 + $0x6c] sm:$0xf]
  %v59 = vld [vmem:[%s1 + $0x70] sm:$0xf]
  %v60 = vld [vmem:[%s1 + $0x74] sm:$0xf]
  %v61 = vld [vmem:[%s1 + $0x78] sm:$0xf]
  %v62 = vld [vmem:[%s1 + $0x7c] sm:$0xf]
  %v79 = vunpack.c.l.b16 %v15
  %v80 = vunpack.c.h.b16 %v15
  %v81 = vunpack.c.l.b16 %v16
  %v82 = vunpack.c.h.b16 %v16
  %v83 = vunpack.c.l.b16 %v17
  %v84 = vunpack.c.h.b16 %v17
  %v85 = vunpack.c.l.b16 %v18
  %v86 = vunpack.c.h.b16 %v18
  %v87 = vunpack.c.l.b16 %v19
  %v88 = vunpack.c.h.b16 %v19
  %v89 = vunpack.c.l.b16 %v20
  %v90 = vunpack.c.h.b16 %v20
  %v91 = vunpack.c.l.b16 %v21
  %v92 = vunpack.c.h.b16 %v21
  %v93 = vunpack.c.l.b16 %v22
  %v94 = vunpack.c.h.b16 %v22
  %v95 = vunpack.c.l.b16 %v23
  %v96 = vunpack.c.h.b16 %v23
  %v97 = vunpack.c.l.b16 %v24
  %v98 = vunpack.c.h.b16 %v24
  %v99 = vunpack.c.l.b16 %v25
  %v100 = vunpack.c.h.b16 %v25
  %v101 = vunpack.c.l.b16 %v26
  %v102 = vunpack.c.h.b16 %v26
  %v103 = vunpack.c.l.b16 %v27
  %v104 = vunpack.c.h.b16 %v27
  %v105 = vunpack.c.l.b16 %v28
  %v106 = vunpack.c.h.b16 %v28
  %v107 = vunpack.c.l.b16 %v29
  %v108 = vunpack.c.h.b16 %v29
  %v109 = vunpack.c.l.b16 %v30
  %v110 = vunpack.c.h.b16 %v30
  %v111 = vpack.c.b16 %v81, %v79
  %v112 = vpack.c.b16 %v82, %v80
  %v113 = vpack.c.b16 %v85, %v83
  %v114 = vpack.c.b16 %v86, %v84
  %v115 = vpack.c.b16 %v89, %v87
  %v116 = vpack.c.b16 %v90, %v88
  %v117 = vpack.c.b16 %v93, %v91
  %v118 = vpack.c.b16 %v94, %v92
  %v119 = vpack.c.b16 %v97, %v95
  %v120 = vpack.c.b16 %v98, %v96
  %v121 = vpack.c.b16 %v101, %v99
  %v122 = vpack.c.b16 %v102, %v100
  %v123 = vpack.c.b16 %v105, %v103
  %v124 = vpack.c.b16 %v106, %v104
  %v125 = vpack.c.b16 %v109, %v107
  %v126 = vpack.c.b16 %v110, %v108
  %v175 = vunpack.c.l.b16 %v31
  %v176 = vunpack.c.l.b16 %v32
  %v177 = vunpack.c.l.b16 %v33
  %v178 = vunpack.c.l.b16 %v34
  %v179 = vunpack.c.l.b16 %v35
  %v180 = vunpack.c.l.b16 %v36
  %v181 = vunpack.c.l.b16 %v37
  %v182 = vunpack.c.l.b16 %v38
  %v183 = vunpack.c.l.b16 %v39
  %v184 = vunpack.c.l.b16 %v40
  %v185 = vunpack.c.l.b16 %v41
  %v186 = vunpack.c.l.b16 %v42
  %v187 = vunpack.c.l.b16 %v43
  %v188 = vunpack.c.l.b16 %v44
  %v189 = vunpack.c.l.b16 %v45
  %v190 = vunpack.c.l.b16 %v46
  %v191 = vunpack.c.l.b16 %v47
  %v192 = vunpack.c.l.b16 %v48
  %v193 = vunpack.c.l.b16 %v49
  %v194 = vunpack.c.l.b16 %v50
  %v195 = vunpack.c.l.b16 %v51
  %v196 = vunpack.c.l.b16 %v52
  %v197 = vunpack.c.l.b16 %v53
  %v198 = vunpack.c.l.b16 %v54
  %v199 = vunpack.c.l.b16 %v55
  %v200 = vunpack.c.l.b16 %v56
  %v201 = vunpack.c.l.b16 %v57
  %v202 = vunpack.c.l.b16 %v58
  %v203 = vunpack.c.l.b16 %v59
  %v204 = vunpack.c.l.b16 %v60
  %v205 = vunpack.c.l.b16 %v61
  %v206 = vunpack.c.l.b16 %v62
  %v207 = vpack.c.b16 %v176, %v175
  %v208 = vpack.c.b16 %v178, %v177
  %v209 = vpack.c.b16 %v180, %v179
  %v210 = vpack.c.b16 %v182, %v181
  %v211 = vpack.c.b16 %v184, %v183
  %v212 = vpack.c.b16 %v186, %v185
  %v213 = vpack.c.b16 %v188, %v187
  %v214 = vpack.c.b16 %v190, %v189
  %v215 = vpack.c.b16 %v192, %v191
  %v216 = vpack.c.b16 %v194, %v193
  %v217 = vpack.c.b16 %v196, %v195
  %v218 = vpack.c.b16 %v198, %v197
  %v219 = vpack.c.b16 %v200, %v199
  %v220 = vpack.c.b16 %v202, %v201
  %v221 = vpack.c.b16 %v204, %v203
  %v222 = vpack.c.b16 %v206, %v205
  %239 = vmatprep.subr.bf16.mxu0 0
  %240 = vmatpush1.bf16.msra.mxu0 %v207
  %241 = vmatprep.subr.bf16.mxu0 0
  %242 = vmatpush1.bf16.msra.mxu0 %v208
  %243 = vmatprep.subr.bf16.mxu0 0
  %244 = vmatpush1.bf16.msra.mxu0 %v209
  %245 = vmatprep.subr.bf16.mxu0 0
  %246 = vmatpush1.bf16.msra.mxu0 %v210
  %247 = vmatprep.subr.bf16.mxu0 0
  %248 = vmatpush1.bf16.msra.mxu0 %v211
  %249 = vmatprep.subr.bf16.mxu0 0
  %250 = vmatpush1.bf16.msra.mxu0 %v212
  %251 = vmatprep.subr.bf16.mxu0 0
  %252 = vmatpush1.bf16.msra.mxu0 %v213
  %253 = vmatprep.subr.bf16.mxu0 0
  %254 = vmatpush1.bf16.msra.mxu0 %v214
  %255 = vmatprep.subr.bf16.mxu0 0
  %256 = vmatpush1.bf16.msra.mxu0 %v215
  %257 = vmatprep.subr.bf16.mxu0 0
  %258 = vmatpush1.bf16.msra.mxu0 %v216
  %259 = vmatprep.subr.bf16.mxu0 0
  %260 = vmatpush1.bf16.msra.mxu0 %v217
  %261 = vmatprep.subr.bf16.mxu0 0
  %262 = vmatpush1.bf16.msra.mxu0 %v218
  %263 = vmatprep.subr.bf16.mxu0 0
  %264 = vmatpush1.bf16.msra.mxu0 %v219
  %265 = vmatprep.subr.bf16.mxu0 0
  %266 = vmatpush1.bf16.msra.mxu0 %v220
  %267 = vmatprep.subr.bf16.mxu0 0
  %268 = vmatpush1.bf16.msra.mxu0 %v221
  %269 = vmatprep.subr.bf16.mxu0 0
  %270 = vmatpush1.bf16.msra.mxu0 %v222
  %271 = vmatprep.mubr.bf16.mxu0 %v112
  %272 = vmatmul.mubr.bf16.gmra.mrb[0].mxu0 %v111
  %v273 = vpop.f32.mrb[0].mxu0
  %v274 = vadd.f32 0.0, %v273
  %v275 = vpop.f32.mrb[0].mxu0
  %v276 = vpop.f32.mrb[0].mxu0
  %v277 = vadd.f32 0.0, %v276
  %v278 = vpop.f32.mrb[0].mxu0
  %279 = vmatprep.mubr.bf16.mxu0 %v114
  %280 = vmatmul.mubr.bf16.gmra.mrb[0].mxu0 %v113
  %v281 = vpop.f32.mrb[0].mxu0
  %v282 = vadd.f32 0.0, %v281
  %v283 = vpop.f32.mrb[0].mxu0
  %v284 = vpop.f32.mrb[0].mxu0
  %v285 = vadd.f32 0.0, %v284
  %v286 = vpop.f32.mrb[0].mxu0
  %287 = vmatprep.mubr.bf16.mxu0 %v116
  %288 = vmatmul.mubr.bf16.gmra.mrb[0].mxu0 %v115
  %v289 = vpop.f32.mrb[0].mxu0
  %v290 = vadd.f32 0.0, %v289
  %v291 = vpop.f32.mrb[0].mxu0
  %v292 = vpop.f32.mrb[0].mxu0
  %v293 = vadd.f32 0.0, %v292
  %v294 = vpop.f32.mrb[0].mxu0
  %295 = vmatprep.mubr.bf16.mxu0 %v118
  %296 = vmatmul.mubr.bf16.gmra.mrb[0].mxu0 %v117
  %v297 = vpop.f32.mrb[0].mxu0
  %v298 = vadd.f32 0.0, %v297
  %v299 = vpop.f32.mrb[0].mxu0
  %v300 = vpop.f32.mrb[0].mxu0
  %v301 = vadd.f32 0.0, %v300
  %v302 = vpop.f32.mrb[0].mxu0
  %303 = vmatprep.mubr.bf16.mxu0 %v120
  %304 = vmatmul.mubr.bf16.gmra.mrb[0].mxu0 %v119
  %v305 = vpop.f32.mrb[0].mxu0
  %v306 = vadd.f32 0.0, %v305
  %v307 = vpop.f32.mrb[0].mxu0
  %v308 = vpop.f32.mrb[0].mxu0
  %v309 = vadd.f32 0.0, %v308
  %v310 = vpop.f32.mrb[0].mxu0
  %311 = vmatprep.mubr.bf16.mxu0 %v122
  %312 = vmatmul.mubr.bf16.gmra.mrb[0].mxu0 %v121
  %v313 = vpop.f32.mrb[0].mxu0
  %v314 = vadd.f32 0.0, %v313
  %v315 = vpop.f32.mrb[0].mxu0
  %v316 = vpop.f32.mrb[0].mxu0
  %v317 = vadd.f32 0.0, %v316
  %v318 = vpop.f32.mrb[0].mxu0
  %319 = vmatprep.mubr.bf16.mxu0 %v124
  %320 = vmatmul.mubr.bf16.gmra.mrb[0].mxu0 %v123
  %v321 = vpop.f32.mrb[0].mxu0
  %v322 = vadd.f32 0.0, %v321
  %v323 = vpop.f32.mrb[0].mxu0
  %v324 = vpop.f32.mrb[0].mxu0
  %v325 = vadd.f32 0.0, %v324
  %v326 = vpop.f32.mrb[0].mxu0
  %327 = vmatprep.mubr.bf16.mxu0 %v126
  %328 = vmatmul.mubr.bf16.gmra.mrb[0].mxu0 %v125
  %v329 = vpop.f32.mrb[0].mxu0
  %v330 = vadd.f32 0.0, %v329
  %v331 = vpop.f32.mrb[0].mxu0
  %v332 = vpop.f32.mrb[0].mxu0
  %v333 = vadd.f32 0.0, %v332
  %v334 = vpop.f32.mrb[0].mxu0
  %335 = vdwg.mxu0
  %v336 = vpack.c.bf16 %v277, %v274
  %v337 = vpack.c.bf16 %v285, %v282
  %v338 = vpack.c.bf16 %v293, %v290
  %v339 = vpack.c.bf16 %v301, %v298
  %v340 = vpack.c.bf16 %v309, %v306
  %v341 = vpack.c.bf16 %v317, %v314
  %v342 = vpack.c.bf16 %v325, %v322
  %v343 = vpack.c.bf16 %v333, %v330
  %v352 = vunpack.c.l.b16 %v336
  %v353 = vunpack.c.h.b16 %v336
  %v354 = vunpack.c.l.b16 %v337
  %v355 = vunpack.c.h.b16 %v337
  %v356 = vunpack.c.l.b16 %v338
  %v357 = vunpack.c.h.b16 %v338
  %v358 = vunpack.c.l.b16 %v339
  %v359 = vunpack.c.h.b16 %v339
  %v360 = vunpack.c.l.b16 %v340
  %v361 = vunpack.c.h.b16 %v340
  %v362 = vunpack.c.l.b16 %v341
  %v363 = vunpack.c.h.b16 %v341
  %v364 = vunpack.c.l.b16 %v342
  %v365 = vunpack.c.h.b16 %v342
  %v366 = vunpack.c.l.b16 %v343
  %v367 = vunpack.c.h.b16 %v343
  %v368 = vpack.c.b16 %v352, %v352
  %v369 = vpack.c.b16 %v353, %v353
  %v370 = vpack.c.b16 %v354, %v354
  %v371 = vpack.c.b16 %v355, %v355
  %v372 = vpack.c.b16 %v356, %v356
  %v373 = vpack.c.b16 %v357, %v357
  %v374 = vpack.c.b16 %v358, %v358
  %v375 = vpack.c.b16 %v359, %v359
  %v376 = vpack.c.b16 %v360, %v360
  %v377 = vpack.c.b16 %v361, %v361
  %v378 = vpack.c.b16 %v362, %v362
  %v379 = vpack.c.b16 %v363, %v363
  %v380 = vpack.c.b16 %v364, %v364
  %v381 = vpack.c.b16 %v365, %v365
  %v382 = vpack.c.b16 %v366, %v366
  %v383 = vpack.c.b16 %v367, %v367
  %400 = vst [vmem:[%s2] sm:$0xf] %v368
  %401 = vst [vmem:[%s2 + $0x4] sm:$0xf] %v369
  %402 = vst [vmem:[%s2 + $0x8] sm:$0xf] %v370
  %403 = vst [vmem:[%s2 + $0xc] sm:$0xf] %v371
  %404 = vst [vmem:[%s2 + $0x10] sm:$0xf] %v372
  %405 = vst [vmem:[%s2 + $0x14] sm:$0xf] %v373
  %406 = vst [vmem:[%s2 + $0x18] sm:$0xf] %v374
  %407 = vst [vmem:[%s2 + $0x1c] sm:$0xf] %v375
  %408 = vst [vmem:[%s2 + $0x20] sm:$0xf] %v376
  %409 = vst [vmem:[%s2 + $0x24] sm:$0xf] %v377
  %410 = vst [vmem:[%s2 + $0x28] sm:$0xf] %v378
  %411 = vst [vmem:[%s2 + $0x2c] sm:$0xf] %v379
  %412 = vst [vmem:[%s2 + $0x30] sm:$0xf] %v380
  %413 = vst [vmem:[%s2 + $0x34] sm:$0xf] %v381
  %414 = vst [vmem:[%s2 + $0x38] sm:$0xf] %v382
  %415 = vst [vmem:[%s2 + $0x3c] sm:$0xf] %v383
  %v416 = vadd.f32 %v274, %v277
  %v417 = vadd.f32 %v416, %v282
  %v418 = vadd.f32 %v417, %v285
  %v419 = vadd.f32 %v418, %v290
  %v420 = vadd.f32 %v419, %v293
  %v421 = vadd.f32 %v420, %v298
  %v422 = vadd.f32 %v421, %v301
  %v423 = vadd.f32 %v422, %v306
  %v424 = vadd.f32 %v423, %v309
  %v425 = vadd.f32 %v424, %v314
  %v426 = vadd.f32 %v425, %v317
  %v427 = vadd.f32 %v426, %v322
  %v428 = vadd.f32 %v427, %v325
  %v429 = vadd.f32 %v428, %v330
  %v430 = vadd.f32 %v429, %v333
  %v431 = vrot.slane %v430, 4
  %v432 = vadd.f32 %v430, %v431
  %v433 = vrot.slane %v432, 2
  %v434 = vadd.f32 %v432, %v433
  %v435 = vrot.slane %v434, 1
  %v436 = vadd.f32 %v434, %v435
  %437 = vst [vmem:[%s3] sm:$0x1] %v436
  %v438 = vmul.f32 %v274, %v274
  %v439 = vmul.f32 %v277, %v277
  %v440 = vmul.f32 %v282, %v282
  %v441 = vmul.f32 %v285, %v285
  %v442 = vmul.f32 %v290, %v290
  %v443 = vmul.f32 %v293, %v293
  %v444 = vmul.f32 %v298, %v298
  %v445 = vmul.f32 %v301, %v301
  %v446 = vmul.f32 %v306, %v306
  %v447 = vmul.f32 %v309, %v309
  %v448 = vmul.f32 %v314, %v314
  %v449 = vmul.f32 %v317, %v317
  %v450 = vmul.f32 %v322, %v322
  %v451 = vmul.f32 %v325, %v325
  %v452 = vmul.f32 %v330, %v330
  %v453 = vmul.f32 %v333, %v333
  %v454 = vadd.f32 %v438, %v439
  %v455 = vadd.f32 %v454, %v440
  %v456 = vadd.f32 %v455, %v441
  %v457 = vadd.f32 %v456, %v442
  %v458 = vadd.f32 %v457, %v443
  %v459 = vadd.f32 %v458, %v444
  %v460 = vadd.f32 %v459, %v445
  %v461 = vadd.f32 %v460, %v446
  %v462 = vadd.f32 %v461, %v447
  %v463 = vadd.f32 %v462, %v448
  %v464 = vadd.f32 %v463, %v449
  %v465 = vadd.f32 %v464, %v450
  %v466 = vadd.f32 %v465, %v451
  %v467 = vadd.f32 %v466, %v452
  %v468 = vadd.f32 %v467, %v453
  %v469 = vrot.slane %v468, 4
  %v470 = vadd.f32 %v468, %v469
  %v471 = vrot.slane %v470, 2
  %v472 = vadd.f32 %v470, %v471
  %v473 = vrot.slane %v472, 1
  %v474 = vadd.f32 %v472, %v473
  %475 = vst [vmem:[%s4] sm:$0x1] %v474
  // Predicated region
  $region10: #{discriminator_forward.8} parent=0 // pred_check
    _
  $region11: #{discriminator_forward.8} parent=0 // pred_check_branch
    %477 = sbr.rel (0) target = $region13
  $region12: #{discriminator_forward.8} parent=0 // pred_region
    _
  $region13: #{discriminator_forward.8} parent=0 // pred_fallthru
    _
  // Predicated region
  $region14: #{discriminator_forward.8} parent=0 // pred_check
    _
  $region15: #{discriminator_forward.8} parent=0 // pred_check_branch
    %479 = sbr.rel (0) target = $region17
  $region16: #{discriminator_forward.8} parent=0 // pred_region
    _
  $region17: #{discriminator_forward.8} parent=0 // pred_fallthru
    _
  // Predicated region
  $region18: #{discriminator_forward.8} parent=0 // pred_check
    _
  $region19: #{discriminator_forward.8} parent=0 // pred_check_branch
    %481 = sbr.rel (0) target = $region21
  $region20: #{discriminator_forward.8} parent=0 // pred_region
    _
  $region21: #{discriminator_forward.8} parent=0 // pred_fallthru
    _
  // Predicated region
  $region22: #{discriminator_forward.8} parent=0 // pred_check
    _
  $region23: #{discriminator_forward.8} parent=0 // pred_check_branch
    %483 = sbr.rel (0) target = $region25
  $region24: #{discriminator_forward.8} parent=0 // pred_region
    _
  $region25: #{discriminator_forward.8} parent=0 // pred_fallthru
    _
  // Predicated region
  $region26: #{discriminator_forward.8} parent=0 // pred_check
    _
  $region27: #{discriminator_forward.8} parent=0 // pred_check_branch
    %485 = sbr.rel (0) target = $region29
  $region28: #{discriminator_forward.8} parent=0 // pred_region
    _
  $region29: #{discriminator_forward.8} parent=0 // pred_fallthru
    _
  // Predicated region
  $region30: #{discriminator_forward.8} parent=0 // pred_check
    _
  $region31: #{discriminator_forward.8} parent=0 // pred_check_branch
    %487 = sbr.rel (0) target = $region33
  $region32: #{discriminator_forward.8} parent=0 // pred_region
    _
  $region33: #{discriminator_forward.8} parent=0 // pred_fallthru
    _

// kernel: tile.33
$region0: #{tile.33}
  #allocation0 [shape = 's32[1]{0}', space=sflag, size = 0x4, scoped, tag = 'scoped memory for tile.33']
  %s0 = inlined_call_operand.vmem [shape: f32[32], index: 0, kind: input, shape index: {}]
  %s1 = inlined_call_operand.vmem [shape: f32[16,32], index: 1, kind: output, shape index: {}]
  // Predicated region
  $region2: #{tile.33} parent=0 // pred_check
    _
  $region3: #{tile.33} parent=0 // pred_check_branch
    %3 = sbr.rel (0) target = $region5
  $region4: #{tile.33} parent=0 // pred_region
    _
  $region5: #{tile.33} parent=0 // pred_fallthru
    _
  %v4 = vld [vmem:[%s0] ss:$0 sm:$0xff]
  %5 = vst [vmem:[%s1] sm:$0xff] %v4
  %s6 = scalar_lea.vmem %s1, 8
  %7 = vst [vmem:[%s6] sm:$0xff] %v4

// kernel: discriminator_forward.9
$region0: #{discriminator_forward.9}
  #allocation0 [shape = 'u32[]', space=smem, size = 0x4, offset = 0x4, fixed_abs, tag = 'smem constant byte address 0x4 - core index']
  #allocation1 [shape = 'u32[144,128]{1,0:T(1,128)}', space=vmem, size = 0x12000, scoped, tag = 'internal scratch']
  %s0 = inlined_call_operand.vmem [shape: bf16[32,512], index: 0, kind: input, shape index: {}]
  %s1 = inlined_call_operand.vmem [shape: bf16[512,128], index: 1, kind: input, shape index: {}]
  %s2 = inlined_call_operand.vmem [shape: f32[1,512], index: 2, kind: input, shape index: {}]
  %s3 = inlined_call_operand.vmem [shape: f32[1,512], index: 3, kind: input, shape index: {}]
  %s4 = inlined_call_operand.vmem [shape: bf16[32,128], index: 4, kind: output, shape index: {0}]
  %s5 = inlined_call_operand.vmem [shape: f32[1,128], index: 5, kind: output, shape index: {1}]
  %s6 = inlined_call_operand.vmem [shape: f32[1,128], index: 6, kind: output, shape index: {2}]
  %7 = xla_tuple %s4, %s5, %s6
  %s8 = sld [smem:[#allocation0]]
  $region42: #{discriminator_forward.9} parent=0
    _
  %s10 = ssub.s32 1, %s8
  %s11 = scalar_select 0, %s10, %s8
  // Predicated region
  $region2: #{discriminator_forward.9} parent=0 // pred_check
    _
  $region3: #{discriminator_forward.9} parent=0 // pred_check_branch
    %13 = sbr.rel (0) target = $region5
  $region4: #{discriminator_forward.9} parent=0 // pred_region
    _
  $region5: #{discriminator_forward.9} parent=0 // pred_fallthru
    _
  // Predicated region
  $region6: #{discriminator_forward.9} parent=0 // pred_check
    _
  $region7: #{discriminator_forward.9} parent=0 // pred_check_branch
    %15 = sbr.rel (0) target = $region9
  $region8: #{discriminator_forward.9} parent=0 // pred_region
    _
  $region9: #{discriminator_forward.9} parent=0 // pred_fallthru
    _
  // Predicated region
  $region10: #{discriminator_forward.9} parent=0 // pred_check
    _
  $region11: #{discriminator_forward.9} parent=0 // pred_check_branch
    %17 = sbr.rel (0) target = $region13
  $region12: #{discriminator_forward.9} parent=0 // pred_region
    _
  $region13: #{discriminator_forward.9} parent=0 // pred_fallthru
    _
  // Predicated region
  $region14: #{discriminator_forward.9} parent=0 // pred_check
    _
  $region15: #{discriminator_forward.9} parent=0 // pred_check_branch
    %19 = sbr.rel (0) target = $region17
  $region16: #{discriminator_forward.9} parent=0 // pred_region
    _
  $region17: #{discriminator_forward.9} parent=0 // pred_fallthru
    _
  %v21 = vld [vmem:[%s0] sm:$0xff]
  %v22 = vld [vmem:[%s0 + $0x8] sm:$0xff]
  %v23 = vld [vmem:[%s0 + $0x10] sm:$0xff]
  %v24 = vld [vmem:[%s0 + $0x18] sm:$0xff]
  %v25 = vld [vmem:[%s0 + $0x20] sm:$0xff]
  %v26 = vld [vmem:[%s0 + $0x28] sm:$0xff]
  %v27 = vld [vmem:[%s0 + $0x30] sm:$0xff]
  %v28 = vld [vmem:[%s0 + $0x38] sm:$0xff]
  %v29 = vunpack.c.l.bf16 %v21
  %v30 = vunpack.c.h.bf16 %v21
  %v31 = vunpack.c.l.bf16 %v22
  %v32 = vunpack.c.h.bf16 %v22
  %v33 = vunpack.c.l.bf16 %v23
  %v34 = vunpack.c.h.bf16 %v23
  %v35 = vunpack.c.l.bf16 %v24
  %v36 = vunpack.c.h.bf16 %v24
  %v37 = vunpack.c.l.bf16 %v25
  %v38 = vunpack.c.h.bf16 %v25
  %v39 = vunpack.c.l.bf16 %v26
  %v40 = vunpack.c.h.bf16 %v26
  %v41 = vunpack.c.l.bf16 %v27
  %v42 = vunpack.c.h.bf16 %v27
  %v43 = vunpack.c.l.bf16 %v28
  %v44 = vunpack.c.h.bf16 %v28
  %v45 = vld [vmem:[%s2] sm:$0xf]
  %v47 = vlaneseq
  %v48 = vshrl.u32 %v47, 7
  %v49 = vsub.s32 0, %v48
  %v50 = vrot.slane %v45, %v49
  %v51 = vlaneseq
  %v52 = vshrl.u32 %v51, 7
  %v53 = vsub.s32 1, %v52
  %v54 = vrot.slane %v45, %v53
  %v55 = vlaneseq
  %v56 = vshrl.u32 %v55, 7
  %v57 = vsub.s32 2, %v56
  %v58 = vrot.slane %v45, %v57
  %v59 = vlaneseq
  %v60 = vshrl.u32 %v59, 7
  %v61 = vsub.s32 3, %v60
  %v62 = vrot.slane %v45, %v61
  %v67 = vmul.f32 %v29, %v50
  %v68 = vmul.f32 %v30, %v54
  %v69 = vmul.f32 %v31, %v58
  %v70 = vmul.f32 %v32, %v62
  %v71 = vmul.f32 %v33, %v50
  %v72 = vmul.f32 %v34, %v54
  %v73 = vmul.f32 %v35, %v58
  %v74 = vmul.f32 %v36, %v62
  %v75 = vmul.f32 %v37, %v50
  %v76 = vmul.f32 %v38, %v54
  %v77 = vmul.f32 %v39, %v58
  %v78 = vmul.f32 %v40, %v62
  %v79 = vmul.f32 %v41, %v50
  %v80 = vmul.f32 %v42, %v54
  %v81 = vmul.f32 %v43, %v58
  %v82 = vmul.f32 %v44, %v62
  %v83 = vld [vmem:[%s3] sm:$0xf]
  %v85 = vlaneseq
  %v86 = vshrl.u32 %v85, 7
  %v87 = vsub.s32 0, %v86
  %v88 = vrot.slane %v83, %v87
  %v89 = vlaneseq
  %v90 = vshrl.u32 %v89, 7
  %v91 = vsub.s32 1, %v90
  %v92 = vrot.slane %v83, %v91
  %v93 = vlaneseq
  %v94 = vshrl.u32 %v93, 7
  %v95 = vsub.s32 2, %v94
  %v96 = vrot.slane %v83, %v95
  %v97 = vlaneseq
  %v98 = vshrl.u32 %v97, 7
  %v99 = vsub.s32 3, %v98
  %v100 = vrot.slane %v83, %v99
  %v105 = vadd.f32 %v67, %v88
  %v106 = vadd.f32 %v68, %v92
  %v107 = vadd.f32 %v69, %v96
  %v108 = vadd.f32 %v70, %v100
  %v109 = vadd.f32 %v71, %v88
  %v110 = vadd.f32 %v72, %v92
  %v111 = vadd.f32 %v73, %v96
  %v112 = vadd.f32 %v74, %v100
  %v113 = vadd.f32 %v75, %v88
  %v114 = vadd.f32 %v76, %v92
  %v115 = vadd.f32 %v77, %v96
  %v116 = vadd.f32 %v78, %v100
  %v117 = vadd.f32 %v79, %v88
  %v118 = vadd.f32 %v80, %v92
  %v119 = vadd.f32 %v81, %v96
  %v120 = vadd.f32 %v82, %v100
  %vm121 = vcmp.ge.f32.partialorder %v105, 0.0
  %vm122 = vcmp.ge.f32.partialorder %v106, 0.0
  %vm123 = vcmp.ge.f32.partialorder %v107, 0.0
  %vm124 = vcmp.ge.f32.partialorder %v108, 0.0
  %vm125 = vcmp.ge.f32.partialorder %v109, 0.0
  %vm126 = vcmp.ge.f32.partialorder %v110, 0.0
  %vm127 = vcmp.ge.f32.partialorder %v111, 0.0
  %vm128 = vcmp.ge.f32.partialorder %v112, 0.0
  %vm129 = vcmp.ge.f32.partialorder %v113, 0.0
  %vm130 = vcmp.ge.f32.partialorder %v114, 0.0
  %vm131 = vcmp.ge.f32.partialorder %v115, 0.0
  %vm132 = vcmp.ge.f32.partialorder %v116, 0.0
  %vm133 = vcmp.ge.f32.partialorder %v117, 0.0
  %vm134 = vcmp.ge.f32.partialorder %v118, 0.0
  %vm135 = vcmp.ge.f32.partialorder %v119, 0.0
  %vm136 = vcmp.ge.f32.partialorder %v120, 0.0
  %v137 = vmul.f32 %v105, 0.2
  %v138 = vmul.f32 %v106, 0.2
  %v139 = vmul.f32 %v107, 0.2
  %v140 = vmul.f32 %v108, 0.2
  %v141 = vmul.f32 %v109, 0.2
  %v142 = vmul.f32 %v110, 0.2
  %v143 = vmul.f32 %v111, 0.2
  %v144 = vmul.f32 %v112, 0.2
  %v145 = vmul.f32 %v113, 0.2
  %v146 = vmul.f32 %v114, 0.2
  %v147 = vmul.f32 %v115, 0.2
  %v148 = vmul.f32 %v116, 0.2
  %v149 = vmul.f32 %v117, 0.2
  %v150 = vmul.f32 %v118, 0.2
  %v151 = vmul.f32 %v119, 0.2
  %v152 = vmul.f32 %v120, 0.2
  %v153 = vsel %vm121, %v105, %v137
  %v154 = vsel %vm122, %v106, %v138
  %v155 = vsel %vm123, %v107, %v139
  %v156 = vsel %vm124, %v108, %v140
  %v157 = vsel %vm125, %v109, %v141
  %v158 = vsel %vm126, %v110, %v142
  %v159 = vsel %vm127, %v111, %v143
  %v160 = vsel %vm128, %v112, %v144
  %v161 = vsel %vm129, %v113, %v145
  %v162 = vsel %vm130, %v114, %v146
  %v163 = vsel %vm131, %v115, %v147
  %v164 = vsel %vm132, %v116, %v148
  %v165 = vsel %vm133, %v117, %v149
  %v166 = vsel %vm134, %v118, %v150
  %v167 = vsel %vm135, %v119, %v151
  %v168 = vsel %vm136, %v120, %v152
  %v169 = vpack.c.bf16 %v157, %v153
  %v170 = vpack.c.bf16 %v158, %v154
  %v171 = vpack.c.bf16 %v159, %v155
  %v172 = vpack.c.bf16 %v160, %v156
  %v173 = vpack.c.bf16 %v165, %v161
  %v174 = vpack.c.bf16 %v166, %v162
  %v175 = vpack.c.bf16 %v167, %v163
  %v176 = vpack.c.bf16 %v168, %v164
  %v177 = vld [vmem:[%s1] sm:$0xf]
  %v178 = vld [vmem:[%s1 + $0x4] sm:$0xf]
  %v179 = vld [vmem:[%s1 + $0x8] sm:$0xf]
  %v180 = vld [vmem:[%s1 + $0xc] sm:$0xf]
  %v181 = vld [vmem:[%s1 + $0x10] sm:$0xf]
  %v182 = vld [vmem:[%s1 + $0x14] sm:$0xf]
  %v183 = vld [vmem:[%s1 + $0x18] sm:$0xf]
  %v184 = vld [vmem:[%s1 + $0x1c] sm:$0xf]
  %v185 = vld [vmem:[%s1 + $0x20] sm:$0xf]
  %v186 = vld [vmem:[%s1 + $0x24] sm:$0xf]
  %v187 = vld [vmem:[%s1 + $0x28] sm:$0xf]
  %v188 = vld [vmem:[%s1 + $0x2c] sm:$0xf]
  %v189 = vld [vmem:[%s1 + $0x30] sm:$0xf]
  %v190 = vld [vmem:[%s1 + $0x34] sm:$0xf]
  %v191 = vld [vmem:[%s1 + $0x38] sm:$0xf]
  %v192 = vld [vmem:[%s1 + $0x3c] sm:$0xf]
  %v193 = vld [vmem:[%s1 + $0x40] sm:$0xf]
  %v194 = vld [vmem:[%s1 + $0x44] sm:$0xf]
  %v195 = vld [vmem:[%s1 + $0x48] sm:$0xf]
  %v196 = vld [vmem:[%s1 + $0x4c] sm:$0xf]
  %v197 = vld [vmem:[%s1 + $0x50] sm:$0xf]
  %v198 = vld [vmem:[%s1 + $0x54] sm:$0xf]
  %v199 = vld [vmem:[%s1 + $0x58] sm:$0xf]
  %v200 = vld [vmem:[%s1 + $0x5c] sm:$0xf]
  %v201 = vld [vmem:[%s1 + $0x60] sm:$0xf]
  %v202 = vld [vmem:[%s1 + $0x64] sm:$0xf]
  %v203 = vld [vmem:[%s1 + $0x68] sm:$0xf]
  %v204 = vld [vmem:[%s1 + $0x6c] sm:$0xf]
  %v205 = vld [vmem:[%s1 + $0x70] sm:$0xf]
  %v206 = vld [vmem:[%s1 + $0x74] sm:$0xf]
  %v207 = vld [vmem:[%s1 + $0x78] sm:$0xf]
  %v208 = vld [vmem:[%s1 + $0x7c] sm:$0xf]
  %v209 = vld [vmem:[%s1 + $0x80] sm:$0xf]
  %v210 = vld [vmem:[%s1 + $0x84] sm:$0xf]
  %v211 = vld [vmem:[%s1 + $0x88] sm:$0xf]
  %v212 = vld [vmem:[%s1 + $0x8c] sm:$0xf]
  %v213 = vld [vmem:[%s1 + $0x90] sm:$0xf]
  %v214 = vld [vmem:[%s1 + $0x94] sm:$0xf]
  %v215 = vld [vmem:[%s1 + $0x98] sm:$0xf]
  %v216 = vld [vmem:[%s1 + $0x9c] sm:$0xf]
  %v217 = vld [vmem:[%s1 + $0xa0] sm:$0xf]
  %v218 = vld [vmem:[%s1 + $0xa4] sm:$0xf]
  %v219 = vld [vmem:[%s1 + $0xa8] sm:$0xf]
  %v220 = vld [vmem:[%s1 + $0xac] sm:$0xf]
  %v221 = vld [vmem:[%s1 + $0xb0] sm:$0xf]
  %v222 = vld [vmem:[%s1 + $0xb4] sm:$0xf]
  %v223 = vld [vmem:[%s1 + $0xb8] sm:$0xf]
  %v224 = vld [vmem:[%s1 + $0xbc] sm:$0xf]
  %v225 = vld [vmem:[%s1 + $0xc0] sm:$0xf]
  %v226 = vld [vmem:[%s1 + $0xc4] sm:$0xf]
  %v227 = vld [vmem:[%s1 + $0xc8] sm:$0xf]
  %v228 = vld [vmem:[%s1 + $0xcc] sm:$0xf]
  %v229 = vld [vmem:[%s1 + $0xd0] sm:$0xf]
  %v230 = vld [vmem:[%s1 + $0xd4] sm:$0xf]
  %v231 = vld [vmem:[%s1 + $0xd8] sm:$0xf]
  %v232 = vld [vmem:[%s1 + $0xdc] sm:$0xf]
  %v233 = vld [vmem:[%s1 + $0xe0] sm:$0xf]
  %v234 = vld [vmem:[%s1 + $0xe4] sm:$0xf]
  %v235 = vld [vmem:[%s1 + $0xe8] sm:$0xf]
  %v236 = vld [vmem:[%s1 + $0xec] sm:$0xf]
  %v237 = vld [vmem:[%s1 + $0xf0] sm:$0xf]
  %v238 = vld [vmem:[%s1 + $0xf4] sm:$0xf]
  %v239 = vld [vmem:[%s1 + $0xf8] sm:$0xf]
  %v240 = vld [vmem:[%s1 + $0xfc] sm:$0xf]
  %v305 = vunpack.c.l.b16 %v177
  %v306 = vunpack.c.l.b16 %v178
  %v307 = vunpack.c.l.b16 %v179
  %v308 = vunpack.c.l.b16 %v180
  %v309 = vunpack.c.l.b16 %v181
  %v310 = vunpack.c.l.b16 %v182
  %v311 = vunpack.c.l.b16 %v183
  %v312 = vunpack.c.l.b16 %v184
  %v313 = vunpack.c.l.b16 %v185
  %v314 = vunpack.c.l.b16 %v186
  %v315 = vunpack.c.l.b16 %v187
  %v316 = vunpack.c.l.b16 %v188
  %v317 = vunpack.c.l.b16 %v189
  %v318 = vunpack.c.l.b16 %v190
  %v319 = vunpack.c.l.b16 %v191
  %v320 = vunpack.c.l.b16 %v192
  %v321 = vunpack.c.l.b16 %v193
  %v322 = vunpack.c.l.b16 %v194
  %v323 = vunpack.c.l.b16 %v195
  %v324 = vunpack.c.l.b16 %v196
  %v325 = vunpack.c.l.b16 %v197
  %v326 = vunpack.c.l.b16 %v198
  %v327 = vunpack.c.l.b16 %v199
  %v328 = vunpack.c.l.b16 %v200
  %v329 = vunpack.c.l.b16 %v201
  %v330 = vunpack.c.l.b16 %v202
  %v331 = vunpack.c.l.b16 %v203
  %v332 = vunpack.c.l.b16 %v204
  %v333 = vunpack.c.l.b16 %v205
  %v334 = vunpack.c.l.b16 %v206
  %v335 = vunpack.c.l.b16 %v207
  %v336 = vunpack.c.l.b16 %v208
  %v337 = vunpack.c.l.b16 %v209
  %v338 = vunpack.c.l.b16 %v210
  %v339 = vunpack.c.l.b16 %v211
  %v340 = vunpack.c.l.b16 %v212
  %v341 = vunpack.c.l.b16 %v213
  %v342 = vunpack.c.l.b16 %v214
  %v343 = vunpack.c.l.b16 %v215
  %v344 = vunpack.c.l.b16 %v216
  %v345 = vunpack.c.l.b16 %v217
  %v346 = vunpack.c.l.b16 %v218
  %v347 = vunpack.c.l.b16 %v219
  %v348 = vunpack.c.l.b16 %v220
  %v349 = vunpack.c.l.b16 %v221
  %v350 = vunpack.c.l.b16 %v222
  %v351 = vunpack.c.l.b16 %v223
  %v352 = vunpack.c.l.b16 %v224
  %v353 = vunpack.c.l.b16 %v225
  %v354 = vunpack.c.l.b16 %v226
  %v355 = vunpack.c.l.b16 %v227
  %v356 = vunpack.c.l.b16 %v228
  %v357 = vunpack.c.l.b16 %v229
  %v358 = vunpack.c.l.b16 %v230
  %v359 = vunpack.c.l.b16 %v231
  %v360 = vunpack.c.l.b16 %v232
  %v361 = vunpack.c.l.b16 %v233
  %v362 = vunpack.c.l.b16 %v234
  %v363 = vunpack.c.l.b16 %v235
  %v364 = vunpack.c.l.b16 %v236
  %v365 = vunpack.c.l.b16 %v237
  %v366 = vunpack.c.l.b16 %v238
  %v367 = vunpack.c.l.b16 %v239
  %v368 = vunpack.c.l.b16 %v240
  %v369 = vpack.c.b16 %v306, %v305
  %v370 = vpack.c.b16 %v308, %v307
  %v371 = vpack.c.b16 %v310, %v309
  %v372 = vpack.c.b16 %v312, %v311
  %v373 = vpack.c.b16 %v314, %v313
  %v374 = vpack.c.b16 %v316, %v315
  %v375 = vpack.c.b16 %v318, %v317
  %v376 = vpack.c.b16 %v320, %v319
  %v377 = vpack.c.b16 %v322, %v321
  %v378 = vpack.c.b16 %v324, %v323
  %v379 = vpack.c.b16 %v326, %v325
  %v380 = vpack.c.b16 %v328, %v327
  %v381 = vpack.c.b16 %v330, %v329
  %v382 = vpack.c.b16 %v332, %v331
  %v383 = vpack.c.b16 %v334, %v333
  %v384 = vpack.c.b16 %v336, %v335
  %v385 = vpack.c.b16 %v338, %v337
  %v386 = vpack.c.b16 %v340, %v339
  %v387 = vpack.c.b16 %v342, %v341
  %v388 = vpack.c.b16 %v344, %v343
  %v389 = vpack.c.b16 %v346, %v345
  %v390 = vpack.c.b16 %v348, %v347
  %v391 = vpack.c.b16 %v350, %v349
  %v392 = vpack.c.b16 %v352, %v351
  %v393 = vpack.c.b16 %v354, %v353
  %v394 = vpack.c.b16 %v356, %v355
  %v395 = vpack.c.b16 %v358, %v357
  %v396 = vpack.c.b16 %v360, %v359
  %v397 = vpack.c.b16 %v362, %v361
  %v398 = vpack.c.b16 %v364, %v363
  %v399 = vpack.c.b16 %v366, %v365
  %v400 = vpack.c.b16 %v368, %v367
  %433 = vmatprep.subr.bf16.mxu0 0
  %434 = vmatpush1.bf16.msra.mxu0 %v369
  %435 = vmatprep.subr.bf16.mxu0 0
  %436 = vmatpush1.bf16.msra.mxu0 %v370
  %437 = vmatprep.subr.bf16.mxu0 0
  %438 = vmatpush1.bf16.msra.mxu0 %v371
  %439 = vmatprep.subr.bf16.mxu0 0
  %440 = vmatpush1.bf16.msra.mxu0 %v372
  %441 = vmatprep.subr.bf16.mxu0 0
  %442 = vmatpush1.bf16.msra.mxu0 %v373
  %443 = vmatprep.subr.bf16.mxu0 0
  %444 = vmatpush1.bf16.msra.mxu0 %v374
  %445 = vmatprep.subr.bf16.mxu0 0
  %446 = vmatpush1.bf16.msra.mxu0 %v375
  %447 = vmatprep.subr.bf16.mxu0 0
  %448 = vmatpush1.bf16.msra.mxu0 %v376
  %449 = vmatprep.subr.bf16.mxu0 0
  %450 = vmatpush1.bf16.msra.mxu0 %v377
  %451 = vmatprep.subr.bf16.mxu0 0
  %452 = vmatpush1.bf16.msra.mxu0 %v378
  %453 = vmatprep.subr.bf16.mxu0 0
  %454 = vmatpush1.bf16.msra.mxu0 %v379
  %455 = vmatprep.subr.bf16.mxu0 0
  %456 = vmatpush1.bf16.msra.mxu0 %v380
  %457 = vmatprep.subr.bf16.mxu0 0
  %458 = vmatpush1.bf16.msra.mxu0 %v381
  %459 = vmatprep.subr.bf16.mxu0 0
  %460 = vmatpush1.bf16.msra.mxu0 %v382
  %461 = vmatprep.subr.bf16.mxu0 0
  %462 = vmatpush1.bf16.msra.mxu0 %v383
  %463 = vmatprep.subr.bf16.mxu0 0
  %464 = vmatpush1.bf16.msra.mxu0 %v384
  %465 = vmatprep.mubr.bf16.mxu0 %v170
  %466 = vmatmul.mubr.bf16.gmra.mrb[0].mxu0 %v169
  %v467 = vpop.f32.mrb[0].mxu0
  %v468 = vadd.f32 0.0, %v467
  %v469 = vpop.f32.mrb[0].mxu0
  %v470 = vpop.f32.mrb[0].mxu0
  %v471 = vadd.f32 0.0, %v470
  %v472 = vpop.f32.mrb[0].mxu0
  %473 = vmatprep.mubr.bf16.mxu0 %v174
  %474 = vmatmul.mubr.bf16.gmra.mrb[0].mxu0 %v173
  %v475 = vpop.f32.mrb[0].mxu0
  %v476 = vadd.f32 0.0, %v475
  %v477 = vpop.f32.mrb[0].mxu0
  %v478 = vpop.f32.mrb[0].mxu0
  %v479 = vadd.f32 0.0, %v478
  %v480 = vpop.f32.mrb[0].mxu0
  %481 = vdwg.mxu0
  %482 = vmatprep.subr.bf16.mxu0 0
  %483 = vmatpush1.bf16.msra.mxu0 %v385
  %484 = vmatprep.subr.bf16.mxu0 0
  %485 = vmatpush1.bf16.msra.mxu0 %v386
  %486 = vmatprep.subr.bf16.mxu0 0
  %487 = vmatpush1.bf16.msra.mxu0 %v387
  %488 = vmatprep.subr.bf16.mxu0 0
  %489 = vmatpush1.bf16.msra.mxu0 %v388
  %490 = vmatprep.subr.bf16.mxu0 0
  %491 = vmatpush1.bf16.msra.mxu0 %v389
  %492 = vmatprep.subr.bf16.mxu0 0
  %493 = vmatpush1.bf16.msra.mxu0 %v390
  %494 = vmatprep.subr.bf16.mxu0 0
  %495 = vmatpush1.bf16.msra.mxu0 %v391
  %496 = vmatprep.subr.bf16.mxu0 0
  %497 = vmatpush1.bf16.msra.mxu0 %v392
  %498 = vmatprep.subr.bf16.mxu0 0
  %499 = vmatpush1.bf16.msra.mxu0 %v393
  %500 = vmatprep.subr.bf16.mxu0 0
  %501 = vmatpush1.bf16.msra.mxu0 %v394
  %502 = vmatprep.subr.bf16.mxu0 0
  %503 = vmatpush1.bf16.msra.mxu0 %v395
  %504 = vmatprep.subr.bf16.mxu0 0
  %505 = vmatpush1.bf16.msra.mxu0 %v396
  %506 = vmatprep.subr.bf16.mxu0 0
  %507 = vmatpush1.bf16.msra.mxu0 %v397
  %508 = vmatprep.subr.bf16.mxu0 0
  %509 = vmatpush1.bf16.msra.mxu0 %v398
  %510 = vmatprep.subr.bf16.mxu0 0
  %511 = vmatpush1.bf16.msra.mxu0 %v399
  %512 = vmatprep.subr.bf16.mxu0 0
  %513 = vmatpush1.bf16.msra.mxu0 %v400
  %514 = vmatprep.mubr.bf16.mxu0 %v172
  %515 = vmatmul.mubr.bf16.gmra.mrb[0].mxu0 %v171
  %v516 = vpop.f32.mrb[0].mxu0
  %v517 = vadd.f32 %v468, %v516
  %v518 = vpop.f32.mrb[0].mxu0
  %v519 = vpop.f32.mrb[0].mxu0
  %v520 = vadd.f32 %v471, %v519
  %v521 = vpop.f32.mrb[0].mxu0
  %522 = vmatprep.mubr.bf16.mxu0 %v176
  %523 = vmatmul.mubr.bf16.gmra.mrb[0].mxu0 %v175
  %v524 = vpop.f32.mrb[0].mxu0
  %v525 = vadd.f32 %v476, %v524
  %v526 = vpop.f32.mrb[0].mxu0
  %v527 = vpop.f32.mrb[0].mxu0
  %v528 = vadd.f32 %v479, %v527
  %v529 = vpop.f32.mrb[0].mxu0
  %530 = vdwg.mxu0
  %v531 = vpack.c.bf16 %v520, %v517
  %v532 = vpack.c.bf16 %v528, %v525
  %v535 = vunpack.c.l.b16 %v531
  %v536 = vunpack.c.h.b16 %v531
  %v537 = vunpack.c.l.b16 %v532
  %v538 = vunpack.c.h.b16 %v532
  %v539 = vpack.c.b16 %v535, %v535
  %v540 = vpack.c.b16 %v536, %v536
  %v541 = vpack.c.b16 %v537, %v537
  %v542 = vpack.c.b16 %v538, %v538
  %547 = vst [vmem:[%s4] sm:$0xf] %v539
  %548 = vst [vmem:[%s4 + $0x4] sm:$0xf] %v540
  %549 = vst [vmem:[%s4 + $0x8] sm:$0xf] %v541
  %550 = vst [vmem:[%s4 + $0xc] sm:$0xf] %v542
  %v551 = vadd.f32 %v517, %v520
  %v552 = vadd.f32 %v551, %v525
  %v553 = vadd.f32 %v552, %v528
  %v554 = vrot.slane %v553, 4
  %v555 = vadd.f32 %v553, %v554
  %v556 = vrot.slane %v555, 2
  %v557 = vadd.f32 %v555, %v556
  %v558 = vrot.slane %v557, 1
  %v559 = vadd.f32 %v557, %v558
  %560 = vst [vmem:[%s5] sm:$0x1] %v559
  %v561 = vmul.f32 %v517, %v517
  %v562 = vmul.f32 %v520, %v520
  %v563 = vmul.f32 %v525, %v525
  %v564 = vmul.f32 %v528, %v528
  %v565 = vadd.f32 %v561, %v562
  %v566 = vadd.f32 %v565, %v563
  %v567 = vadd.f32 %v566, %v564
  %v568 = vrot.slane %v567, 4
  %v569 = vadd.f32 %v567, %v568
  %v570 = vrot.slane %v569, 2
  %v571 = vadd.f32 %v569, %v570
  %v572 = vrot.slane %v571, 1
  %v573 = vadd.f32 %v571, %v572
  %574 = vst [vmem:[%s6] sm:$0x1] %v573
  // Predicated region
  $region18: #{discriminator_forward.9} parent=0 // pred_check
    _
  $region19: #{discriminator_forward.9} parent=0 // pred_check_branch
    %576 = sbr.rel (0) target = $region21
  $region20: #{discriminator_forward.9} parent=0 // pred_region
    _
  $region21: #{discriminator_forward.9} parent=0 // pred_fallthru
    _
  // Predicated region
  $region22: #{discriminator_forward.9} parent=0 // pred_check
    _
  $region23: #{discriminator_forward.9} parent=0 // pred_check_branch
    %578 = sbr.rel (0) target = $region25
  $region24: #{discriminator_forward.9} parent=0 // pred_region
    _
  $region25: #{discriminator_forward.9} parent=0 // pred_fallthru
    _
  // Predicated region
  $region26: #{discriminator_forward.9} parent=0 // pred_check
    _
  $region27: #{discriminator_forward.9} parent=0 // pred_check_branch
    %580 = sbr.rel (0) target = $region29
  $region28: #{discriminator_forward.9} parent=0 // pred_region
    _
  $region29: #{discriminator_forward.9} parent=0 // pred_fallthru
    _
  // Predicated region
  $region30: #{discriminator_forward.9} parent=0 // pred_check
    _
  $region31: #{discriminator_forward.9} parent=0 // pred_check_branch
    %582 = sbr.rel (0) target = $region33
  $region32: #{discriminator_forward.9} parent=0 // pred_region
    _
  $region33: #{discriminator_forward.9} parent=0 // pred_fallthru
    _
  // Predicated region
  $region34: #{discriminator_forward.9} parent=0 // pred_check
    _
  $region35: #{discriminator_forward.9} parent=0 // pred_check_branch
    %584 = sbr.rel (0) target = $region37
  $region36: #{discriminator_forward.9} parent=0 // pred_region
    _
  $region37: #{discriminator_forward.9} parent=0 // pred_fallthru
    _
  // Predicated region
  $region38: #{discriminator_forward.9} parent=0 // pred_check
    _
  $region39: #{discriminator_forward.9} parent=0 // pred_check_branch
    %586 = sbr.rel (0) target = $region41
  $region40: #{discriminator_forward.9} parent=0 // pred_region
    _
  $region41: #{discriminator_forward.9} parent=0 // pred_fallthru
    _

// kernel: tile.43
$region0: #{tile.43}
  #allocation0 [shape = 's32[1]{0}', space=sflag, size = 0x4, scoped, tag = 'scoped memory for tile.43']
  %s0 = inlined_call_operand.vmem [shape: f32[64], index: 0, kind: input, shape index: {}]
  %s1 = inlined_call_operand.vmem [shape: f32[16,64], index: 1, kind: output, shape index: {}]
  // Predicated region
  $region2: #{tile.43} parent=0 // pred_check
    _
  $region3: #{tile.43} parent=0 // pred_check_branch
    %3 = sbr.rel (0) target = $region5
  $region4: #{tile.43} parent=0 // pred_region
    _
  $region5: #{tile.43} parent=0 // pred_fallthru
    _
  %v4 = vld [vmem:[%s0] ss:$0 sm:$0xff]
  %5 = vst [vmem:[%s1] sm:$0xff] %v4
  %s6 = scalar_lea.vmem %s1, 8
  %7 = vst [vmem:[%s6] sm:$0xff] %v4

// kernel: discriminator_forward.10
$region0: #{discriminator_forward.10}
  #allocation0 [shape = 'u32[]', space=smem, size = 0x4, offset = 0x4, fixed_abs, tag = 'smem constant byte address 0x4 - core index']
  #allocation1 [shape = 'u32[144,128]{1,0:T(1,128)}', space=vmem, size = 0x12000, scoped, tag = 'internal scratch']
  %s0 = inlined_call_operand.vmem [shape: bf16[8,1024], index: 0, kind: input, shape index: {}]
  %s1 = inlined_call_operand.vmem [shape: bf16[1024,128], index: 1, kind: input, shape index: {}]
  %s2 = inlined_call_operand.vmem [shape: f32[1,1024], index: 2, kind: input, shape index: {}]
  %s3 = inlined_call_operand.vmem [shape: f32[1,1024], index: 3, kind: input, shape index: {}]
  %s4 = inlined_call_operand.vmem [shape: bf16[8,128], index: 4, kind: output, shape index: {0}]
  %s5 = inlined_call_operand.vmem [shape: f32[1,128], index: 5, kind: output, shape index: {1}]
  %s6 = inlined_call_operand.vmem [shape: f32[1,128], index: 6, kind: output, shape index: {2}]
  %7 = xla_tuple %s4, %s5, %s6
  %s8 = sld [smem:[#allocation0]]
  $region42: #{discriminator_forward.10} parent=0
    _
  %s10 = ssub.s32 1, %s8
  %s11 = scalar_select 0, %s10, %s8
  // Predicated region
  $region2: #{discriminator_forward.10} parent=0 // pred_check
    _
  $region3: #{discriminator_forward.10} parent=0 // pred_check_branch
    %13 = sbr.rel (0) target = $region5
  $region4: #{discriminator_forward.10} parent=0 // pred_region
    _
  $region5: #{discriminator_forward.10} parent=0 // pred_fallthru
    _
  // Predicated region
  $region6: #{discriminator_forward.10} parent=0 // pred_check
    _
  $region7: #{discriminator_forward.10} parent=0 // pred_check_branch
    %15 = sbr.rel (0) target = $region9
  $region8: #{discriminator_forward.10} parent=0 // pred_region
    _
  $region9: #{discriminator_forward.10} parent=0 // pred_fallthru
    _
  // Predicated region
  $region10: #{discriminator_forward.10} parent=0 // pred_check
    _
  $region11: #{discriminator_forward.10} parent=0 // pred_check_branch
    %17 = sbr.rel (0) target = $region13
  $region12: #{discriminator_forward.10} parent=0 // pred_region
    _
  $region13: #{discriminator_forward.10} parent=0 // pred_fallthru
    _
  // Predicated region
  $region14: #{discriminator_forward.10} parent=0 // pred_check
    _
  $region15: #{discriminator_forward.10} parent=0 // pred_check_branch
    %19 = sbr.rel (0) target = $region17
  $region16: #{discriminator_forward.10} parent=0 // pred_region
    _
  $region17: #{discriminator_forward.10} parent=0 // pred_fallthru
    _
  %v21 = vld [vmem:[%s0] sm:$0xff]
  %v22 = vld [vmem:[%s0 + $0x8] sm:$0xff]
  %v23 = vld [vmem:[%s0 + $0x10] sm:$0xff]
  %v24 = vld [vmem:[%s0 + $0x18] sm:$0xff]
  %v25 = vunpack.c.l.bf16 %v21
  %v26 = vunpack.c.h.bf16 %v21
  %v27 = vunpack.c.l.bf16 %v22
  %v28 = vunpack.c.h.bf16 %v22
  %v29 = vunpack.c.l.bf16 %v23
  %v30 = vunpack.c.h.bf16 %v23
  %v31 = vunpack.c.l.bf16 %v24
  %v32 = vunpack.c.h.bf16 %v24
  %v33 = vld [vmem:[%s2] sm:$0xff]
  %v35 = vlaneseq
  %v36 = vshrl.u32 %v35, 7
  %v37 = vsub.s32 0, %v36
  %v38 = vrot.slane %v33, %v37
  %v39 = vlaneseq
  %v40 = vshrl.u32 %v39, 7
  %v41 = vsub.s32 1, %v40
  %v42 = vrot.slane %v33, %v41
  %v43 = vlaneseq
  %v44 = vshrl.u32 %v43, 7
  %v45 = vsub.s32 2, %v44
  %v46 = vrot.slane %v33, %v45
  %v47 = vlaneseq
  %v48 = vshrl.u32 %v47, 7
  %v49 = vsub.s32 3, %v48
  %v50 = vrot.slane %v33, %v49
  %v51 = vlaneseq
  %v52 = vshrl.u32 %v51, 7
  %v53 = vsub.s32 4, %v52
  %v54 = vrot.slane %v33, %v53
  %v55 = vlaneseq
  %v56 = vshrl.u32 %v55, 7
  %v57 = vsub.s32 5, %v56
  %v58 = vrot.slane %v33, %v57
  %v59 = vlaneseq
  %v60 = vshrl.u32 %v59, 7
  %v61 = vsub.s32 6, %v60
  %v62 = vrot.slane %v33, %v61
  %v63 = vlaneseq
  %v64 = vshrl.u32 %v63, 7
  %v65 = vsub.s32 7, %v64
  %v66 = vrot.slane %v33, %v65
  %v75 = vmul.f32 %v25, %v38
  %v76 = vmul.f32 %v26, %v42
  %v77 = vmul.f32 %v27, %v46
  %v78 = vmul.f32 %v28, %v50
  %v79 = vmul.f32 %v29, %v54
  %v80 = vmul.f32 %v30, %v58
  %v81 = vmul.f32 %v31, %v62
  %v82 = vmul.f32 %v32, %v66
  %v83 = vld [vmem:[%s3] sm:$0xff]
  %v85 = vlaneseq
  %v86 = vshrl.u32 %v85, 7
  %v87 = vsub.s32 0, %v86
  %v88 = vrot.slane %v83, %v87
  %v89 = vlaneseq
  %v90 = vshrl.u32 %v89, 7
  %v91 = vsub.s32 1, %v90
  %v92 = vrot.slane %v83, %v91
  %v93 = vlaneseq
  %v94 = vshrl.u32 %v93, 7
  %v95 = vsub.s32 2, %v94
  %v96 = vrot.slane %v83, %v95
  %v97 = vlaneseq
  %v98 = vshrl.u32 %v97, 7
  %v99 = vsub.s32 3, %v98
  %v100 = vrot.slane %v83, %v99
  %v101 = vlaneseq
  %v102 = vshrl.u32 %v101, 7
  %v103 = vsub.s32 4, %v102
  %v104 = vrot.slane %v83, %v103
  %v105 = vlaneseq
  %v106 = vshrl.u32 %v105, 7
  %v107 = vsub.s32 5, %v106
  %v108 = vrot.slane %v83, %v107
  %v109 = vlaneseq
  %v110 = vshrl.u32 %v109, 7
  %v111 = vsub.s32 6, %v110
  %v112 = vrot.slane %v83, %v111
  %v113 = vlaneseq
  %v114 = vshrl.u32 %v113, 7
  %v115 = vsub.s32 7, %v114
  %v116 = vrot.slane %v83, %v115
  %v125 = vadd.f32 %v75, %v88
  %v126 = vadd.f32 %v76, %v92
  %v127 = vadd.f32 %v77, %v96
  %v128 = vadd.f32 %v78, %v100
  %v129 = vadd.f32 %v79, %v104
  %v130 = vadd.f32 %v80, %v108
  %v131 = vadd.f32 %v81, %v112
  %v132 = vadd.f32 %v82, %v116
  %vm133 = vcmp.ge.f32.partialorder %v125, 0.0
  %vm134 = vcmp.ge.f32.partialorder %v126, 0.0
  %vm135 = vcmp.ge.f32.partialorder %v127, 0.0
  %vm136 = vcmp.ge.f32.partialorder %v128, 0.0
  %vm137 = vcmp.ge.f32.partialorder %v129, 0.0
  %vm138 = vcmp.ge.f32.partialorder %v130, 0.0
  %vm139 = vcmp.ge.f32.partialorder %v131, 0.0
  %vm140 = vcmp.ge.f32.partialorder %v132, 0.0
  %v141 = vmul.f32 %v125, 0.2
  %v142 = vmul.f32 %v126, 0.2
  %v143 = vmul.f32 %v127, 0.2
  %v144 = vmul.f32 %v128, 0.2
  %v145 = vmul.f32 %v129, 0.2
  %v146 = vmul.f32 %v130, 0.2
  %v147 = vmul.f32 %v131, 0.2
  %v148 = vmul.f32 %v132, 0.2
  %v149 = vsel %vm133, %v125, %v141
  %v150 = vsel %vm134, %v126, %v142
  %v151 = vsel %vm135, %v127, %v143
  %v152 = vsel %vm136, %v128, %v144
  %v153 = vsel %vm137, %v129, %v145
  %v154 = vsel %vm138, %v130, %v146
  %v155 = vsel %vm139, %v131, %v147
  %v156 = vsel %vm140, %v132, %v148
  %v157 = vpack.c.bf16 %v149, %v149
  %v158 = vpack.c.bf16 %v150, %v150
  %v159 = vpack.c.bf16 %v151, %v151
  %v160 = vpack.c.bf16 %v152, %v152
  %v161 = vpack.c.bf16 %v153, %v153
  %v162 = vpack.c.bf16 %v154, %v154
  %v163 = vpack.c.bf16 %v155, %v155
  %v164 = vpack.c.bf16 %v156, %v156
  %v165 = vld [vmem:[%s1] sm:$0xf]
  %v166 = vld [vmem:[%s1 + $0x4] sm:$0xf]
  %v167 = vld [vmem:[%s1 + $0x8] sm:$0xf]
  %v168 = vld [vmem:[%s1 + $0xc] sm:$0xf]
  %v169 = vld [vmem:[%s1 + $0x10] sm:$0xf]
  %v170 = vld [vmem:[%s1 + $0x14] sm:$0xf]
  %v171 = vld [vmem:[%s1 + $0x18] sm:$0xf]
  %v172 = vld [vmem:[%s1 + $0x1c] sm:$0xf]
  %v173 = vld [vmem:[%s1 + $0x20] sm:$0xf]
  %v174 = vld [vmem:[%s1 + $0x24] sm:$0xf]
  %v175 = vld [vmem:[%s1 + $0x28] sm:$0xf]
  %v176 = vld [vmem:[%s1 + $0x2c] sm:$0xf]
  %v177 = vld [vmem:[%s1 + $0x30] sm:$0xf]
  %v178 = vld [vmem:[%s1 + $0x34] sm:$0xf]
  %v179 = vld [vmem:[%s1 + $0x38] sm:$0xf]
  %v180 = vld [vmem:[%s1 + $0x3c] sm:$0xf]
  %v181 = vld [vmem:[%s1 + $0x40] sm:$0xf]
  %v182 = vld [vmem:[%s1 + $0x44] sm:$0xf]
  %v183 = vld [vmem:[%s1 + $0x48] sm:$0xf]
  %v184 = vld [vmem:[%s1 + $0x4c] sm:$0xf]
  %v185 = vld [vmem:[%s1 + $0x50] sm:$0xf]
  %v186 = vld [vmem:[%s1 + $0x54] sm:$0xf]
  %v187 = vld [vmem:[%s1 + $0x58] sm:$0xf]
  %v188 = vld [vmem:[%s1 + $0x5c] sm:$0xf]
  %v189 = vld [vmem:[%s1 + $0x60] sm:$0xf]
  %v190 = vld [vmem:[%s1 + $0x64] sm:$0xf]
  %v191 = vld [vmem:[%s1 + $0x68] sm:$0xf]
  %v192 = vld [vmem:[%s1 + $0x6c] sm:$0xf]
  %v193 = vld [vmem:[%s1 + $0x70] sm:$0xf]
  %v194 = vld [vmem:[%s1 + $0x74] sm:$0xf]
  %v195 = vld [vmem:[%s1 + $0x78] sm:$0xf]
  %v196 = vld [vmem:[%s1 + $0x7c] sm:$0xf]
  %v197 = vld [vmem:[%s1 + $0x80] sm:$0xf]
  %v198 = vld [vmem:[%s1 + $0x84] sm:$0xf]
  %v199 = vld [vmem:[%s1 + $0x88] sm:$0xf]
  %v200 = vld [vmem:[%s1 + $0x8c] sm:$0xf]
  %v201 = vld [vmem:[%s1 + $0x90] sm:$0xf]
  %v202 = vld [vmem:[%s1 + $0x94] sm:$0xf]
  %v203 = vld [vmem:[%s1 + $0x98] sm:$0xf]
  %v204 = vld [vmem:[%s1 + $0x9c] sm:$0xf]
  %v205 = vld [vmem:[%s1 + $0xa0] sm:$0xf]
  %v206 = vld [vmem:[%s1 + $0xa4] sm:$0xf]
  %v207 = vld [vmem:[%s1 + $0xa8] sm:$0xf]
  %v208 = vld [vmem:[%s1 + $0xac] sm:$0xf]
  %v209 = vld [vmem:[%s1 + $0xb0] sm:$0xf]
  %v210 = vld [vmem:[%s1 + $0xb4] sm:$0xf]
  %v211 = vld [vmem:[%s1 + $0xb8] sm:$0xf]
  %v212 = vld [vmem:[%s1 + $0xbc] sm:$0xf]
  %v213 = vld [vmem:[%s1 + $0xc0] sm:$0xf]
  %v214 = vld [vmem:[%s1 + $0xc4] sm:$0xf]
  %v215 = vld [vmem:[%s1 + $0xc8] sm:$0xf]
  %v216 = vld [vmem:[%s1 + $0xcc] sm:$0xf]
  %v217 = vld [vmem:[%s1 + $0xd0] sm:$0xf]
  %v218 = vld [vmem:[%s1 + $0xd4] sm:$0xf]
  %v219 = vld [vmem:[%s1 + $0xd8] sm:$0xf]
  %v220 = vld [vmem:[%s1 + $0xdc] sm:$0xf]
  %v221 = vld [vmem:[%s1 + $0xe0] sm:$0xf]
  %v222 = vld [vmem:[%s1 + $0xe4] sm:$0xf]
  %v223 = vld [vmem:[%s1 + $0xe8] sm:$0xf]
  %v224 = vld [vmem:[%s1 + $0xec] sm:$0xf]
  %v225 = vld [vmem:[%s1 + $0xf0] sm:$0xf]
  %v226 = vld [vmem:[%s1 + $0xf4] sm:$0xf]
  %v227 = vld [vmem:[%s1 + $0xf8] sm:$0xf]
  %v228 = vld [vmem:[%s1 + $0xfc] sm:$0xf]
  %v229 = vld [vmem:[%s1 + $0x100] sm:$0xf]
  %v230 = vld [vmem:[%s1 + $0x104] sm:$0xf]
  %v231 = vld [vmem:[%s1 + $0x108] sm:$0xf]
  %v232 = vld [vmem:[%s1 + $0x10c] sm:$0xf]
  %v233 = vld [vmem:[%s1 + $0x110] sm:$0xf]
  %v234 = vld [vmem:[%s1 + $0x114] sm:$0xf]
  %v235 = vld [vmem:[%s1 + $0x118] sm:$0xf]
  %v236 = vld [vmem:[%s1 + $0x11c] sm:$0xf]
  %v237 = vld [vmem:[%s1 + $0x120] sm:$0xf]
  %v238 = vld [vmem:[%s1 + $0x124] sm:$0xf]
  %v239 = vld [vmem:[%s1 + $0x128] sm:$0xf]
  %v240 = vld [vmem:[%s1 + $0x12c] sm:$0xf]
  %v241 = vld [vmem:[%s1 + $0x130] sm:$0xf]
  %v242 = vld [vmem:[%s1 + $0x134] sm:$0xf]
  %v243 = vld [vmem:[%s1 + $0x138] sm:$0xf]
  %v244 = vld [vmem:[%s1 + $0x13c] sm:$0xf]
  %v245 = vld [vmem:[%s1 + $0x140] sm:$0xf]
  %v246 = vld [vmem:[%s1 + $0x144] sm:$0xf]
  %v247 = vld [vmem:[%s1 + $0x148] sm:$0xf]
  %v248 = vld [vmem:[%s1 + $0x14c] sm:$0xf]
  %v249 = vld [vmem:[%s1 + $0x150] sm:$0xf]
  %v250 = vld [vmem:[%s1 + $0x154] sm:$0xf]
  %v251 = vld [vmem:[%s1 + $0x158] sm:$0xf]
  %v252 = vld [vmem:[%s1 + $0x15c] sm:$0xf]
  %v253 = vld [vmem:[%s1 + $0x160] sm:$0xf]
  %v254 = vld [vmem:[%s1 + $0x164] sm:$0xf]
  %v255 = vld [vmem:[%s1 + $0x168] sm:$0xf]
  %v256 = vld [vmem:[%s1 + $0x16c] sm:$0xf]
  %v257 = vld [vmem:[%s1 + $0x170] sm:$0xf]
  %v258 = vld [vmem:[%s1 + $0x174] sm:$0xf]
  %v259 = vld [vmem:[%s1 + $0x178] sm:$0xf]
  %v260 = vld [vmem:[%s1 + $0x17c] sm:$0xf]
  %v261 = vld [vmem:[%s1 + $0x180] sm:$0xf]
  %v262 = vld [vmem:[%s1 + $0x184] sm:$0xf]
  %v263 = vld [vmem:[%s1 + $0x188] sm:$0xf]
  %v264 = vld [vmem:[%s1 + $0x18c] sm:$0xf]
  %v265 = vld [vmem:[%s1 + $0x190] sm:$0xf]
  %v266 = vld [vmem:[%s1 + $0x194] sm:$0xf]
  %v267 = vld [vmem:[%s1 + $0x198] sm:$0xf]
  %v268 = vld [vmem:[%s1 + $0x19c] sm:$0xf]
  %v269 = vld [vmem:[%s1 + $0x1a0] sm:$0xf]
  %v270 = vld [vmem:[%s1 + $0x1a4] sm:$0xf]
  %v271 = vld [vmem:[%s1 + $0x1a8] sm:$0xf]
  %v272 = vld [vmem:[%s1 + $0x1ac] sm:$0xf]
  %v273 = vld [vmem:[%s1 + $0x1b0] sm:$0xf]
  %v274 = vld [vmem:[%s1 + $0x1b4] sm:$0xf]
  %v275 = vld [vmem:[%s1 + $0x1b8] sm:$0xf]
  %v276 = vld [vmem:[%s1 + $0x1bc] sm:$0xf]
  %v277 = vld [vmem:[%s1 + $0x1c0] sm:$0xf]
  %v278 = vld [vmem:[%s1 + $0x1c4] sm:$0xf]
  %v279 = vld [vmem:[%s1 + $0x1c8] sm:$0xf]
  %v280 = vld [vmem:[%s1 + $0x1cc] sm:$0xf]
  %v281 = vld [vmem:[%s1 + $0x1d0] sm:$0xf]
  %v282 = vld [vmem:[%s1 + $0x1d4] sm:$0xf]
  %v283 = vld [vmem:[%s1 + $0x1d8] sm:$0xf]
  %v284 = vld [vmem:[%s1 + $0x1dc] sm:$0xf]
  %v285 = vld [vmem:[%s1 + $0x1e0] sm:$0xf]
  %v286 = vld [vmem:[%s1 + $0x1e4] sm:$0xf]
  %v287 = vld [vmem:[%s1 + $0x1e8] sm:$0xf]
  %v288 = vld [vmem:[%s1 + $0x1ec] sm:$0xf]
  %v289 = vld [vmem:[%s1 + $0x1f0] sm:$0xf]
  %v290 = vld [vmem:[%s1 + $0x1f4] sm:$0xf]
  %v291 = vld [vmem:[%s1 + $0x1f8] sm:$0xf]
  %v292 = vld [vmem:[%s1 + $0x1fc] sm:$0xf]
  %v421 = vunpack.c.l.b16 %v165
  %v422 = vunpack.c.l.b16 %v166
  %v423 = vunpack.c.l.b16 %v167
  %v424 = vunpack.c.l.b16 %v168
  %v425 = vunpack.c.l.b16 %v169
  %v426 = vunpack.c.l.b16 %v170
  %v427 = vunpack.c.l.b16 %v171
  %v428 = vunpack.c.l.b16 %v172
  %v429 = vunpack.c.l.b16 %v173
  %v430 = vunpack.c.l.b16 %v174
  %v431 = vunpack.c.l.b16 %v175
  %v432 = vunpack.c.l.b16 %v176
  %v433 = vunpack.c.l.b16 %v177
  %v434 = vunpack.c.l.b16 %v178
  %v435 = vunpack.c.l.b16 %v179
  %v436 = vunpack.c.l.b16 %v180
  %v437 = vunpack.c.l.b16 %v181
  %v438 = vunpack.c.l.b16 %v182
  %v439 = vunpack.c.l.b16 %v183
  %v440 = vunpack.c.l.b16 %v184
  %v441 = vunpack.c.l.b16 %v185
  %v442 = vunpack.c.l.b16 %v186
  %v443 = vunpack.c.l.b16 %v187
  %v444 = vunpack.c.l.b16 %v188
  %v445 = vunpack.c.l.b16 %v189
  %v446 = vunpack.c.l.b16 %v190
  %v447 = vunpack.c.l.b16 %v191
  %v448 = vunpack.c.l.b16 %v192
  %v449 = vunpack.c.l.b16 %v193
  %v450 = vunpack.c.l.b16 %v194
  %v451 = vunpack.c.l.b16 %v195
  %v452 = vunpack.c.l.b16 %v196
  %v453 = vunpack.c.l.b16 %v197
  %v454 = vunpack.c.l.b16 %v198
  %v455 = vunpack.c.l.b16 %v199
  %v456 = vunpack.c.l.b16 %v200
  %v457 = vunpack.c.l.b16 %v201
  %v458 = vunpack.c.l.b16 %v202
  %v459 = vunpack.c.l.b16 %v203
  %v460 = vunpack.c.l.b16 %v204
  %v461 = vunpack.c.l.b16 %v205
  %v462 = vunpack.c.l.b16 %v206
  %v463 = vunpack.c.l.b16 %v207
  %v464 = vunpack.c.l.b16 %v208
  %v465 = vunpack.c.l.b16 %v209
  %v466 = vunpack.c.l.b16 %v210
  %v467 = vunpack.c.l.b16 %v211
  %v468 = vunpack.c.l.b16 %v212
  %v469 = vunpack.c.l.b16 %v213
  %v470 = vunpack.c.l.b16 %v214
  %v471 = vunpack.c.l.b16 %v215
  %v472 = vunpack.c.l.b16 %v216
  %v473 = vunpack.c.l.b16 %v217
  %v474 = vunpack.c.l.b16 %v218
  %v475 = vunpack.c.l.b16 %v219
  %v476 = vunpack.c.l.b16 %v220
  %v477 = vunpack.c.l.b16 %v221
  %v478 = vunpack.c.l.b16 %v222
  %v479 = vunpack.c.l.b16 %v223
  %v480 = vunpack.c.l.b16 %v224
  %v481 = vunpack.c.l.b16 %v225
  %v482 = vunpack.c.l.b16 %v226
  %v483 = vunpack.c.l.b16 %v227
  %v484 = vunpack.c.l.b16 %v228
  %v485 = vunpack.c.l.b16 %v229
  %v486 = vunpack.c.l.b16 %v230
  %v487 = vunpack.c.l.b16 %v231
  %v488 = vunpack.c.l.b16 %v232
  %v489 = vunpack.c.l.b16 %v233
  %v490 = vunpack.c.l.b16 %v234
  %v491 = vunpack.c.l.b16 %v235
  %v492 = vunpack.c.l.b16 %v236
  %v493 = vunpack.c.l.b16 %v237
  %v494 = vunpack.c.l.b16 %v238
  %v495 = vunpack.c.l.b16 %v239
  %v496 = vunpack.c.l.b16 %v240
  %v497 = vunpack.c.l.b16 %v241
  %v498 = vunpack.c.l.b16 %v242
  %v499 = vunpack.c.l.b16 %v243
  %v500 = vunpack.c.l.b16 %v244
  %v501 = vunpack.c.l.b16 %v245
  %v502 = vunpack.c.l.b16 %v246
  %v503 = vunpack.c.l.b16 %v247
  %v504 = vunpack.c.l.b16 %v248
  %v505 = vunpack.c.l.b16 %v249
  %v506 = vunpack.c.l.b16 %v250
  %v507 = vunpack.c.l.b16 %v251
  %v508 = vunpack.c.l.b16 %v252
  %v509 = vunpack.c.l.b16 %v253
  %v510 = vunpack.c.l.b16 %v254
  %v511 = vunpack.c.l.b16 %v255
  %v512 = vunpack.c.l.b16 %v256
  %v513 = vunpack.c.l.b16 %v257
  %v514 = vunpack.c.l.b16 %v258
  %v515 = vunpack.c.l.b16 %v259
  %v516 = vunpack.c.l.b16 %v260
  %v517 = vunpack.c.l.b16 %v261
  %v518 = vunpack.c.l.b16 %v262
  %v519 = vunpack.c.l.b16 %v263
  %v520 = vunpack.c.l.b16 %v264
  %v521 = vunpack.c.l.b16 %v265
  %v522 = vunpack.c.l.b16 %v266
  %v523 = vunpack.c.l.b16 %v267
  %v524 = vunpack.c.l.b16 %v268
  %v525 = vunpack.c.l.b16 %v269
  %v526 = vunpack.c.l.b16 %v270
  %v527 = vunpack.c.l.b16 %v271
  %v528 = vunpack.c.l.b16 %v272
  %v529 = vunpack.c.l.b16 %v273
  %v530 = vunpack.c.l.b16 %v274
  %v531 = vunpack.c.l.b16 %v275
  %v532 = vunpack.c.l.b16 %v276
  %v533 = vunpack.c.l.b16 %v277
  %v534 = vunpack.c.l.b16 %v278
  %v535 = vunpack.c.l.b16 %v279
  %v536 = vunpack.c.l.b16 %v280
  %v537 = vunpack.c.l.b16 %v281
  %v538 = vunpack.c.l.b16 %v282
  %v539 = vunpack.c.l.b16 %v283
  %v540 = vunpack.c.l.b16 %v284
  %v541 = vunpack.c.l.b16 %v285
  %v542 = vunpack.c.l.b16 %v286
  %v543 = vunpack.c.l.b16 %v287
  %v544 = vunpack.c.l.b16 %v288
  %v545 = vunpack.c.l.b16 %v289
  %v546 = vunpack.c.l.b16 %v290
  %v547 = vunpack.c.l.b16 %v291
  %v548 = vunpack.c.l.b16 %v292
  %v549 = vpack.c.b16 %v422, %v421
  %v550 = vpack.c.b16 %v424, %v423
  %v551 = vpack.c.b16 %v426, %v425
  %v552 = vpack.c.b16 %v428, %v427
  %v553 = vpack.c.b16 %v430, %v429
  %v554 = vpack.c.b16 %v432, %v431
  %v555 = vpack.c.b16 %v434, %v433
  %v556 = vpack.c.b16 %v436, %v435
  %v557 = vpack.c.b16 %v438, %v437
  %v558 = vpack.c.b16 %v440, %v439
  %v559 = vpack.c.b16 %v442, %v441
  %v560 = vpack.c.b16 %v444, %v443
  %v561 = vpack.c.b16 %v446, %v445
  %v562 = vpack.c.b16 %v448, %v447
  %v563 = vpack.c.b16 %v450, %v449
  %v564 = vpack.c.b16 %v452, %v451
  %v565 = vpack.c.b16 %v454, %v453
  %v566 = vpack.c.b16 %v456, %v455
  %v567 = vpack.c.b16 %v458, %v457
  %v568 = vpack.c.b16 %v460, %v459
  %v569 = vpack.c.b16 %v462, %v461
  %v570 = vpack.c.b16 %v464, %v463
  %v571 = vpack.c.b16 %v466, %v465
  %v572 = vpack.c.b16 %v468, %v467
  %v573 = vpack.c.b16 %v470, %v469
  %v574 = vpack.c.b16 %v472, %v471
  %v575 = vpack.c.b16 %v474, %v473
  %v576 = vpack.c.b16 %v476, %v475
  %v577 = vpack.c.b16 %v478, %v477
  %v578 = vpack.c.b16 %v480, %v479
  %v579 = vpack.c.b16 %v482, %v481
  %v580 = vpack.c.b16 %v484, %v483
  %v581 = vpack.c.b16 %v486, %v485
  %v582 = vpack.c.b16 %v488, %v487
  %v583 = vpack.c.b16 %v490, %v489
  %v584 = vpack.c.b16 %v492, %v491
  %v585 = vpack.c.b16 %v494, %v493
  %v586 = vpack.c.b16 %v496, %v495
  %v587 = vpack.c.b16 %v498, %v497
  %v588 = vpack.c.b16 %v500, %v499
  %v589 = vpack.c.b16 %v502, %v501
  %v590 = vpack.c.b16 %v504, %v503
  %v591 = vpack.c.b16 %v506, %v505
  %v592 = vpack.c.b16 %v508, %v507
  %v593 = vpack.c.b16 %v510, %v509
  %v594 = vpack.c.b16 %v512, %v511
  %v595 = vpack.c.b16 %v514, %v513
  %v596 = vpack.c.b16 %v516, %v515
  %v597 = vpack.c.b16 %v518, %v517
  %v598 = vpack.c.b16 %v520, %v519
  %v599 = vpack.c.b16 %v522, %v521
  %v600 = vpack.c.b16 %v524, %v523
  %v601 = vpack.c.b16 %v526, %v525
  %v602 = vpack.c.b16 %v528, %v527
  %v603 = vpack.c.b16 %v530, %v529
  %v604 = vpack.c.b16 %v532, %v531
  %v605 = vpack.c.b16 %v534, %v533
  %v606 = vpack.c.b16 %v536, %v535
  %v607 = vpack.c.b16 %v538, %v537
  %v608 = vpack.c.b16 %v540, %v539
  %v609 = vpack.c.b16 %v542, %v541
  %v610 = vpack.c.b16 %v544, %v543
  %v611 = vpack.c.b16 %v546, %v545
  %v612 = vpack.c.b16 %v548, %v547
  %677 = vmatprep.subr.bf16.mxu0 0
  %678 = vmatpush1.bf16.msra.mxu0 %v549
  %679 = vmatprep.subr.bf16.mxu0 0
  %680 = vmatpush1.bf16.msra.mxu0 %v550
  %681 = vmatprep.subr.bf16.mxu0 0
  %682 = vmatpush1.bf16.msra.mxu0 %v551
  %683 = vmatprep.subr.bf16.mxu0 0
  %684 = vmatpush1.bf16.msra.mxu0 %v552
  %685 = vmatprep.subr.bf16.mxu0 0
  %686 = vmatpush1.bf16.msra.mxu0 %v553
  %687 = vmatprep.subr.bf16.mxu0 0
  %688 = vmatpush1.bf16.msra.mxu0 %v554
  %689 = vmatprep.subr.bf16.mxu0 0
  %690 = vmatpush1.bf16.msra.mxu0 %v555
  %691 = vmatprep.subr.bf16.mxu0 0
  %692 = vmatpush1.bf16.msra.mxu0 %v556
  %693 = vmatprep.subr.bf16.mxu0 0
  %694 = vmatpush1.bf16.msra.mxu0 %v557
  %695 = vmatprep.subr.bf16.mxu0 0
  %696 = vmatpush1.bf16.msra.mxu0 %v558
  %697 = vmatprep.subr.bf16.mxu0 0
  %698 = vmatpush1.bf16.msra.mxu0 %v559
  %699 = vmatprep.subr.bf16.mxu0 0
  %700 = vmatpush1.bf16.msra.mxu0 %v560
  %701 = vmatprep.subr.bf16.mxu0 0
  %702 = vmatpush1.bf16.msra.mxu0 %v561
  %703 = vmatprep.subr.bf16.mxu0 0
  %704 = vmatpush1.bf16.msra.mxu0 %v562
  %705 = vmatprep.subr.bf16.mxu0 0
  %706 = vmatpush1.bf16.msra.mxu0 %v563
  %707 = vmatprep.subr.bf16.mxu0 0
  %708 = vmatpush1.bf16.msra.mxu0 %v564
  %709 = vmatprep.mubr.bf16.mxu0 %v158
  %710 = vmatmul.mubr.bf16.gmra.mrb[0].mxu0 %v157
  %v711 = vpop.f32.mrb[0].mxu0
  %v712 = vadd.f32 0.0, %v711
  %v713 = vpop.f32.mrb[0].mxu0
  %v714 = vpop.f32.mrb[0].mxu0
  %v715 = vpop.f32.mrb[0].mxu0
  %716 = vdwg.mxu0
  %717 = vmatprep.subr.bf16.mxu0 0
  %718 = vmatpush1.bf16.msra.mxu0 %v565
  %719 = vmatprep.subr.bf16.mxu0 0
  %720 = vmatpush1.bf16.msra.mxu0 %v566
  %721 = vmatprep.subr.bf16.mxu0 0
  %722 = vmatpush1.bf16.msra.mxu0 %v567
  %723 = vmatprep.subr.bf16.mxu0 0
  %724 = vmatpush1.bf16.msra.mxu0 %v568
  %725 = vmatprep.subr.bf16.mxu0 0
  %726 = vmatpush1.bf16.msra.mxu0 %v569
  %727 = vmatprep.subr.bf16.mxu0 0
  %728 = vmatpush1.bf16.msra.mxu0 %v570
  %729 = vmatprep.subr.bf16.mxu0 0
  %730 = vmatpush1.bf16.msra.mxu0 %v571
  %731 = vmatprep.subr.bf16.mxu0 0
  %732 = vmatpush1.bf16.msra.mxu0 %v572
  %733 = vmatprep.subr.bf16.mxu0 0
  %734 = vmatpush1.bf16.msra.mxu0 %v573
  %735 = vmatprep.subr.bf16.mxu0 0
  %736 = vmatpush1.bf16.msra.mxu0 %v574
  %737 = vmatprep.subr.bf16.mxu0 0
  %738 = vmatpush1.bf16.msra.mxu0 %v575
  %739 = vmatprep.subr.bf16.mxu0 0
  %740 = vmatpush1.bf16.msra.mxu0 %v576
  %741 = vmatprep.subr.bf16.mxu0 0
  %742 = vmatpush1.bf16.msra.mxu0 %v577
  %743 = vmatprep.subr.bf16.mxu0 0
  %744 = vmatpush1.bf16.msra.mxu0 %v578
  %745 = vmatprep.subr.bf16.mxu0 0
  %746 = vmatpush1.bf16.msra.mxu0 %v579
  %747 = vmatprep.subr.bf16.mxu0 0
  %748 = vmatpush1.bf16.msra.mxu0 %v580
  %749 = vmatprep.mubr.bf16.mxu0 %v160
  %750 = vmatmul.mubr.bf16.gmra.mrb[0].mxu0 %v159
  %v751 = vpop.f32.mrb[0].mxu0
  %v752 = vadd.f32 %v712, %v751
  %v753 = vpop.f32.mrb[0].mxu0
  %v754 = vpop.f32.mrb[0].mxu0
  %v755 = vpop.f32.mrb[0].mxu0
  %756 = vdwg.mxu0
  %757 = vmatprep.subr.bf16.mxu0 0
  %758 = vmatpush1.bf16.msra.mxu0 %v581
  %759 = vmatprep.subr.bf16.mxu0 0
  %760 = vmatpush1.bf16.msra.mxu0 %v582
  %761 = vmatprep.subr.bf16.mxu0 0
  %762 = vmatpush1.bf16.msra.mxu0 %v583
  %763 = vmatprep.subr.bf16.mxu0 0
  %764 = vmatpush1.bf16.msra.mxu0 %v584
  %765 = vmatprep.subr.bf16.mxu0 0
  %766 = vmatpush1.bf16.msra.mxu0 %v585
  %767 = vmatprep.subr.bf16.mxu0 0
  %768 = vmatpush1.bf16.msra.mxu0 %v586
  %769 = vmatprep.subr.bf16.mxu0 0
  %770 = vmatpush1.bf16.msra.mxu0 %v587
  %771 = vmatprep.subr.bf16.mxu0 0
  %772 = vmatpush1.bf16.msra.mxu0 %v588
  %773 = vmatprep.subr.bf16.mxu0 0
  %774 = vmatpush1.bf16.msra.mxu0 %v589
  %775 = vmatprep.subr.bf16.mxu0 0
  %776 = vmatpush1.bf16.msra.mxu0 %v590
  %777 = vmatprep.subr.bf16.mxu0 0
  %778 = vmatpush1.bf16.msra.mxu0 %v591
  %779 = vmatprep.subr.bf16.mxu0 0
  %780 = vmatpush1.bf16.msra.mxu0 %v592
  %781 = vmatprep.subr.bf16.mxu0 0
  %782 = vmatpush1.bf16.msra.mxu0 %v593
  %783 = vmatprep.subr.bf16.mxu0 0
  %784 = vmatpush1.bf16.msra.mxu0 %v594
  %785 = vmatprep.subr.bf16.mxu0 0
  %786 = vmatpush1.bf16.msra.mxu0 %v595
  %787 = vmatprep.subr.bf16.mxu0 0
  %788 = vmatpush1.bf16.msra.mxu0 %v596
  %789 = vmatprep.mubr.bf16.mxu0 %v162
  %790 = vmatmul.mubr.bf16.gmra.mrb[0].mxu0 %v161
  %v791 = vpop.f32.mrb[0].mxu0
  %v792 = vadd.f32 %v752, %v791
  %v793 = vpop.f32.mrb[0].mxu0
  %v794 = vpop.f32.mrb[0].mxu0
  %v795 = vpop.f32.mrb[0].mxu0
  %796 = vdwg.mxu0
  %797 = vmatprep.subr.bf16.mxu0 0
  %798 = vmatpush1.bf16.msra.mxu0 %v597
  %799 = vmatprep.subr.bf16.mxu0 0
  %800 = vmatpush1.bf16.msra.mxu0 %v598
  %801 = vmatprep.subr.bf16.mxu0 0
  %802 = vmatpush1.bf16.msra.mxu0 %v599
  %803 = vmatprep.subr.bf16.mxu0 0
  %804 = vmatpush1.bf16.msra.mxu0 %v600
  %805 = vmatprep.subr.bf16.mxu0 0
  %806 = vmatpush1.bf16.msra.mxu0 %v601
  %807 = vmatprep.subr.bf16.mxu0 0
  %808 = vmatpush1.bf16.msra.mxu0 %v602
  %809 = vmatprep.subr.bf16.mxu0 0
  %810 = vmatpush1.bf16.msra.mxu0 %v603
  %811 = vmatprep.subr.bf16.mxu0 0
  %812 = vmatpush1.bf16.msra.mxu0 %v604
  %813 = vmatprep.subr.bf16.mxu0 0
  %814 = vmatpush1.bf16.msra.mxu0 %v605
  %815 = vmatprep.subr.bf16.mxu0 0
  %816 = vmatpush1.bf16.msra.mxu0 %v606
  %817 = vmatprep.subr.bf16.mxu0 0
  %818 = vmatpush1.bf16.msra.mxu0 %v607
  %819 = vmatprep.subr.bf16.mxu0 0
  %820 = vmatpush1.bf16.msra.mxu0 %v608
  %821 = vmatprep.subr.bf16.mxu0 0
  %822 = vmatpush1.bf16.msra.mxu0 %v609
  %823 = vmatprep.subr.bf16.mxu0 0
  %824 = vmatpush1.bf16.msra.mxu0 %v610
  %825 = vmatprep.subr.bf16.mxu0 0
  %826 = vmatpush1.bf16.msra.mxu0 %v611
  %827 = vmatprep.subr.bf16.mxu0 0
  %828 = vmatpush1.bf16.msra.mxu0 %v612
  %829 = vmatprep.mubr.bf16.mxu0 %v164
  %830 = vmatmul.mubr.bf16.gmra.mrb[0].mxu0 %v163
  %v831 = vpop.f32.mrb[0].mxu0
  %v832 = vadd.f32 %v792, %v831
  %v833 = vpop.f32.mrb[0].mxu0
  %v834 = vpop.f32.mrb[0].mxu0
  %v835 = vpop.f32.mrb[0].mxu0
  %836 = vdwg.mxu0
  %v837 = vpack.c.bf16 %v832, %v832
  %838 = vst [vmem:[%s4] sm:$0xf] %v837
  %v839 = vrot.slane %v832, 4
  %v840 = vadd.f32 %v832, %v839
  %v841 = vrot.slane %v840, 2
  %v842 = vadd.f32 %v840, %v841
  %v843 = vrot.slane %v842, 1
  %v844 = vadd.f32 %v842, %v843
  %845 = vst [vmem:[%s5] sm:$0x1] %v844
  %v846 = vmul.f32 %v832, %v832
  %v847 = vrot.slane %v846, 4
  %v848 = vadd.f32 %v846, %v847
  %v849 = vrot.slane %v848, 2
  %v850 = vadd.f32 %v848, %v849
  %v851 = vrot.slane %v850, 1
  %v852 = vadd.f32 %v850, %v851
  %853 = vst [vmem:[%s6] sm:$0x1] %v852
  // Predicated region
  $region18: #{discriminator_forward.10} parent=0 // pred_check
    _
  $region19: #{discriminator_forward.10} parent=0 // pred_check_branch
    %855 = sbr.rel (0) target = $region21
  $region20: #{discriminator_forward.10} parent=0 // pred_region
    _
  $region21: #{discriminator_forward.10} parent=0 // pred_fallthru
    _
  // Predicated region
  $region22: #{discriminator_forward.10} parent=0 // pred_check
    _
  $region23: #{discriminator_forward.10} parent=0 // pred_check_branch
    %857 = sbr.rel (0) target = $region25
  $region24: #{discriminator_forward.10} parent=0 // pred_region
    _
  $region25: #{discriminator_forward.10} parent=0 // pred_fallthru
    _
  // Predicated region
  $region26: #{discriminator_forward.10} parent=0 // pred_check
    _
  $region27: #{discriminator_forward.10} parent=0 // pred_check_branch
    %859 = sbr.rel (0) target = $region29
  $region28: #{discriminator_forward.10} parent=0 // pred_region
    _
  $region29: #{discriminator_forward.10} parent=0 // pred_fallthru
    _
  // Predicated region
  $region30: #{discriminator_forward.10} parent=0 // pred_check
    _
  $region31: #{discriminator_forward.10} parent=0 // pred_check_branch
    %861 = sbr.rel (0) target = $region33
  $region32: #{discriminator_forward.10} parent=0 // pred_region
    _
  $region33: #{discriminator_forward.10} parent=0 // pred_fallthru
    _
  // Predicated region
  $region34: #{discriminator_forward.10} parent=0 // pred_check
    _
  $region35: #{discriminator_forward.10} parent=0 // pred_check_branch
    %863 = sbr.rel (0) target = $region37
  $region36: #{discriminator_forward.10} parent=0 // pred_region
    _
  $region37: #{discriminator_forward.10} parent=0 // pred_fallthru
    _
  // Predicated region
  $region38: #{discriminator_forward.10} parent=0 // pred_check
    _
  $region39: #{discriminator_forward.10} parent=0 // pred_check_branch
    %865 = sbr.rel (0) target = $region41
  $region40: #{discriminator_forward.10} parent=0 // pred_region
    _
  $region41: #{discriminator_forward.10} parent=0 // pred_fallthru
    _

// kernel: tile.53
$region0: #{tile.53}
  #allocation0 [shape = 's32[1]{0}', space=sflag, size = 0x4, scoped, tag = 'scoped memory for tile.53']
  %s0 = inlined_call_operand.vmem [shape: f32[128], index: 0, kind: input, shape index: {}]
  %s1 = inlined_call_operand.vmem [shape: f32[16,128], index: 1, kind: output, shape index: {}]
  // Predicated region
  $region2: #{tile.53} parent=0 // pred_check
    _
  $region3: #{tile.53} parent=0 // pred_check_branch
    %3 = sbr.rel (0) target = $region5
  $region4: #{tile.53} parent=0 // pred_region
    _
  $region5: #{tile.53} parent=0 // pred_fallthru
    _
  %v4 = vld [vmem:[%s0] ss:$0 sm:$0xff]
  %5 = vst [vmem:[%s1] sm:$0xff] %v4
  %s6 = scalar_lea.vmem %s1, 8
  %7 = vst [vmem:[%s6] sm:$0xff] %v4

// kernel: discriminator_forward.11
$region0: #{discriminator_forward.11}
  #allocation0 [shape = 'u32[]', space=smem, size = 0x4, offset = 0x4, fixed_abs, tag = 'smem constant byte address 0x4 - core index']
  #allocation1 [shape = 'u32[144,128]{1,0:T(1,128)}', space=vmem, size = 0x12000, scoped, tag = 'internal scratch']
  %s0 = inlined_call_operand.vmem [shape: bf16[2,2048], index: 0, kind: input, shape index: {}]
  %s1 = inlined_call_operand.vmem [shape: bf16[2048,128], index: 1, kind: input, shape index: {}]
  %s2 = inlined_call_operand.vmem [shape: f32[1,2048], index: 2, kind: input, shape index: {}]
  %s3 = inlined_call_operand.vmem [shape: f32[1,2048], index: 3, kind: input, shape index: {}]
  %s4 = inlined_call_operand.vmem [shape: f32[1,128], index: 4, kind: input, shape index: {}]
  %s5 = inlined_call_operand.vmem [shape: f32[2,128], index: 5, kind: output, shape index: {}]
  %s6 = sld [smem:[#allocation0]]
  $region30: #{discriminator_forward.11} parent=0
    _
  %s8 = ssub.s32 1, %s6
  %s9 = scalar_select 0, %s8, %s6
  // Predicated region
  $region2: #{discriminator_forward.11} parent=0 // pred_check
    _
  $region3: #{discriminator_forward.11} parent=0 // pred_check_branch
    %11 = sbr.rel (0) target = $region5
  $region4: #{discriminator_forward.11} parent=0 // pred_region
    _
  $region5: #{discriminator_forward.11} parent=0 // pred_fallthru
    _
  // Predicated region
  $region6: #{discriminator_forward.11} parent=0 // pred_check
    _
  $region7: #{discriminator_forward.11} parent=0 // pred_check_branch
    %13 = sbr.rel (0) target = $region9
  $region8: #{discriminator_forward.11} parent=0 // pred_region
    _
  $region9: #{discriminator_forward.11} parent=0 // pred_fallthru
    _
  // Predicated region
  $region10: #{discriminator_forward.11} parent=0 // pred_check
    _
  $region11: #{discriminator_forward.11} parent=0 // pred_check_branch
    %15 = sbr.rel (0) target = $region13
  $region12: #{discriminator_forward.11} parent=0 // pred_region
    _
  $region13: #{discriminator_forward.11} parent=0 // pred_fallthru
    _
  // Predicated region
  $region14: #{discriminator_forward.11} parent=0 // pred_check
    _
  $region15: #{discriminator_forward.11} parent=0 // pred_check_branch
    %17 = sbr.rel (0) target = $region17
  $region16: #{discriminator_forward.11} parent=0 // pred_region
    _
  $region17: #{discriminator_forward.11} parent=0 // pred_fallthru
    _
  // Predicated region
  $region18: #{discriminator_forward.11} parent=0 // pred_check
    _
  $region19: #{discriminator_forward.11} parent=0 // pred_check_branch
    %19 = sbr.rel (0) target = $region21
  $region20: #{discriminator_forward.11} parent=0 // pred_region
    _
  $region21: #{discriminator_forward.11} parent=0 // pred_fallthru
    _
  %v21 = vld [vmem:[%s0] sm:$0xff]
  %v22 = vld [vmem:[%s0 + $0x8] sm:$0xff]
  %v23 = vunpack.c.l.bf16 %v21
  %v24 = vunpack.c.h.bf16 %v21
  %v25 = vunpack.c.l.bf16 %v22
  %v26 = vunpack.c.h.bf16 %v22
  %v27 = vld [vmem:[%s2] sm:$0xff]
  %v28 = vld [vmem:[%s2 + $0x8] sm:$0xff]
  %v31 = vlaneseq
  %v32 = vshrl.u32 %v31, 7
  %v33 = vsub.s32 0, %v32
  %v34 = vrot.slane %v27, %v33
  %v35 = vlaneseq
  %v36 = vshrl.u32 %v35, 7
  %v37 = vsub.s32 1, %v36
  %v38 = vrot.slane %v27, %v37
  %v39 = vlaneseq
  %v40 = vshrl.u32 %v39, 7
  %v41 = vsub.s32 2, %v40
  %v42 = vrot.slane %v27, %v41
  %v43 = vlaneseq
  %v44 = vshrl.u32 %v43, 7
  %v45 = vsub.s32 3, %v44
  %v46 = vrot.slane %v27, %v45
  %v47 = vlaneseq
  %v48 = vshrl.u32 %v47, 7
  %v49 = vsub.s32 4, %v48
  %v50 = vrot.slane %v27, %v49
  %v51 = vlaneseq
  %v52 = vshrl.u32 %v51, 7
  %v53 = vsub.s32 5, %v52
  %v54 = vrot.slane %v27, %v53
  %v55 = vlaneseq
  %v56 = vshrl.u32 %v55, 7
  %v57 = vsub.s32 6, %v56
  %v58 = vrot.slane %v27, %v57
  %v59 = vlaneseq
  %v60 = vshrl.u32 %v59, 7
  %v61 = vsub.s32 7, %v60
  %v62 = vrot.slane %v27, %v61
  %v63 = vlaneseq
  %v64 = vshrl.u32 %v63, 7
  %v65 = vsub.s32 0, %v64
  %v66 = vrot.slane %v28, %v65
  %v67 = vlaneseq
  %v68 = vshrl.u32 %v67, 7
  %v69 = vsub.s32 1, %v68
  %v70 = vrot.slane %v28, %v69
  %v71 = vlaneseq
  %v72 = vshrl.u32 %v71, 7
  %v73 = vsub.s32 2, %v72
  %v74 = vrot.slane %v28, %v73
  %v75 = vlaneseq
  %v76 = vshrl.u32 %v75, 7
  %v77 = vsub.s32 3, %v76
  %v78 = vrot.slane %v28, %v77
  %v79 = vlaneseq
  %v80 = vshrl.u32 %v79, 7
  %v81 = vsub.s32 4, %v80
  %v82 = vrot.slane %v28, %v81
  %v83 = vlaneseq
  %v84 = vshrl.u32 %v83, 7
  %v85 = vsub.s32 5, %v84
  %v86 = vrot.slane %v28, %v85
  %v87 = vlaneseq
  %v88 = vshrl.u32 %v87, 7
  %v89 = vsub.s32 6, %v88
  %v90 = vrot.slane %v28, %v89
  %v91 = vlaneseq
  %v92 = vshrl.u32 %v91, 7
  %v93 = vsub.s32 7, %v92
  %v94 = vrot.slane %v28, %v93
  %v95 = vcombine.low %v34, %v38
  %v96 = vcombine.low %v42, %v46
  %v98 = vunpack.c.l.s4 1983009808
  %v99 = vunpack.c.0.s8 %v98
  %v100 = vlaneseq
  %v101 = vshrl.u32 %v100, 7
  %v102 = vsub.s32 %v99, %v101
  %v103 = vrot.slane %v95, %v102
  %v105 = vunpack.c.l.s4 1983009808
  %v106 = vunpack.c.0.s8 %v105
  %v107 = vlaneseq
  %v108 = vshrl.u32 %v107, 7
  %v109 = vsub.s32 %v106, %v108
  %v110 = vrot.slane %v96, %v109
  %v111 = vcombine.low %v103, %v110
  %v112 = vcombine.low %v50, %v54
  %v113 = vcombine.low %v58, %v62
  %v115 = vunpack.c.l.s4 1983009808
  %v116 = vunpack.c.0.s8 %v115
  %v117 = vlaneseq
  %v118 = vshrl.u32 %v117, 7
  %v119 = vsub.s32 %v116, %v118
  %v120 = vrot.slane %v112, %v119
  %v122 = vunpack.c.l.s4 1983009808
  %v123 = vunpack.c.0.s8 %v122
  %v124 = vlaneseq
  %v125 = vshrl.u32 %v124, 7
  %v126 = vsub.s32 %v123, %v125
  %v127 = vrot.slane %v113, %v126
  %v128 = vcombine.low %v120, %v127
  %v129 = vcombine.low %v66, %v70
  %v130 = vcombine.low %v74, %v78
  %v132 = vunpack.c.l.s4 1983009808
  %v133 = vunpack.c.0.s8 %v132
  %v134 = vlaneseq
  %v135 = vshrl.u32 %v134, 7
  %v136 = vsub.s32 %v133, %v135
  %v137 = vrot.slane %v129, %v136
  %v139 = vunpack.c.l.s4 1983009808
  %v140 = vunpack.c.0.s8 %v139
  %v141 = vlaneseq
  %v142 = vshrl.u32 %v141, 7
  %v143 = vsub.s32 %v140, %v142
  %v144 = vrot.slane %v130, %v143
  %v145 = vcombine.low %v137, %v144
  %v146 = vcombine.low %v82, %v86
  %v147 = vcombine.low %v90, %v94
  %v149 = vunpack.c.l.s4 1983009808
  %v150 = vunpack.c.0.s8 %v149
  %v151 = vlaneseq
  %v152 = vshrl.u32 %v151, 7
  %v153 = vsub.s32 %v150, %v152
  %v154 = vrot.slane %v146, %v153
  %v156 = vunpack.c.l.s4 1983009808
  %v157 = vunpack.c.0.s8 %v156
  %v158 = vlaneseq
  %v159 = vshrl.u32 %v158, 7
  %v160 = vsub.s32 %v157, %v159
  %v161 = vrot.slane %v147, %v160
  %v162 = vcombine.low %v154, %v161
  %v167 = vmul.f32 %v23, %v111
  %v168 = vmul.f32 %v24, %v128
  %v169 = vmul.f32 %v25, %v145
  %v170 = vmul.f32 %v26, %v162
  %v171 = vld [vmem:[%s3] sm:$0xff]
  %v172 = vld [vmem:[%s3 + $0x8] sm:$0xff]
  %v175 = vlaneseq
  %v176 = vshrl.u32 %v175, 7
  %v177 = vsub.s32 0, %v176
  %v178 = vrot.slane %v171, %v177
  %v179 = vlaneseq
  %v180 = vshrl.u32 %v179, 7
  %v181 = vsub.s32 1, %v180
  %v182 = vrot.slane %v171, %v181
  %v183 = vlaneseq
  %v184 = vshrl.u32 %v183, 7
  %v185 = vsub.s32 2, %v184
  %v186 = vrot.slane %v171, %v185
  %v187 = vlaneseq
  %v188 = vshrl.u32 %v187, 7
  %v189 = vsub.s32 3, %v188
  %v190 = vrot.slane %v171, %v189
  %v191 = vlaneseq
  %v192 = vshrl.u32 %v191, 7
  %v193 = vsub.s32 4, %v192
  %v194 = vrot.slane %v171, %v193
  %v195 = vlaneseq
  %v196 = vshrl.u32 %v195, 7
  %v197 = vsub.s32 5, %v196
  %v198 = vrot.slane %v171, %v197
  %v199 = vlaneseq
  %v200 = vshrl.u32 %v199, 7
  %v201 = vsub.s32 6, %v200
  %v202 = vrot.slane %v171, %v201
  %v203 = vlaneseq
  %v204 = vshrl.u32 %v203, 7
  %v205 = vsub.s32 7, %v204
  %v206 = vrot.slane %v171, %v205
  %v207 = vlaneseq
  %v208 = vshrl.u32 %v207, 7
  %v209 = vsub.s32 0, %v208
  %v210 = vrot.slane %v172, %v209
  %v211 = vlaneseq
  %v212 = vshrl.u32 %v211, 7
  %v213 = vsub.s32 1, %v212
  %v214 = vrot.slane %v172, %v213
  %v215 = vlaneseq
  %v216 = vshrl.u32 %v215, 7
  %v217 = vsub.s32 2, %v216
  %v218 = vrot.slane %v172, %v217
  %v219 = vlaneseq
  %v220 = vshrl.u32 %v219, 7
  %v221 = vsub.s32 3, %v220
  %v222 = vrot.slane %v172, %v221
  %v223 = vlaneseq
  %v224 = vshrl.u32 %v223, 7
  %v225 = vsub.s32 4, %v224
  %v226 = vrot.slane %v172, %v225
  %v227 = vlaneseq
  %v228 = vshrl.u32 %v227, 7
  %v229 = vsub.s32 5, %v228
  %v230 = vrot.slane %v172, %v229
  %v231 = vlaneseq
  %v232 = vshrl.u32 %v231, 7
  %v233 = vsub.s32 6, %v232
  %v234 = vrot.slane %v172, %v233
  %v235 = vlaneseq
  %v236 = vshrl.u32 %v235, 7
  %v237 = vsub.s32 7, %v236
  %v238 = vrot.slane %v172, %v237
  %v239 = vcombine.low %v178, %v182
  %v240 = vcombine.low %v186, %v190
  %v242 = vunpack.c.l.s4 1983009808
  %v243 = vunpack.c.0.s8 %v242
  %v244 = vlaneseq
  %v245 = vshrl.u32 %v244, 7
  %v246 = vsub.s32 %v243, %v245
  %v247 = vrot.slane %v239, %v246
  %v249 = vunpack.c.l.s4 1983009808
  %v250 = vunpack.c.0.s8 %v249
  %v251 = vlaneseq
  %v252 = vshrl.u32 %v251, 7
  %v253 = vsub.s32 %v250, %v252
  %v254 = vrot.slane %v240, %v253
  %v255 = vcombine.low %v247, %v254
  %v256 = vcombine.low %v194, %v198
  %v257 = vcombine.low %v202, %v206
  %v259 = vunpack.c.l.s4 1983009808
  %v260 = vunpack.c.0.s8 %v259
  %v261 = vlaneseq
  %v262 = vshrl.u32 %v261, 7
  %v263 = vsub.s32 %v260, %v262
  %v264 = vrot.slane %v256, %v263
  %v266 = vunpack.c.l.s4 1983009808
  %v267 = vunpack.c.0.s8 %v266
  %v268 = vlaneseq
  %v269 = vshrl.u32 %v268, 7
  %v270 = vsub.s32 %v267, %v269
  %v271 = vrot.slane %v257, %v270
  %v272 = vcombine.low %v264, %v271
  %v273 = vcombine.low %v210, %v214
  %v274 = vcombine.low %v218, %v222
  %v276 = vunpack.c.l.s4 1983009808
  %v277 = vunpack.c.0.s8 %v276
  %v278 = vlaneseq
  %v279 = vshrl.u32 %v278, 7
  %v280 = vsub.s32 %v277, %v279
  %v281 = vrot.slane %v273, %v280
  %v283 = vunpack.c.l.s4 1983009808
  %v284 = vunpack.c.0.s8 %v283
  %v285 = vlaneseq
  %v286 = vshrl.u32 %v285, 7
  %v287 = vsub.s32 %v284, %v286
  %v288 = vrot.slane %v274, %v287
  %v289 = vcombine.low %v281, %v288
  %v290 = vcombine.low %v226, %v230
  %v291 = vcombine.low %v234, %v238
  %v293 = vunpack.c.l.s4 1983009808
  %v294 = vunpack.c.0.s8 %v293
  %v295 = vlaneseq
  %v296 = vshrl.u32 %v295, 7
  %v297 = vsub.s32 %v294, %v296
  %v298 = vrot.slane %v290, %v297
  %v300 = vunpack.c.l.s4 1983009808
  %v301 = vunpack.c.0.s8 %v300
  %v302 = vlaneseq
  %v303 = vshrl.u32 %v302, 7
  %v304 = vsub.s32 %v301, %v303
  %v305 = vrot.slane %v291, %v304
  %v306 = vcombine.low %v298, %v305
  %v311 = vadd.f32 %v167, %v255
  %v312 = vadd.f32 %v168, %v272
  %v313 = vadd.f32 %v169, %v289
  %v314 = vadd.f32 %v170, %v306
  %vm315 = vcmp.ge.f32.partialorder %v311, 0.0
  %vm316 = vcmp.ge.f32.partialorder %v312, 0.0
  %vm317 = vcmp.ge.f32.partialorder %v313, 0.0
  %vm318 = vcmp.ge.f32.partialorder %v314, 0.0
  %v319 = vmul.f32 %v311, 0.2
  %v320 = vmul.f32 %v312, 0.2
  %v321 = vmul.f32 %v313, 0.2
  %v322 = vmul.f32 %v314, 0.2
  %v323 = vsel %vm315, %v311, %v319
  %v324 = vsel %vm316, %v312, %v320
  %v325 = vsel %vm317, %v313, %v321
  %v326 = vsel %vm318, %v314, %v322
  %v331 = vcombine.high %v323, %v323
  %v333 = vunpack.c.l.s4 1983009808
  %v334 = vunpack.c.0.s8 %v333
  %v335 = vlaneseq
  %v336 = vshrl.u32 %v335, 7
  %v337 = vsub.s32 %v334, %v336
  %v338 = vrot.slane %v323, %v337
  %v340 = vunpack.c.l.s4 1983009808
  %v341 = vunpack.c.0.s8 %v340
  %v342 = vlaneseq
  %v343 = vshrl.u32 %v342, 7
  %v344 = vsub.s32 %v341, %v343
  %v345 = vrot.slane %v331, %v344
  %v346 = vcombine.high %v338, %v338
  %v347 = vcombine.high %v345, %v345
  %v348 = vcombine.high %v324, %v324
  %v350 = vunpack.c.l.s4 1983009808
  %v351 = vunpack.c.0.s8 %v350
  %v352 = vlaneseq
  %v353 = vshrl.u32 %v352, 7
  %v354 = vsub.s32 %v351, %v353
  %v355 = vrot.slane %v324, %v354
  %v357 = vunpack.c.l.s4 1983009808
  %v358 = vunpack.c.0.s8 %v357
  %v359 = vlaneseq
  %v360 = vshrl.u32 %v359, 7
  %v361 = vsub.s32 %v358, %v360
  %v362 = vrot.slane %v348, %v361
  %v363 = vcombine.high %v355, %v355
  %v364 = vcombine.high %v362, %v362
  %v365 = vcombine.high %v325, %v325
  %v367 = vunpack.c.l.s4 1983009808
  %v368 = vunpack.c.0.s8 %v367
  %v369 = vlaneseq
  %v370 = vshrl.u32 %v369, 7
  %v371 = vsub.s32 %v368, %v370
  %v372 = vrot.slane %v325, %v371
  %v374 = vunpack.c.l.s4 1983009808
  %v375 = vunpack.c.0.s8 %v374
  %v376 = vlaneseq
  %v377 = vshrl.u32 %v376, 7
  %v378 = vsub.s32 %v375, %v377
  %v379 = vrot.slane %v365, %v378
  %v380 = vcombine.high %v372, %v372
  %v381 = vcombine.high %v379, %v379
  %v382 = vcombine.high %v326, %v326
  %v384 = vunpack.c.l.s4 1983009808
  %v385 = vunpack.c.0.s8 %v384
  %v386 = vlaneseq
  %v387 = vshrl.u32 %v386, 7
  %v388 = vsub.s32 %v385, %v387
  %v389 = vrot.slane %v326, %v388
  %v391 = vunpack.c.l.s4 1983009808
  %v392 = vunpack.c.0.s8 %v391
  %v393 = vlaneseq
  %v394 = vshrl.u32 %v393, 7
  %v395 = vsub.s32 %v392, %v394
  %v396 = vrot.slane %v382, %v395
  %v397 = vcombine.high %v389, %v389
  %v398 = vcombine.high %v396, %v396
  %v415 = vpack.c.bf16 %v338, %v338
  %v416 = vpack.c.bf16 %v346, %v346
  %v417 = vpack.c.bf16 %v345, %v345
  %v418 = vpack.c.bf16 %v347, %v347
  %v419 = vpack.c.bf16 %v355, %v355
  %v420 = vpack.c.bf16 %v363, %v363
  %v421 = vpack.c.bf16 %v362, %v362
  %v422 = vpack.c.bf16 %v364, %v364
  %v423 = vpack.c.bf16 %v372, %v372
  %v424 = vpack.c.bf16 %v380, %v380
  %v425 = vpack.c.bf16 %v379, %v379
  %v426 = vpack.c.bf16 %v381, %v381
  %v427 = vpack.c.bf16 %v389, %v389
  %v428 = vpack.c.bf16 %v397, %v397
  %v429 = vpack.c.bf16 %v396, %v396
  %v430 = vpack.c.bf16 %v398, %v398
  %v431 = vld [vmem:[%s1] sm:$0xf]
  %v432 = vld [vmem:[%s1 + $0x4] sm:$0xf]
  %v433 = vld [vmem:[%s1 + $0x8] sm:$0xf]
  %v434 = vld [vmem:[%s1 + $0xc] sm:$0xf]
  %v435 = vld [vmem:[%s1 + $0x10] sm:$0xf]
  %v436 = vld [vmem:[%s1 + $0x14] sm:$0xf]
  %v437 = vld [vmem:[%s1 + $0x18] sm:$0xf]
  %v438 = vld [vmem:[%s1 + $0x1c] sm:$0xf]
  %v439 = vld [vmem:[%s1 + $0x20] sm:$0xf]
  %v440 = vld [vmem:[%s1 + $0x24] sm:$0xf]
  %v441 = vld [vmem:[%s1 + $0x28] sm:$0xf]
  %v442 = vld [vmem:[%s1 + $0x2c] sm:$0xf]
  %v443 = vld [vmem:[%s1 + $0x30] sm:$0xf]
  %v444 = vld [vmem:[%s1 + $0x34] sm:$0xf]
  %v445 = vld [vmem:[%s1 + $0x38] sm:$0xf]
  %v446 = vld [vmem:[%s1 + $0x3c] sm:$0xf]
  %v447 = vld [vmem:[%s1 + $0x40] sm:$0xf]
  %v448 = vld [vmem:[%s1 + $0x44] sm:$0xf]
  %v449 = vld [vmem:[%s1 + $0x48] sm:$0xf]
  %v450 = vld [vmem:[%s1 + $0x4c] sm:$0xf]
  %v451 = vld [vmem:[%s1 + $0x50] sm:$0xf]
  %v452 = vld [vmem:[%s1 + $0x54] sm:$0xf]
  %v453 = vld [vmem:[%s1 + $0x58] sm:$0xf]
  %v454 = vld [vmem:[%s1 + $0x5c] sm:$0xf]
  %v455 = vld [vmem:[%s1 + $0x60] sm:$0xf]
  %v456 = vld [vmem:[%s1 + $0x64] sm:$0xf]
  %v457 = vld [vmem:[%s1 + $0x68] sm:$0xf]
  %v458 = vld [vmem:[%s1 + $0x6c] sm:$0xf]
  %v459 = vld [vmem:[%s1 + $0x70] sm:$0xf]
  %v460 = vld [vmem:[%s1 + $0x74] sm:$0xf]
  %v461 = vld [vmem:[%s1 + $0x78] sm:$0xf]
  %v462 = vld [vmem:[%s1 + $0x7c] sm:$0xf]
  %v463 = vld [vmem:[%s1 + $0x80] sm:$0xf]
  %v464 = vld [vmem:[%s1 + $0x84] sm:$0xf]
  %v465 = vld [vmem:[%s1 + $0x88] sm:$0xf]
  %v466 = vld [vmem:[%s1 + $0x8c] sm:$0xf]
  %v467 = vld [vmem:[%s1 + $0x90] sm:$0xf]
  %v468 = vld [vmem:[%s1 + $0x94] sm:$0xf]
  %v469 = vld [vmem:[%s1 + $0x98] sm:$0xf]
  %v470 = vld [vmem:[%s1 + $0x9c] sm:$0xf]
  %v471 = vld [vmem:[%s1 + $0xa0] sm:$0xf]
  %v472 = vld [vmem:[%s1 + $0xa4] sm:$0xf]
  %v473 = vld [vmem:[%s1 + $0xa8] sm:$0xf]
  %v474 = vld [vmem:[%s1 + $0xac] sm:$0xf]
  %v475 = vld [vmem:[%s1 + $0xb0] sm:$0xf]
  %v476 = vld [vmem:[%s1 + $0xb4] sm:$0xf]
  %v477 = vld [vmem:[%s1 + $0xb8] sm:$0xf]
  %v478 = vld [vmem:[%s1 + $0xbc] sm:$0xf]
  %v479 = vld [vmem:[%s1 + $0xc0] sm:$0xf]
  %v480 = vld [vmem:[%s1 + $0xc4] sm:$0xf]
  %v481 = vld [vmem:[%s1 + $0xc8] sm:$0xf]
  %v482 = vld [vmem:[%s1 + $0xcc] sm:$0xf]
  %v483 = vld [vmem:[%s1 + $0xd0] sm:$0xf]
  %v484 = vld [vmem:[%s1 + $0xd4] sm:$0xf]
  %v485 = vld [vmem:[%s1 + $0xd8] sm:$0xf]
  %v486 = vld [vmem:[%s1 + $0xdc] sm:$0xf]
  %v487 = vld [vmem:[%s1 + $0xe0] sm:$0xf]
  %v488 = vld [vmem:[%s1 + $0xe4] sm:$0xf]
  %v489 = vld [vmem:[%s1 + $0xe8] sm:$0xf]
  %v490 = vld [vmem:[%s1 + $0xec] sm:$0xf]
  %v491 = vld [vmem:[%s1 + $0xf0] sm:$0xf]
  %v492 = vld [vmem:[%s1 + $0xf4] sm:$0xf]
  %v493 = vld [vmem:[%s1 + $0xf8] sm:$0xf]
  %v494 = vld [vmem:[%s1 + $0xfc] sm:$0xf]
  %v495 = vld [vmem:[%s1 + $0x100] sm:$0xf]
  %v496 = vld [vmem:[%s1 + $0x104] sm:$0xf]
  %v497 = vld [vmem:[%s1 + $0x108] sm:$0xf]
  %v498 = vld [vmem:[%s1 + $0x10c] sm:$0xf]
  %v499 = vld [vmem:[%s1 + $0x110] sm:$0xf]
  %v500 = vld [vmem:[%s1 + $0x114] sm:$0xf]
  %v501 = vld [vmem:[%s1 + $0x118] sm:$0xf]
  %v502 = vld [vmem:[%s1 + $0x11c] sm:$0xf]
  %v503 = vld [vmem:[%s1 + $0x120] sm:$0xf]
  %v504 = vld [vmem:[%s1 + $0x124] sm:$0xf]
  %v505 = vld [vmem:[%s1 + $0x128] sm:$0xf]
  %v506 = vld [vmem:[%s1 + $0x12c] sm:$0xf]
  %v507 = vld [vmem:[%s1 + $0x130] sm:$0xf]
  %v508 = vld [vmem:[%s1 + $0x134] sm:$0xf]
  %v509 = vld [vmem:[%s1 + $0x138] sm:$0xf]
  %v510 = vld [vmem:[%s1 + $0x13c] sm:$0xf]
  %v511 = vld [vmem:[%s1 + $0x140] sm:$0xf]
  %v512 = vld [vmem:[%s1 + $0x144] sm:$0xf]
  %v513 = vld [vmem:[%s1 + $0x148] sm:$0xf]
  %v514 = vld [vmem:[%s1 + $0x14c] sm:$0xf]
  %v515 = vld [vmem:[%s1 + $0x150] sm:$0xf]
  %v516 = vld [vmem:[%s1 + $0x154] sm:$0xf]
  %v517 = vld [vmem:[%s1 + $0x158] sm:$0xf]
  %v518 = vld [vmem:[%s1 + $0x15c] sm:$0xf]
  %v519 = vld [vmem:[%s1 + $0x160] sm:$0xf]
  %v520 = vld [vmem:[%s1 + $0x164] sm:$0xf]
  %v521 = vld [vmem:[%s1 + $0x168] sm:$0xf]
  %v522 = vld [vmem:[%s1 + $0x16c] sm:$0xf]
  %v523 = vld [vmem:[%s1 + $0x170] sm:$0xf]
  %v524 = vld [vmem:[%s1 + $0x174] sm:$0xf]
  %v525 = vld [vmem:[%s1 + $0x178] sm:$0xf]
  %v526 = vld [vmem:[%s1 + $0x17c] sm:$0xf]
  %v527 = vld [vmem:[%s1 + $0x180] sm:$0xf]
  %v528 = vld [vmem:[%s1 + $0x184] sm:$0xf]
  %v529 = vld [vmem:[%s1 + $0x188] sm:$0xf]
  %v530 = vld [vmem:[%s1 + $0x18c] sm:$0xf]
  %v531 = vld [vmem:[%s1 + $0x190] sm:$0xf]
  %v532 = vld [vmem:[%s1 + $0x194] sm:$0xf]
  %v533 = vld [vmem:[%s1 + $0x198] sm:$0xf]
  %v534 = vld [vmem:[%s1 + $0x19c] sm:$0xf]
  %v535 = vld [vmem:[%s1 + $0x1a0] sm:$0xf]
  %v536 = vld [vmem:[%s1 + $0x1a4] sm:$0xf]
  %v537 = vld [vmem:[%s1 + $0x1a8] sm:$0xf]
  %v538 = vld [vmem:[%s1 + $0x1ac] sm:$0xf]
  %v539 = vld [vmem:[%s1 + $0x1b0] sm:$0xf]
  %v540 = vld [vmem:[%s1 + $0x1b4] sm:$0xf]
  %v541 = vld [vmem:[%s1 + $0x1b8] sm:$0xf]
  %v542 = vld [vmem:[%s1 + $0x1bc] sm:$0xf]
  %v543 = vld [vmem:[%s1 + $0x1c0] sm:$0xf]
  %v544 = vld [vmem:[%s1 + $0x1c4] sm:$0xf]
  %v545 = vld [vmem:[%s1 + $0x1c8] sm:$0xf]
  %v546 = vld [vmem:[%s1 + $0x1cc] sm:$0xf]
  %v547 = vld [vmem:[%s1 + $0x1d0] sm:$0xf]
  %v548 = vld [vmem:[%s1 + $0x1d4] sm:$0xf]
  %v549 = vld [vmem:[%s1 + $0x1d8] sm:$0xf]
  %v550 = vld [vmem:[%s1 + $0x1dc] sm:$0xf]
  %v551 = vld [vmem:[%s1 + $0x1e0] sm:$0xf]
  %v552 = vld [vmem:[%s1 + $0x1e4] sm:$0xf]
  %v553 = vld [vmem:[%s1 + $0x1e8] sm:$0xf]
  %v554 = vld [vmem:[%s1 + $0x1ec] sm:$0xf]
  %v555 = vld [vmem:[%s1 + $0x1f0] sm:$0xf]
  %v556 = vld [vmem:[%s1 + $0x1f4] sm:$0xf]
  %v557 = vld [vmem:[%s1 + $0x1f8] sm:$0xf]
  %v558 = vld [vmem:[%s1 + $0x1fc] sm:$0xf]
  %v559 = vld [vmem:[%s1 + $0x200] sm:$0xf]
  %v560 = vld [vmem:[%s1 + $0x204] sm:$0xf]
  %v561 = vld [vmem:[%s1 + $0x208] sm:$0xf]
  %v562 = vld [vmem:[%s1 + $0x20c] sm:$0xf]
  %v563 = vld [vmem:[%s1 + $0x210] sm:$0xf]
  %v564 = vld [vmem:[%s1 + $0x214] sm:$0xf]
  %v565 = vld [vmem:[%s1 + $0x218] sm:$0xf]
  %v566 = vld [vmem:[%s1 + $0x21c] sm:$0xf]
  %v567 = vld [vmem:[%s1 + $0x220] sm:$0xf]
  %v568 = vld [vmem:[%s1 + $0x224] sm:$0xf]
  %v569 = vld [vmem:[%s1 + $0x228] sm:$0xf]
  %v570 = vld [vmem:[%s1 + $0x22c] sm:$0xf]
  %v571 = vld [vmem:[%s1 + $0x230] sm:$0xf]
  %v572 = vld [vmem:[%s1 + $0x234] sm:$0xf]
  %v573 = vld [vmem:[%s1 + $0x238] sm:$0xf]
  %v574 = vld [vmem:[%s1 + $0x23c] sm:$0xf]
  %v575 = vld [vmem:[%s1 + $0x240] sm:$0xf]
  %v576 = vld [vmem:[%s1 + $0x244] sm:$0xf]
  %v577 = vld [vmem:[%s1 + $0x248] sm:$0xf]
  %v578 = vld [vmem:[%s1 + $0x24c] sm:$0xf]
  %v579 = vld [vmem:[%s1 + $0x250] sm:$0xf]
  %v580 = vld [vmem:[%s1 + $0x254] sm:$0xf]
  %v581 = vld [vmem:[%s1 + $0x258] sm:$0xf]
  %v582 = vld [vmem:[%s1 + $0x25c] sm:$0xf]
  %v583 = vld [vmem:[%s1 + $0x260] sm:$0xf]
  %v584 = vld [vmem:[%s1 + $0x264] sm:$0xf]
  %v585 = vld [vmem:[%s1 + $0x268] sm:$0xf]
  %v586 = vld [vmem:[%s1 + $0x26c] sm:$0xf]
  %v587 = vld [vmem:[%s1 + $0x270] sm:$0xf]
  %v588 = vld [vmem:[%s1 + $0x274] sm:$0xf]
  %v589 = vld [vmem:[%s1 + $0x278] sm:$0xf]
  %v590 = vld [vmem:[%s1 + $0x27c] sm:$0xf]
  %v591 = vld [vmem:[%s1 + $0x280] sm:$0xf]
  %v592 = vld [vmem:[%s1 + $0x284] sm:$0xf]
  %v593 = vld [vmem:[%s1 + $0x288] sm:$0xf]
  %v594 = vld [vmem:[%s1 + $0x28c] sm:$0xf]
  %v595 = vld [vmem:[%s1 + $0x290] sm:$0xf]
  %v596 = vld [vmem:[%s1 + $0x294] sm:$0xf]
  %v597 = vld [vmem:[%s1 + $0x298] sm:$0xf]
  %v598 = vld [vmem:[%s1 + $0x29c] sm:$0xf]
  %v599 = vld [vmem:[%s1 + $0x2a0] sm:$0xf]
  %v600 = vld [vmem:[%s1 + $0x2a4] sm:$0xf]
  %v601 = vld [vmem:[%s1 + $0x2a8] sm:$0xf]
  %v602 = vld [vmem:[%s1 + $0x2ac] sm:$0xf]
  %v603 = vld [vmem:[%s1 + $0x2b0] sm:$0xf]
  %v604 = vld [vmem:[%s1 + $0x2b4] sm:$0xf]
  %v605 = vld [vmem:[%s1 + $0x2b8] sm:$0xf]
  %v606 = vld [vmem:[%s1 + $0x2bc] sm:$0xf]
  %v607 = vld [vmem:[%s1 + $0x2c0] sm:$0xf]
  %v608 = vld [vmem:[%s1 + $0x2c4] sm:$0xf]
  %v609 = vld [vmem:[%s1 + $0x2c8] sm:$0xf]
  %v610 = vld [vmem:[%s1 + $0x2cc] sm:$0xf]
  %v611 = vld [vmem:[%s1 + $0x2d0] sm:$0xf]
  %v612 = vld [vmem:[%s1 + $0x2d4] sm:$0xf]
  %v613 = vld [vmem:[%s1 + $0x2d8] sm:$0xf]
  %v614 = vld [vmem:[%s1 + $0x2dc] sm:$0xf]
  %v615 = vld [vmem:[%s1 + $0x2e0] sm:$0xf]
  %v616 = vld [vmem:[%s1 + $0x2e4] sm:$0xf]
  %v617 = vld [vmem:[%s1 + $0x2e8] sm:$0xf]
  %v618 = vld [vmem:[%s1 + $0x2ec] sm:$0xf]
  %v619 = vld [vmem:[%s1 + $0x2f0] sm:$0xf]
  %v620 = vld [vmem:[%s1 + $0x2f4] sm:$0xf]
  %v621 = vld [vmem:[%s1 + $0x2f8] sm:$0xf]
  %v622 = vld [vmem:[%s1 + $0x2fc] sm:$0xf]
  %v623 = vld [vmem:[%s1 + $0x300] sm:$0xf]
  %v624 = vld [vmem:[%s1 + $0x304] sm:$0xf]
  %v625 = vld [vmem:[%s1 + $0x308] sm:$0xf]
  %v626 = vld [vmem:[%s1 + $0x30c] sm:$0xf]
  %v627 = vld [vmem:[%s1 + $0x310] sm:$0xf]
  %v628 = vld [vmem:[%s1 + $0x314] sm:$0xf]
  %v629 = vld [vmem:[%s1 + $0x318] sm:$0xf]
  %v630 = vld [vmem:[%s1 + $0x31c] sm:$0xf]
  %v631 = vld [vmem:[%s1 + $0x320] sm:$0xf]
  %v632 = vld [vmem:[%s1 + $0x324] sm:$0xf]
  %v633 = vld [vmem:[%s1 + $0x328] sm:$0xf]
  %v634 = vld [vmem:[%s1 + $0x32c] sm:$0xf]
  %v635 = vld [vmem:[%s1 + $0x330] sm:$0xf]
  %v636 = vld [vmem:[%s1 + $0x334] sm:$0xf]
  %v637 = vld [vmem:[%s1 + $0x338] sm:$0xf]
  %v638 = vld [vmem:[%s1 + $0x33c] sm:$0xf]
  %v639 = vld [vmem:[%s1 + $0x340] sm:$0xf]
  %v640 = vld [vmem:[%s1 + $0x344] sm:$0xf]
  %v641 = vld [vmem:[%s1 + $0x348] sm:$0xf]
  %v642 = vld [vmem:[%s1 + $0x34c] sm:$0xf]
  %v643 = vld [vmem:[%s1 + $0x350] sm:$0xf]
  %v644 = vld [vmem:[%s1 + $0x354] sm:$0xf]
  %v645 = vld [vmem:[%s1 + $0x358] sm:$0xf]
  %v646 = vld [vmem:[%s1 + $0x35c] sm:$0xf]
  %v647 = vld [vmem:[%s1 + $0x360] sm:$0xf]
  %v648 = vld [vmem:[%s1 + $0x364] sm:$0xf]
  %v649 = vld [vmem:[%s1 + $0x368] sm:$0xf]
  %v650 = vld [vmem:[%s1 + $0x36c] sm:$0xf]
  %v651 = vld [vmem:[%s1 + $0x370] sm:$0xf]
  %v652 = vld [vmem:[%s1 + $0x374] sm:$0xf]
  %v653 = vld [vmem:[%s1 + $0x378] sm:$0xf]
  %v654 = vld [vmem:[%s1 + $0x37c] sm:$0xf]
  %v655 = vld [vmem:[%s1 + $0x380] sm:$0xf]
  %v656 = vld [vmem:[%s1 + $0x384] sm:$0xf]
  %v657 = vld [vmem:[%s1 + $0x388] sm:$0xf]
  %v658 = vld [vmem:[%s1 + $0x38c] sm:$0xf]
  %v659 = vld [vmem:[%s1 + $0x390] sm:$0xf]
  %v660 = vld [vmem:[%s1 + $0x394] sm:$0xf]
  %v661 = vld [vmem:[%s1 + $0x398] sm:$0xf]
  %v662 = vld [vmem:[%s1 + $0x39c] sm:$0xf]
  %v663 = vld [vmem:[%s1 + $0x3a0] sm:$0xf]
  %v664 = vld [vmem:[%s1 + $0x3a4] sm:$0xf]
  %v665 = vld [vmem:[%s1 + $0x3a8] sm:$0xf]
  %v666 = vld [vmem:[%s1 + $0x3ac] sm:$0xf]
  %v667 = vld [vmem:[%s1 + $0x3b0] sm:$0xf]
  %v668 = vld [vmem:[%s1 + $0x3b4] sm:$0xf]
  %v669 = vld [vmem:[%s1 + $0x3b8] sm:$0xf]
  %v670 = vld [vmem:[%s1 + $0x3bc] sm:$0xf]
  %v671 = vld [vmem:[%s1 + $0x3c0] sm:$0xf]
  %v672 = vld [vmem:[%s1 + $0x3c4] sm:$0xf]
  %v673 = vld [vmem:[%s1 + $0x3c8] sm:$0xf]
  %v674 = vld [vmem:[%s1 + $0x3cc] sm:$0xf]
  %v675 = vld [vmem:[%s1 + $0x3d0] sm:$0xf]
  %v676 = vld [vmem:[%s1 + $0x3d4] sm:$0xf]
  %v677 = vld [vmem:[%s1 + $0x3d8] sm:$0xf]
  %v678 = vld [vmem:[%s1 + $0x3dc] sm:$0xf]
  %v679 = vld [vmem:[%s1 + $0x3e0] sm:$0xf]
  %v680 = vld [vmem:[%s1 + $0x3e4] sm:$0xf]
  %v681 = vld [vmem:[%s1 + $0x3e8] sm:$0xf]
  %v682 = vld [vmem:[%s1 + $0x3ec] sm:$0xf]
  %v683 = vld [vmem:[%s1 + $0x3f0] sm:$0xf]
  %v684 = vld [vmem:[%s1 + $0x3f4] sm:$0xf]
  %v685 = vld [vmem:[%s1 + $0x3f8] sm:$0xf]
  %v686 = vld [vmem:[%s1 + $0x3fc] sm:$0xf]
  %v687 = vld [vmem:[%s4] sm:$0x1]
  %v689 = vlaneseq
  %v690 = vshrl.u32 %v689, 7
  %v691 = vsub.s32 0, %v690
  %v692 = vrot.slane %v687, %v691
  %v950 = vunpack.c.l.b16 %v431
  %v951 = vunpack.c.l.b16 %v432
  %v952 = vunpack.c.l.b16 %v433
  %v953 = vunpack.c.l.b16 %v434
  %v954 = vunpack.c.l.b16 %v435
  %v955 = vunpack.c.l.b16 %v436
  %v956 = vunpack.c.l.b16 %v437
  %v957 = vunpack.c.l.b16 %v438
  %v958 = vunpack.c.l.b16 %v439
  %v959 = vunpack.c.l.b16 %v440
  %v960 = vunpack.c.l.b16 %v441
  %v961 = vunpack.c.l.b16 %v442
  %v962 = vunpack.c.l.b16 %v443
  %v963 = vunpack.c.l.b16 %v444
  %v964 = vunpack.c.l.b16 %v445
  %v965 = vunpack.c.l.b16 %v446
  %v966 = vunpack.c.l.b16 %v447
  %v967 = vunpack.c.l.b16 %v448
  %v968 = vunpack.c.l.b16 %v449
  %v969 = vunpack.c.l.b16 %v450
  %v970 = vunpack.c.l.b16 %v451
  %v971 = vunpack.c.l.b16 %v452
  %v972 = vunpack.c.l.b16 %v453
  %v973 = vunpack.c.l.b16 %v454
  %v974 = vunpack.c.l.b16 %v455
  %v975 = vunpack.c.l.b16 %v456
  %v976 = vunpack.c.l.b16 %v457
  %v977 = vunpack.c.l.b16 %v458
  %v978 = vunpack.c.l.b16 %v459
  %v979 = vunpack.c.l.b16 %v460
  %v980 = vunpack.c.l.b16 %v461
  %v981 = vunpack.c.l.b16 %v462
  %v982 = vunpack.c.l.b16 %v463
  %v983 = vunpack.c.l.b16 %v464
  %v984 = vunpack.c.l.b16 %v465
  %v985 = vunpack.c.l.b16 %v466
  %v986 = vunpack.c.l.b16 %v467
  %v987 = vunpack.c.l.b16 %v468
  %v988 = vunpack.c.l.b16 %v469
  %v989 = vunpack.c.l.b16 %v470
  %v990 = vunpack.c.l.b16 %v471
  %v991 = vunpack.c.l.b16 %v472
  %v992 = vunpack.c.l.b16 %v473
  %v993 = vunpack.c.l.b16 %v474
  %v994 = vunpack.c.l.b16 %v475
  %v995 = vunpack.c.l.b16 %v476
  %v996 = vunpack.c.l.b16 %v477
  %v997 = vunpack.c.l.b16 %v478
  %v998 = vunpack.c.l.b16 %v479
  %v999 = vunpack.c.l.b16 %v480
  %v1000 = vunpack.c.l.b16 %v481
  %v1001 = vunpack.c.l.b16 %v482
  %v1002 = vunpack.c.l.b16 %v483
  %v1003 = vunpack.c.l.b16 %v484
  %v1004 = vunpack.c.l.b16 %v485
  %v1005 = vunpack.c.l.b16 %v486
  %v1006 = vunpack.c.l.b16 %v487
  %v1007 = vunpack.c.l.b16 %v488
  %v1008 = vunpack.c.l.b16 %v489
  %v1009 = vunpack.c.l.b16 %v490
  %v1010 = vunpack.c.l.b16 %v491
  %v1011 = vunpack.c.l.b16 %v492
  %v1012 = vunpack.c.l.b16 %v493
  %v1013 = vunpack.c.l.b16 %v494
  %v1014 = vunpack.c.l.b16 %v495
  %v1015 = vunpack.c.l.b16 %v496
  %v1016 = vunpack.c.l.b16 %v497
  %v1017 = vunpack.c.l.b16 %v498
  %v1018 = vunpack.c.l.b16 %v499
  %v1019 = vunpack.c.l.b16 %v500
  %v1020 = vunpack.c.l.b16 %v501
  %v1021 = vunpack.c.l.b16 %v502
  %v1022 = vunpack.c.l.b16 %v503
  %v1023 = vunpack.c.l.b16 %v504
  %v1024 = vunpack.c.l.b16 %v505
  %v1025 = vunpack.c.l.b16 %v506
  %v1026 = vunpack.c.l.b16 %v507
  %v1027 = vunpack.c.l.b16 %v508
  %v1028 = vunpack.c.l.b16 %v509
  %v1029 = vunpack.c.l.b16 %v510
  %v1030 = vunpack.c.l.b16 %v511
  %v1031 = vunpack.c.l.b16 %v512
  %v1032 = vunpack.c.l.b16 %v513
  %v1033 = vunpack.c.l.b16 %v514
  %v1034 = vunpack.c.l.b16 %v515
  %v1035 = vunpack.c.l.b16 %v516
  %v1036 = vunpack.c.l.b16 %v517
  %v1037 = vunpack.c.l.b16 %v518
  %v1038 = vunpack.c.l.b16 %v519
  %v1039 = vunpack.c.l.b16 %v520
  %v1040 = vunpack.c.l.b16 %v521
  %v1041 = vunpack.c.l.b16 %v522
  %v1042 = vunpack.c.l.b16 %v523
  %v1043 = vunpack.c.l.b16 %v524
  %v1044 = vunpack.c.l.b16 %v525
  %v1045 = vunpack.c.l.b16 %v526
  %v1046 = vunpack.c.l.b16 %v527
  %v1047 = vunpack.c.l.b16 %v528
  %v1048 = vunpack.c.l.b16 %v529
  %v1049 = vunpack.c.l.b16 %v530
  %v1050 = vunpack.c.l.b16 %v531
  %v1051 = vunpack.c.l.b16 %v532
  %v1052 = vunpack.c.l.b16 %v533
  %v1053 = vunpack.c.l.b16 %v534
  %v1054 = vunpack.c.l.b16 %v535
  %v1055 = vunpack.c.l.b16 %v536
  %v1056 = vunpack.c.l.b16 %v537
  %v1057 = vunpack.c.l.b16 %v538
  %v1058 = vunpack.c.l.b16 %v539
  %v1059 = vunpack.c.l.b16 %v540
  %v1060 = vunpack.c.l.b16 %v541
  %v1061 = vunpack.c.l.b16 %v542
  %v1062 = vunpack.c.l.b16 %v543
  %v1063 = vunpack.c.l.b16 %v544
  %v1064 = vunpack.c.l.b16 %v545
  %v1065 = vunpack.c.l.b16 %v546
  %v1066 = vunpack.c.l.b16 %v547
  %v1067 = vunpack.c.l.b16 %v548
  %v1068 = vunpack.c.l.b16 %v549
  %v1069 = vunpack.c.l.b16 %v550
  %v1070 = vunpack.c.l.b16 %v551
  %v1071 = vunpack.c.l.b16 %v552
  %v1072 = vunpack.c.l.b16 %v553
  %v1073 = vunpack.c.l.b16 %v554
  %v1074 = vunpack.c.l.b16 %v555
  %v1075 = vunpack.c.l.b16 %v556
  %v1076 = vunpack.c.l.b16 %v557
  %v1077 = vunpack.c.l.b16 %v558
  %v1078 = vunpack.c.l.b16 %v559
  %v1079 = vunpack.c.l.b16 %v560
  %v1080 = vunpack.c.l.b16 %v561
  %v1081 = vunpack.c.l.b16 %v562
  %v1082 = vunpack.c.l.b16 %v563
  %v1083 = vunpack.c.l.b16 %v564
  %v1084 = vunpack.c.l.b16 %v565
  %v1085 = vunpack.c.l.b16 %v566
  %v1086 = vunpack.c.l.b16 %v567
  %v1087 = vunpack.c.l.b16 %v568
  %v1088 = vunpack.c.l.b16 %v569
  %v1089 = vunpack.c.l.b16 %v570
  %v1090 = vunpack.c.l.b16 %v571
  %v1091 = vunpack.c.l.b16 %v572
  %v1092 = vunpack.c.l.b16 %v573
  %v1093 = vunpack.c.l.b16 %v574
  %v1094 = vunpack.c.l.b16 %v575
  %v1095 = vunpack.c.l.b16 %v576
  %v1096 = vunpack.c.l.b16 %v577
  %v1097 = vunpack.c.l.b16 %v578
  %v1098 = vunpack.c.l.b16 %v579
  %v1099 = vunpack.c.l.b16 %v580
  %v1100 = vunpack.c.l.b16 %v581
  %v1101 = vunpack.c.l.b16 %v582
  %v1102 = vunpack.c.l.b16 %v583
  %v1103 = vunpack.c.l.b16 %v584
  %v1104 = vunpack.c.l.b16 %v585
  %v1105 = vunpack.c.l.b16 %v586
  %v1106 = vunpack.c.l.b16 %v587
  %v1107 = vunpack.c.l.b16 %v588
  %v1108 = vunpack.c.l.b16 %v589
  %v1109 = vunpack.c.l.b16 %v590
  %v1110 = vunpack.c.l.b16 %v591
  %v1111 = vunpack.c.l.b16 %v592
  %v1112 = vunpack.c.l.b16 %v593
  %v1113 = vunpack.c.l.b16 %v594
  %v1114 = vunpack.c.l.b16 %v595
  %v1115 = vunpack.c.l.b16 %v596
  %v1116 = vunpack.c.l.b16 %v597
  %v1117 = vunpack.c.l.b16 %v598
  %v1118 = vunpack.c.l.b16 %v599
  %v1119 = vunpack.c.l.b16 %v600
  %v1120 = vunpack.c.l.b16 %v601
  %v1121 = vunpack.c.l.b16 %v602
  %v1122 = vunpack.c.l.b16 %v603
  %v1123 = vunpack.c.l.b16 %v604
  %v1124 = vunpack.c.l.b16 %v605
  %v1125 = vunpack.c.l.b16 %v606
  %v1126 = vunpack.c.l.b16 %v607
  %v1127 = vunpack.c.l.b16 %v608
  %v1128 = vunpack.c.l.b16 %v609
  %v1129 = vunpack.c.l.b16 %v610
  %v1130 = vunpack.c.l.b16 %v611
  %v1131 = vunpack.c.l.b16 %v612
  %v1132 = vunpack.c.l.b16 %v613
  %v1133 = vunpack.c.l.b16 %v614
  %v1134 = vunpack.c.l.b16 %v615
  %v1135 = vunpack.c.l.b16 %v616
  %v1136 = vunpack.c.l.b16 %v617
  %v1137 = vunpack.c.l.b16 %v618
  %v1138 = vunpack.c.l.b16 %v619
  %v1139 = vunpack.c.l.b16 %v620
  %v1140 = vunpack.c.l.b16 %v621
  %v1141 = vunpack.c.l.b16 %v622
  %v1142 = vunpack.c.l.b16 %v623
  %v1143 = vunpack.c.l.b16 %v624
  %v1144 = vunpack.c.l.b16 %v625
  %v1145 = vunpack.c.l.b16 %v626
  %v1146 = vunpack.c.l.b16 %v627
  %v1147 = vunpack.c.l.b16 %v628
  %v1148 = vunpack.c.l.b16 %v629
  %v1149 = vunpack.c.l.b16 %v630
  %v1150 = vunpack.c.l.b16 %v631
  %v1151 = vunpack.c.l.b16 %v632
  %v1152 = vunpack.c.l.b16 %v633
  %v1153 = vunpack.c.l.b16 %v634
  %v1154 = vunpack.c.l.b16 %v635
  %v1155 = vunpack.c.l.b16 %v636
  %v1156 = vunpack.c.l.b16 %v637
  %v1157 = vunpack.c.l.b16 %v638
  %v1158 = vunpack.c.l.b16 %v639
  %v1159 = vunpack.c.l.b16 %v640
  %v1160 = vunpack.c.l.b16 %v641
  %v1161 = vunpack.c.l.b16 %v642
  %v1162 = vunpack.c.l.b16 %v643
  %v1163 = vunpack.c.l.b16 %v644
  %v1164 = vunpack.c.l.b16 %v645
  %v1165 = vunpack.c.l.b16 %v646
  %v1166 = vunpack.c.l.b16 %v647
  %v1167 = vunpack.c.l.b16 %v648
  %v1168 = vunpack.c.l.b16 %v649
  %v1169 = vunpack.c.l.b16 %v650
  %v1170 = vunpack.c.l.b16 %v651
  %v1171 = vunpack.c.l.b16 %v652
  %v1172 = vunpack.c.l.b16 %v653
  %v1173 = vunpack.c.l.b16 %v654
  %v1174 = vunpack.c.l.b16 %v655
  %v1175 = vunpack.c.l.b16 %v656
  %v1176 = vunpack.c.l.b16 %v657
  %v1177 = vunpack.c.l.b16 %v658
  %v1178 = vunpack.c.l.b16 %v659
  %v1179 = vunpack.c.l.b16 %v660
  %v1180 = vunpack.c.l.b16 %v661
  %v1181 = vunpack.c.l.b16 %v662
  %v1182 = vunpack.c.l.b16 %v663
  %v1183 = vunpack.c.l.b16 %v664
  %v1184 = vunpack.c.l.b16 %v665
  %v1185 = vunpack.c.l.b16 %v666
  %v1186 = vunpack.c.l.b16 %v667
  %v1187 = vunpack.c.l.b16 %v668
  %v1188 = vunpack.c.l.b16 %v669
  %v1189 = vunpack.c.l.b16 %v670
  %v1190 = vunpack.c.l.b16 %v671
  %v1191 = vunpack.c.l.b16 %v672
  %v1192 = vunpack.c.l.b16 %v673
  %v1193 = vunpack.c.l.b16 %v674
  %v1194 = vunpack.c.l.b16 %v675
  %v1195 = vunpack.c.l.b16 %v676
  %v1196 = vunpack.c.l.b16 %v677
  %v1197 = vunpack.c.l.b16 %v678
  %v1198 = vunpack.c.l.b16 %v679
  %v1199 = vunpack.c.l.b16 %v680
  %v1200 = vunpack.c.l.b16 %v681
  %v1201 = vunpack.c.l.b16 %v682
  %v1202 = vunpack.c.l.b16 %v683
  %v1203 = vunpack.c.l.b16 %v684
  %v1204 = vunpack.c.l.b16 %v685
  %v1205 = vunpack.c.l.b16 %v686
  %v1206 = vpack.c.b16 %v951, %v950
  %v1207 = vpack.c.b16 %v953, %v952
  %v1208 = vpack.c.b16 %v955, %v954
  %v1209 = vpack.c.b16 %v957, %v956
  %v1210 = vpack.c.b16 %v959, %v958
  %v1211 = vpack.c.b16 %v961, %v960
  %v1212 = vpack.c.b16 %v963, %v962
  %v1213 = vpack.c.b16 %v965, %v964
  %v1214 = vpack.c.b16 %v967, %v966
  %v1215 = vpack.c.b16 %v969, %v968
  %v1216 = vpack.c.b16 %v971, %v970
  %v1217 = vpack.c.b16 %v973, %v972
  %v1218 = vpack.c.b16 %v975, %v974
  %v1219 = vpack.c.b16 %v977, %v976
  %v1220 = vpack.c.b16 %v979, %v978
  %v1221 = vpack.c.b16 %v981, %v980
  %v1222 = vpack.c.b16 %v983, %v982
  %v1223 = vpack.c.b16 %v985, %v984
  %v1224 = vpack.c.b16 %v987, %v986
  %v1225 = vpack.c.b16 %v989, %v988
  %v1226 = vpack.c.b16 %v991, %v990
  %v1227 = vpack.c.b16 %v993, %v992
  %v1228 = vpack.c.b16 %v995, %v994
  %v1229 = vpack.c.b16 %v997, %v996
  %v1230 = vpack.c.b16 %v999, %v998
  %v1231 = vpack.c.b16 %v1001, %v1000
  %v1232 = vpack.c.b16 %v1003, %v1002
  %v1233 = vpack.c.b16 %v1005, %v1004
  %v1234 = vpack.c.b16 %v1007, %v1006
  %v1235 = vpack.c.b16 %v1009, %v1008
  %v1236 = vpack.c.b16 %v1011, %v1010
  %v1237 = vpack.c.b16 %v1013, %v1012
  %v1238 = vpack.c.b16 %v1015, %v1014
  %v1239 = vpack.c.b16 %v1017, %v1016
  %v1240 = vpack.c.b16 %v1019, %v1018
  %v1241 = vpack.c.b16 %v1021, %v1020
  %v1242 = vpack.c.b16 %v1023, %v1022
  %v1243 = vpack.c.b16 %v1025, %v1024
  %v1244 = vpack.c.b16 %v1027, %v1026
  %v1245 = vpack.c.b16 %v1029, %v1028
  %v1246 = vpack.c.b16 %v1031, %v1030
  %v1247 = vpack.c.b16 %v1033, %v1032
  %v1248 = vpack.c.b16 %v1035, %v1034
  %v1249 = vpack.c.b16 %v1037, %v1036
  %v1250 = vpack.c.b16 %v1039, %v1038
  %v1251 = vpack.c.b16 %v1041, %v1040
  %v1252 = vpack.c.b16 %v1043, %v1042
  %v1253 = vpack.c.b16 %v1045, %v1044
  %v1254 = vpack.c.b16 %v1047, %v1046
  %v1255 = vpack.c.b16 %v1049, %v1048
  %v1256 = vpack.c.b16 %v1051, %v1050
  %v1257 = vpack.c.b16 %v1053, %v1052
  %v1258 = vpack.c.b16 %v1055, %v1054
  %v1259 = vpack.c.b16 %v1057, %v1056
  %v1260 = vpack.c.b16 %v1059, %v1058
  %v1261 = vpack.c.b16 %v1061, %v1060
  %v1262 = vpack.c.b16 %v1063, %v1062
  %v1263 = vpack.c.b16 %v1065, %v1064
  %v1264 = vpack.c.b16 %v1067, %v1066
  %v1265 = vpack.c.b16 %v1069, %v1068
  %v1266 = vpack.c.b16 %v1071, %v1070
  %v1267 = vpack.c.b16 %v1073, %v1072
  %v1268 = vpack.c.b16 %v1075, %v1074
  %v1269 = vpack.c.b16 %v1077, %v1076
  %v1270 = vpack.c.b16 %v1079, %v1078
  %v1271 = vpack.c.b16 %v1081, %v1080
  %v1272 = vpack.c.b16 %v1083, %v1082
  %v1273 = vpack.c.b16 %v1085, %v1084
  %v1274 = vpack.c.b16 %v1087, %v1086
  %v1275 = vpack.c.b16 %v1089, %v1088
  %v1276 = vpack.c.b16 %v1091, %v1090
  %v1277 = vpack.c.b16 %v1093, %v1092
  %v1278 = vpack.c.b16 %v1095, %v1094
  %v1279 = vpack.c.b16 %v1097, %v1096
  %v1280 = vpack.c.b16 %v1099, %v1098
  %v1281 = vpack.c.b16 %v1101, %v1100
  %v1282 = vpack.c.b16 %v1103, %v1102
  %v1283 = vpack.c.b16 %v1105, %v1104
  %v1284 = vpack.c.b16 %v1107, %v1106
  %v1285 = vpack.c.b16 %v1109, %v1108
  %v1286 = vpack.c.b16 %v1111, %v1110
  %v1287 = vpack.c.b16 %v1113, %v1112
  %v1288 = vpack.c.b16 %v1115, %v1114
  %v1289 = vpack.c.b16 %v1117, %v1116
  %v1290 = vpack.c.b16 %v1119, %v1118
  %v1291 = vpack.c.b16 %v1121, %v1120
  %v1292 = vpack.c.b16 %v1123, %v1122
  %v1293 = vpack.c.b16 %v1125, %v1124
  %v1294 = vpack.c.b16 %v1127, %v1126
  %v1295 = vpack.c.b16 %v1129, %v1128
  %v1296 = vpack.c.b16 %v1131, %v1130
  %v1297 = vpack.c.b16 %v1133, %v1132
  %v1298 = vpack.c.b16 %v1135, %v1134
  %v1299 = vpack.c.b16 %v1137, %v1136
  %v1300 = vpack.c.b16 %v1139, %v1138
  %v1301 = vpack.c.b16 %v1141, %v1140
  %v1302 = vpack.c.b16 %v1143, %v1142
  %v1303 = vpack.c.b16 %v1145, %v1144
  %v1304 = vpack.c.b16 %v1147, %v1146
  %v1305 = vpack.c.b16 %v1149, %v1148
  %v1306 = vpack.c.b16 %v1151, %v1150
  %v1307 = vpack.c.b16 %v1153, %v1152
  %v1308 = vpack.c.b16 %v1155, %v1154
  %v1309 = vpack.c.b16 %v1157, %v1156
  %v1310 = vpack.c.b16 %v1159, %v1158
  %v1311 = vpack.c.b16 %v1161, %v1160
  %v1312 = vpack.c.b16 %v1163, %v1162
  %v1313 = vpack.c.b16 %v1165, %v1164
  %v1314 = vpack.c.b16 %v1167, %v1166
  %v1315 = vpack.c.b16 %v1169, %v1168
  %v1316 = vpack.c.b16 %v1171, %v1170
  %v1317 = vpack.c.b16 %v1173, %v1172
  %v1318 = vpack.c.b16 %v1175, %v1174
  %v1319 = vpack.c.b16 %v1177, %v1176
  %v1320 = vpack.c.b16 %v1179, %v1178
  %v1321 = vpack.c.b16 %v1181, %v1180
  %v1322 = vpack.c.b16 %v1183, %v1182
  %v1323 = vpack.c.b16 %v1185, %v1184
  %v1324 = vpack.c.b16 %v1187, %v1186
  %v1325 = vpack.c.b16 %v1189, %v1188
  %v1326 = vpack.c.b16 %v1191, %v1190
  %v1327 = vpack.c.b16 %v1193, %v1192
  %v1328 = vpack.c.b16 %v1195, %v1194
  %v1329 = vpack.c.b16 %v1197, %v1196
  %v1330 = vpack.c.b16 %v1199, %v1198
  %v1331 = vpack.c.b16 %v1201, %v1200
  %v1332 = vpack.c.b16 %v1203, %v1202
  %v1333 = vpack.c.b16 %v1205, %v1204
  %1462 = vmatprep.subr.bf16.mxu0 0
  %1463 = vmatpush1.bf16.msra.mxu0 %v1206
  %1464 = vmatprep.subr.bf16.mxu0 0
  %1465 = vmatpush1.bf16.msra.mxu0 %v1207
  %1466 = vmatprep.subr.bf16.mxu0 0
  %1467 = vmatpush1.bf16.msra.mxu0 %v1208
  %1468 = vmatprep.subr.bf16.mxu0 0
  %1469 = vmatpush1.bf16.msra.mxu0 %v1209
  %1470 = vmatprep.subr.bf16.mxu0 0
  %1471 = vmatpush1.bf16.msra.mxu0 %v1210
  %1472 = vmatprep.subr.bf16.mxu0 0
  %1473 = vmatpush1.bf16.msra.mxu0 %v1211
  %1474 = vmatprep.subr.bf16.mxu0 0
  %1475 = vmatpush1.bf16.msra.mxu0 %v1212
  %1476 = vmatprep.subr.bf16.mxu0 0
  %1477 = vmatpush1.bf16.msra.mxu0 %v1213
  %1478 = vmatprep.subr.bf16.mxu0 0
  %1479 = vmatpush1.bf16.msra.mxu0 %v1214
  %1480 = vmatprep.subr.bf16.mxu0 0
  %1481 = vmatpush1.bf16.msra.mxu0 %v1215
  %1482 = vmatprep.subr.bf16.mxu0 0
  %1483 = vmatpush1.bf16.msra.mxu0 %v1216
  %1484 = vmatprep.subr.bf16.mxu0 0
  %1485 = vmatpush1.bf16.msra.mxu0 %v1217
  %1486 = vmatprep.subr.bf16.mxu0 0
  %1487 = vmatpush1.bf16.msra.mxu0 %v1218
  %1488 = vmatprep.subr.bf16.mxu0 0
  %1489 = vmatpush1.bf16.msra.mxu0 %v1219
  %1490 = vmatprep.subr.bf16.mxu0 0
  %1491 = vmatpush1.bf16.msra.mxu0 %v1220
  %1492 = vmatprep.subr.bf16.mxu0 0
  %1493 = vmatpush1.bf16.msra.mxu0 %v1221
  %1494 = vmatprep.mubr.bf16.mxu0 %v416
  %1495 = vmatmul.mubr.bf16.gmra.mrb[0].mxu0 %v415
  %v1496 = vpop.f32.mrb[0].mxu0
  %v1497 = vadd.f32 %v692, %v1496
  %v1498 = vpop.f32.mrb[0].mxu0
  %v1499 = vpop.f32.mrb[0].mxu0
  %v1500 = vpop.f32.mrb[0].mxu0
  %1501 = vdwg.mxu0
  %1502 = vmatprep.subr.bf16.mxu0 0
  %1503 = vmatpush1.bf16.msra.mxu0 %v1222
  %1504 = vmatprep.subr.bf16.mxu0 0
  %1505 = vmatpush1.bf16.msra.mxu0 %v1223
  %1506 = vmatprep.subr.bf16.mxu0 0
  %1507 = vmatpush1.bf16.msra.mxu0 %v1224
  %1508 = vmatprep.subr.bf16.mxu0 0
  %1509 = vmatpush1.bf16.msra.mxu0 %v1225
  %1510 = vmatprep.subr.bf16.mxu0 0
  %1511 = vmatpush1.bf16.msra.mxu0 %v1226
  %1512 = vmatprep.subr.bf16.mxu0 0
  %1513 = vmatpush1.bf16.msra.mxu0 %v1227
  %1514 = vmatprep.subr.bf16.mxu0 0
  %1515 = vmatpush1.bf16.msra.mxu0 %v1228
  %1516 = vmatprep.subr.bf16.mxu0 0
  %1517 = vmatpush1.bf16.msra.mxu0 %v1229
  %1518 = vmatprep.subr.bf16.mxu0 0
  %1519 = vmatpush1.bf16.msra.mxu0 %v1230
  %1520 = vmatprep.subr.bf16.mxu0 0
  %1521 = vmatpush1.bf16.msra.mxu0 %v1231
  %1522 = vmatprep.subr.bf16.mxu0 0
  %1523 = vmatpush1.bf16.msra.mxu0 %v1232
  %1524 = vmatprep.subr.bf16.mxu0 0
  %1525 = vmatpush1.bf16.msra.mxu0 %v1233
  %1526 = vmatprep.subr.bf16.mxu0 0
  %1527 = vmatpush1.bf16.msra.mxu0 %v1234
  %1528 = vmatprep.subr.bf16.mxu0 0
  %1529 = vmatpush1.bf16.msra.mxu0 %v1235
  %1530 = vmatprep.subr.bf16.mxu0 0
  %1531 = vmatpush1.bf16.msra.mxu0 %v1236
  %1532 = vmatprep.subr.bf16.mxu0 0
  %1533 = vmatpush1.bf16.msra.mxu0 %v1237
  %1534 = vmatprep.mubr.bf16.mxu0 %v418
  %1535 = vmatmul.mubr.bf16.gmra.mrb[0].mxu0 %v417
  %v1536 = vpop.f32.mrb[0].mxu0
  %v1537 = vadd.f32 %v1497, %v1536
  %v1538 = vpop.f32.mrb[0].mxu0
  %v1539 = vpop.f32.mrb[0].mxu0
  %v1540 = vpop.f32.mrb[0].mxu0
  %1541 = vdwg.mxu0
  %1542 = vmatprep.subr.bf16.mxu0 0
  %1543 = vmatpush1.bf16.msra.mxu0 %v1238
  %1544 = vmatprep.subr.bf16.mxu0 0
  %1545 = vmatpush1.bf16.msra.mxu0 %v1239
  %1546 = vmatprep.subr.bf16.mxu0 0
  %1547 = vmatpush1.bf16.msra.mxu0 %v1240
  %1548 = vmatprep.subr.bf16.mxu0 0
  %1549 = vmatpush1.bf16.msra.mxu0 %v1241
  %1550 = vmatprep.subr.bf16.mxu0 0
  %1551 = vmatpush1.bf16.msra.mxu0 %v1242
  %1552 = vmatprep.subr.bf16.mxu0 0
  %1553 = vmatpush1.bf16.msra.mxu0 %v1243
  %1554 = vmatprep.subr.bf16.mxu0 0
  %1555 = vmatpush1.bf16.msra.mxu0 %v1244
  %1556 = vmatprep.subr.bf16.mxu0 0
  %1557 = vmatpush1.bf16.msra.mxu0 %v1245
  %1558 = vmatprep.subr.bf16.mxu0 0
  %1559 = vmatpush1.bf16.msra.mxu0 %v1246
  %1560 = vmatprep.subr.bf16.mxu0 0
  %1561 = vmatpush1.bf16.msra.mxu0 %v1247
  %1562 = vmatprep.subr.bf16.mxu0 0
  %1563 = vmatpush1.bf16.msra.mxu0 %v1248
  %1564 = vmatprep.subr.bf16.mxu0 0
  %1565 = vmatpush1.bf16.msra.mxu0 %v1249
  %1566 = vmatprep.subr.bf16.mxu0 0
  %1567 = vmatpush1.bf16.msra.mxu0 %v1250
  %1568 = vmatprep.subr.bf16.mxu0 0
  %1569 = vmatpush1.bf16.msra.mxu0 %v1251
  %1570 = vmatprep.subr.bf16.mxu0 0
  %1571 = vmatpush1.bf16.msra.mxu0 %v1252
  %1572 = vmatprep.subr.bf16.mxu0 0
  %1573 = vmatpush1.bf16.msra.mxu0 %v1253
  %1574 = vmatprep.mubr.bf16.mxu0 %v420
  %1575 = vmatmul.mubr.bf16.gmra.mrb[0].mxu0 %v419
  %v1576 = vpop.f32.mrb[0].mxu0
  %v1577 = vadd.f32 %v1537, %v1576
  %v1578 = vpop.f32.mrb[0].mxu0
  %v1579 = vpop.f32.mrb[0].mxu0
  %v1580 = vpop.f32.mrb[0].mxu0
  %1581 = vdwg.mxu0
  %1582 = vmatprep.subr.bf16.mxu0 0
  %1583 = vmatpush1.bf16.msra.mxu0 %v1254
  %1584 = vmatprep.subr.bf16.mxu0 0
  %1585 = vmatpush1.bf16.msra.mxu0 %v1255
  %1586 = vmatprep.subr.bf16.mxu0 0
  %1587 = vmatpush1.bf16.msra.mxu0 %v1256
  %1588 = vmatprep.subr.bf16.mxu0 0
  %1589 = vmatpush1.bf16.msra.mxu0 %v1257
  %1590 = vmatprep.subr.bf16.mxu0 0
  %1591 = vmatpush1.bf16.msra.mxu0 %v1258
  %1592 = vmatprep.subr.bf16.mxu0 0
  %1593 = vmatpush1.bf16.msra.mxu0 %v1259
  %1594 = vmatprep.subr.bf16.mxu0 0
  %1595 = vmatpush1.bf16.msra.mxu0 %v1260
  %1596 = vmatprep.subr.bf16.mxu0 0
  %1597 = vmatpush1.bf16.msra.mxu0 %v1261
  %1598 = vmatprep.subr.bf16.mxu0 0
  %1599 = vmatpush1.bf16.msra.mxu0 %v1262
  %1600 = vmatprep.subr.bf16.mxu0 0
  %1601 = vmatpush1.bf16.msra.mxu0 %v1263
  %1602 = vmatprep.subr.bf16.mxu0 0
  %1603 = vmatpush1.bf16.msra.mxu0 %v1264
  %1604 = vmatprep.subr.bf16.mxu0 0
  %1605 = vmatpush1.bf16.msra.mxu0 %v1265
  %1606 = vmatprep.subr.bf16.mxu0 0
  %1607 = vmatpush1.bf16.msra.mxu0 %v1266
  %1608 = vmatprep.subr.bf16.mxu0 0
  %1609 = vmatpush1.bf16.msra.mxu0 %v1267
  %1610 = vmatprep.subr.bf16.mxu0 0
  %1611 = vmatpush1.bf16.msra.mxu0 %v1268
  %1612 = vmatprep.subr.bf16.mxu0 0
  %1613 = vmatpush1.bf16.msra.mxu0 %v1269
  %1614 = vmatprep.mubr.bf16.mxu0 %v422
  %1615 = vmatmul.mubr.bf16.gmra.mrb[0].mxu0 %v421
  %v1616 = vpop.f32.mrb[0].mxu0
  %v1617 = vadd.f32 %v1577, %v1616
  %v1618 = vpop.f32.mrb[0].mxu0
  %v1619 = vpop.f32.mrb[0].mxu0
  %v1620 = vpop.f32.mrb[0].mxu0
  %1621 = vdwg.mxu0
  %1622 = vmatprep.subr.bf16.mxu0 0
  %1623 = vmatpush1.bf16.msra.mxu0 %v1270
  %1624 = vmatprep.subr.bf16.mxu0 0
  %1625 = vmatpush1.bf16.msra.mxu0 %v1271
  %1626 = vmatprep.subr.bf16.mxu0 0
  %1627 = vmatpush1.bf16.msra.mxu0 %v1272
  %1628 = vmatprep.subr.bf16.mxu0 0
  %1629 = vmatpush1.bf16.msra.mxu0 %v1273
  %1630 = vmatprep.subr.bf16.mxu0 0
  %1631 = vmatpush1.bf16.msra.mxu0 %v1274
  %1632 = vmatprep.subr.bf16.mxu0 0
  %1633 = vmatpush1.bf16.msra.mxu0 %v1275
  %1634 = vmatprep.subr.bf16.mxu0 0
  %1635 = vmatpush1.bf16.msra.mxu0 %v1276
  %1636 = vmatprep.subr.bf16.mxu0 0
  %1637 = vmatpush1.bf16.msra.mxu0 %v1277
  %1638 = vmatprep.subr.bf16.mxu0 0
  %1639 = vmatpush1.bf16.msra.mxu0 %v1278
  %1640 = vmatprep.subr.bf16.mxu0 0
  %1641 = vmatpush1.bf16.msra.mxu0 %v1279
  %1642 = vmatprep.subr.bf16.mxu0 0
  %1643 = vmatpush1.bf16.msra.mxu0 %v1280
  %1644 = vmatprep.subr.bf16.mxu0 0
  %1645 = vmatpush1.bf16.msra.mxu0 %v1281
  %1646 = vmatprep.subr.bf16.mxu0 0
  %1647 = vmatpush1.bf16.msra.mxu0 %v1282
  %1648 = vmatprep.subr.bf16.mxu0 0
  %1649 = vmatpush1.bf16.msra.mxu0 %v1283
  %1650 = vmatprep.subr.bf16.mxu0 0
  %1651 = vmatpush1.bf16.msra.mxu0 %v1284
  %1652 = vmatprep.subr.bf16.mxu0 0
  %1653 = vmatpush1.bf16.msra.mxu0 %v1285
  %1654 = vmatprep.mubr.bf16.mxu0 %v424
  %1655 = vmatmul.mubr.bf16.gmra.mrb[0].mxu0 %v423
  %v1656 = vpop.f32.mrb[0].mxu0
  %v1657 = vadd.f32 %v1617, %v1656
  %v1658 = vpop.f32.mrb[0].mxu0
  %v1659 = vpop.f32.mrb[0].mxu0
  %v1660 = vpop.f32.mrb[0].mxu0
  %1661 = vdwg.mxu0
  %1662 = vmatprep.subr.bf16.mxu0 0
  %1663 = vmatpush1.bf16.msra.mxu0 %v1286
  %1664 = vmatprep.subr.bf16.mxu0 0
  %1665 = vmatpush1.bf16.msra.mxu0 %v1287
  %1666 = vmatprep.subr.bf16.mxu0 0
  %1667 = vmatpush1.bf16.msra.mxu0 %v1288
  %1668 = vmatprep.subr.bf16.mxu0 0
  %1669 = vmatpush1.bf16.msra.mxu0 %v1289
  %1670 = vmatprep.subr.bf16.mxu0 0
  %1671 = vmatpush1.bf16.msra.mxu0 %v1290
  %1672 = vmatprep.subr.bf16.mxu0 0
  %1673 = vmatpush1.bf16.msra.mxu0 %v1291
  %1674 = vmatprep.subr.bf16.mxu0 0
  %1675 = vmatpush1.bf16.msra.mxu0 %v1292
  %1676 = vmatprep.subr.bf16.mxu0 0
  %1677 = vmatpush1.bf16.msra.mxu0 %v1293
  %1678 = vmatprep.subr.bf16.mxu0 0
  %1679 = vmatpush1.bf16.msra.mxu0 %v1294
  %1680 = vmatprep.subr.bf16.mxu0 0
  %1681 = vmatpush1.bf16.msra.mxu0 %v1295
  %1682 = vmatprep.subr.bf16.mxu0 0
  %1683 = vmatpush1.bf16.msra.mxu0 %v1296
  %1684 = vmatprep.subr.bf16.mxu0 0
  %1685 = vmatpush1.bf16.msra.mxu0 %v1297
  %1686 = vmatprep.subr.bf16.mxu0 0
  %1687 = vmatpush1.bf16.msra.mxu0 %v1298
  %1688 = vmatprep.subr.bf16.mxu0 0
  %1689 = vmatpush1.bf16.msra.mxu0 %v1299
  %1690 = vmatprep.subr.bf16.mxu0 0
  %1691 = vmatpush1.bf16.msra.mxu0 %v1300
  %1692 = vmatprep.subr.bf16.mxu0 0
  %1693 = vmatpush1.bf16.msra.mxu0 %v1301
  %1694 = vmatprep.mubr.bf16.mxu0 %v426
  %1695 = vmatmul.mubr.bf16.gmra.mrb[0].mxu0 %v425
  %v1696 = vpop.f32.mrb[0].mxu0
  %v1697 = vadd.f32 %v1657, %v1696
  %v1698 = vpop.f32.mrb[0].mxu0
  %v1699 = vpop.f32.mrb[0].mxu0
  %v1700 = vpop.f32.mrb[0].mxu0
  %1701 = vdwg.mxu0
  %1702 = vmatprep.subr.bf16.mxu0 0
  %1703 = vmatpush1.bf16.msra.mxu0 %v1302
  %1704 = vmatprep.subr.bf16.mxu0 0
  %1705 = vmatpush1.bf16.msra.mxu0 %v1303
  %1706 = vmatprep.subr.bf16.mxu0 0
  %1707 = vmatpush1.bf16.msra.mxu0 %v1304
  %1708 = vmatprep.subr.bf16.mxu0 0
  %1709 = vmatpush1.bf16.msra.mxu0 %v1305
  %1710 = vmatprep.subr.bf16.mxu0 0
  %1711 = vmatpush1.bf16.msra.mxu0 %v1306
  %1712 = vmatprep.subr.bf16.mxu0 0
  %1713 = vmatpush1.bf16.msra.mxu0 %v1307
  %1714 = vmatprep.subr.bf16.mxu0 0
  %1715 = vmatpush1.bf16.msra.mxu0 %v1308
  %1716 = vmatprep.subr.bf16.mxu0 0
  %1717 = vmatpush1.bf16.msra.mxu0 %v1309
  %1718 = vmatprep.subr.bf16.mxu0 0
  %1719 = vmatpush1.bf16.msra.mxu0 %v1310
  %1720 = vmatprep.subr.bf16.mxu0 0
  %1721 = vmatpush1.bf16.msra.mxu0 %v1311
  %1722 = vmatprep.subr.bf16.mxu0 0
  %1723 = vmatpush1.bf16.msra.mxu0 %v1312
  %1724 = vmatprep.subr.bf16.mxu0 0
  %1725 = vmatpush1.bf16.msra.mxu0 %v1313
  %1726 = vmatprep.subr.bf16.mxu0 0
  %1727 = vmatpush1.bf16.msra.mxu0 %v1314
  %1728 = vmatprep.subr.bf16.mxu0 0
  %1729 = vmatpush1.bf16.msra.mxu0 %v1315
  %1730 = vmatprep.subr.bf16.mxu0 0
  %1731 = vmatpush1.bf16.msra.mxu0 %v1316
  %1732 = vmatprep.subr.bf16.mxu0 0
  %1733 = vmatpush1.bf16.msra.mxu0 %v1317
  %1734 = vmatprep.mubr.bf16.mxu0 %v428
  %1735 = vmatmul.mubr.bf16.gmra.mrb[0].mxu0 %v427
  %v1736 = vpop.f32.mrb[0].mxu0
  %v1737 = vadd.f32 %v1697, %v1736
  %v1738 = vpop.f32.mrb[0].mxu0
  %v1739 = vpop.f32.mrb[0].mxu0
  %v1740 = vpop.f32.mrb[0].mxu0
  %1741 = vdwg.mxu0
  %1742 = vmatprep.subr.bf16.mxu0 0
  %1743 = vmatpush1.bf16.msra.mxu0 %v1318
  %1744 = vmatprep.subr.bf16.mxu0 0
  %1745 = vmatpush1.bf16.msra.mxu0 %v1319
  %1746 = vmatprep.subr.bf16.mxu0 0
  %1747 = vmatpush1.bf16.msra.mxu0 %v1320
  %1748 = vmatprep.subr.bf16.mxu0 0
  %1749 = vmatpush1.bf16.msra.mxu0 %v1321
  %1750 = vmatprep.subr.bf16.mxu0 0
  %1751 = vmatpush1.bf16.msra.mxu0 %v1322
  %1752 = vmatprep.subr.bf16.mxu0 0
  %1753 = vmatpush1.bf16.msra.mxu0 %v1323
  %1754 = vmatprep.subr.bf16.mxu0 0
  %1755 = vmatpush1.bf16.msra.mxu0 %v1324
  %1756 = vmatprep.subr.bf16.mxu0 0
  %1757 = vmatpush1.bf16.msra.mxu0 %v1325
  %1758 = vmatprep.subr.bf16.mxu0 0
  %1759 = vmatpush1.bf16.msra.mxu0 %v1326
  %1760 = vmatprep.subr.bf16.mxu0 0
  %1761 = vmatpush1.bf16.msra.mxu0 %v1327
  %1762 = vmatprep.subr.bf16.mxu0 0
  %1763 = vmatpush1.bf16.msra.mxu0 %v1328
  %1764 = vmatprep.subr.bf16.mxu0 0
  %1765 = vmatpush1.bf16.msra.mxu0 %v1329
  %1766 = vmatprep.subr.bf16.mxu0 0
  %1767 = vmatpush1.bf16.msra.mxu0 %v1330
  %1768 = vmatprep.subr.bf16.mxu0 0
  %1769 = vmatpush1.bf16.msra.mxu0 %v1331
  %1770 = vmatprep.subr.bf16.mxu0 0
  %1771 = vmatpush1.bf16.msra.mxu0 %v1332
  %1772 = vmatprep.subr.bf16.mxu0 0
  %1773 = vmatpush1.bf16.msra.mxu0 %v1333
  %1774 = vmatprep.mubr.bf16.mxu0 %v430
  %1775 = vmatmul.mubr.bf16.gmra.mrb[0].mxu0 %v429
  %v1776 = vpop.f32.mrb[0].mxu0
  %v1777 = vadd.f32 %v1737, %v1776
  %v1778 = vpop.f32.mrb[0].mxu0
  %v1779 = vpop.f32.mrb[0].mxu0
  %v1780 = vpop.f32.mrb[0].mxu0
  %1781 = vdwg.mxu0
  %1782 = vst [vmem:[%s5] sm:$0x3] %v1777
  // Predicated region
  $region22: #{discriminator_forward.11} parent=0 // pred_check
    _
  $region23: #{discriminator_forward.11} parent=0 // pred_check_branch
    %1784 = sbr.rel (0) target = $region25
  $region24: #{discriminator_forward.11} parent=0 // pred_region
    _
  $region25: #{discriminator_forward.11} parent=0 // pred_fallthru
    _
  // Predicated region
  $region26: #{discriminator_forward.11} parent=0 // pred_check
    _
  $region27: #{discriminator_forward.11} parent=0 // pred_check_branch
    %1786 = sbr.rel (0) target = $region29
  $region28: #{discriminator_forward.11} parent=0 // pred_region
    _
  $region29: #{discriminator_forward.11} parent=0 // pred_fallthru
    _

</llo_original>
